<compile_context>
chip_gen: v6e
topology: v6e:2x2x1
jax: 0.10.0
libtpu: 0.0.40
codegen_flags: <defaults>
</compile_context>

<pallas_src>
import functools

import jax
import jax.numpy as jnp
from jax.experimental import pallas as pl
from jax.experimental.pallas import tpu as pltpu


def _transition_kernel(x_ref, scale_ref, shift_ref, w_ref, b_ref,
                       sel_ref, ede_ref, edo_ref, k_ref, y_ref, acc_ref,
                       *, neg_slope, cin, cout, w_len):
    """One (batch, depth-group, H-tile) block.

    x_ref   : (1, cin, 2*DT, L)   VMEM, input dtype   (L = TH*W, lane-dense)
    scale/shift : (cin,)          SMEM f32 (folded BN scale / shift)
    w_ref   : (cout, cin)         SMEM f32 (1x1x1 conv weight)
    b_ref   : (cout,)             SMEM f32 (conv bias)
    sel_ref : (L, L//4)           VMEM f32 0/1 pooled-lane compaction
    ede_ref : (DT, 2*DT)          VMEM f32 0/1 even-depth row selector
    edo_ref : (DT, 2*DT)          VMEM f32 0/1 odd-depth row selector
    k_ref   : (1, cout, 2*DT, L)  VMEM (pre-pool conv output)
    y_ref   : (1, cout, DT, L//4) VMEM (pooled output)
    acc_ref : (cout, 2*DT, L)     VMEM f32 scratch accumulator
    """
    L = x_ref.shape[-1]

    # ---- BN (folded scale/shift) + LeakyReLU + 1x1x1 conv ------------------
    # ci-outer with a VMEM accumulator keeps the vreg-live set to ~1 slab
    # regardless of cin/cout (spill-taming item from the review).
    for ci in range(cin):
        a = x_ref[0, ci].astype(jnp.float32)                 # (2*DT, L)
        a = a * scale_ref[ci] + shift_ref[ci]
        a = jnp.where(a >= 0.0, a, neg_slope * a)
        for co in range(cout):
            contrib = w_ref[co, ci] * a
            if ci == 0:
                acc_ref[co] = contrib + b_ref[co]
            else:
                acc_ref[co] = acc_ref[co] + contrib

    sel = sel_ref[...]
    ede = ede_ref[...]
    edo = edo_ref[...]

    # ---- k store + MaxPool3d(kernel=2, stride=2) ---------------------------
    for co in range(cout):
        acc = acc_ref[co]                                    # (2*DT, L) f32
        k_ref[0, co] = acc.astype(k_ref.dtype)               # lane-dense store

        # W-pair then H-pair max on the flattened (h, w) lane axis: lane rolls
        # run on the XLU (free slot).  Wrap-around lanes land on odd-h / odd-w
        # positions which the compaction below never selects.
        m = jnp.maximum(acc, pltpu.roll(acc, shift=L - 1, axis=1))
        m = jnp.maximum(m, pltpu.roll(m, shift=L - w_len, axis=1))

        # Depth-pair max: exact even/odd sublane selection on the (mostly
        # idle) MXU + a VPU max -- avoids sublane-strided slices / reshapes.
        dm = jnp.maximum(
            jnp.dot(ede, m, preferred_element_type=jnp.float32),
            jnp.dot(edo, m, preferred_element_type=jnp.float32))  # (DT, L)

        # Compact valid lanes 2h'*W + 2w'  ->  h'*(W/2) + w'  (exact 0/1 MXU).
        y_ref[0, co] = jnp.dot(
            dm, sel, preferred_element_type=jnp.float32).astype(y_ref.dtype)


def _vmem_limit_bytes():
    cap = 128 * 1024 * 1024
    try:
        cap = int(getattr(pltpu.get_tpu_info(), "vmem_capacity_bytes", cap))
    except Exception:
        pass
    # ~96 MiB on v5e/v6e (128 MiB physical), ~48 MiB on v7x (64 MiB per TC).
    return (cap * 3) // 4


def _pick_tiles(D, H, W, cin, cout, itemsize, vmem_budget,
                slab_cap=16 * 1024, lane_cap=1024):
    """Pick (DT depth-pairs, TH rows) per block.

    Constraints: 2*DT divides D and is a multiple of 8 (or == D); DT is a
    multiple of 8 (or == D//2); TH is an even divisor of H with TH*W a
    multiple of 512 (or TH == H) so both the k and y stores stay lane-dense.
    Objective: the largest per-channel slab (2*DT*TH*W f32) under the
    vreg-pressure cap and the VMEM budget, keeping the lane length <= lane_cap
    so the (L, L/4) compaction selector and its O(L^2) matmul stay cheap
    (matters most on v5e's slower MXU).
    """
    half_d = D // 2
    ths = [H] + [t for t in range(H - 2, 1, -2)
                 if H % t == 0 and (t * W) % 512 == 0]
    small = [t for t in ths if t * W <= lane_cap]
    ths = small if small else [min(ths, key=lambda t: t * W)]
    dts = sorted({half_d} | {t for t in range(8, half_d, 8)
                             if half_d % t == 0}, reverse=True)

    def vmem_need(dt, th):
        L = th * W
        slab = 2 * dt * L
        blocks = (cin + cout) * slab * itemsize + cout * (slab // 8) * itemsize
        acc = cout * slab * 4
        sel = (L * (L // 4) + 4 * dt * dt) * 4
        return 2 * blocks + acc + 2 * sel + (1 << 20)   # 2x = double-buffering

    combos = [(dt, th) for th in ths for dt in dts]
    feasible = [c for c in combos
                if 2 * c[0] * c[1] * W <= slab_cap
                and vmem_need(*c) <= vmem_budget]
    if feasible:
        dt, th = max(feasible, key=lambda c: (2 * c[0] * c[1] * W, -c[1] * W))
    else:
        # Nothing fits the budget: take the cheapest legal tiling and let
        # vmem_limit_bytes fail loudly instead of silently oversubscribing.
        dt, th = min(combos, key=lambda c: vmem_need(*c))
    return dt, th


def transition_forward(x_ncdhw, gamma, beta, conv_w, conv_b,
                       eps=1e-5, neg_slope=0.1):
    """Transition.forward: returns (y, k), both NCDHW, matching PyTorch."""
    N, Cin, D, H, W = x_ncdhw.shape
    Cout = conv_w.shape[0]
    assert D % 2 == 0 and H % 2 == 0 and W % 2 == 0

    out_dtype = x_ncdhw.dtype
    HW = H * W

    # BatchNorm3d training-mode batch statistics (biased variance), computed
    # ABOUT the mean (two reduction passes, no E[x^2]-mean^2 cancellation),
    # folded into per-channel scale/shift.
    # TODO(synk): running_mean/running_var buffer updates (training-mode side
    # effect of nn.BatchNorm3d) are not emitted by this stateless forward.
    xf = x_ncdhw.astype(jnp.float32)
    mean = jnp.mean(xf, axis=(0, 2, 3, 4))
    var = jnp.mean(jnp.square(xf - mean.reshape(1, Cin, 1, 1, 1)),
                   axis=(0, 2, 3, 4))
    scale = gamma.astype(jnp.float32) * jax.lax.rsqrt(var + eps)
    shift = beta.astype(jnp.float32) - mean * scale

    w2 = conv_w.reshape(Cout, Cin).astype(jnp.float32)
    b2 = conv_b.reshape(Cout).astype(jnp.float32)

    vmem_limit = _vmem_limit_bytes()
    itemsize = jnp.dtype(out_dtype).itemsize
    DT, TH = _pick_tiles(D, H, W, Cin, Cout, itemsize,
                         vmem_budget=(vmem_limit * 4) // 5)
    L = TH * W

    # Exact 0/1 selection matrices (constant index_map => DMA'd once).
    j = jnp.arange(L // 4, dtype=jnp.int32).reshape(1, L // 4)
    src_lane = 2 * (j // (W // 2)) * W + 2 * (j % (W // 2))
    lane = jnp.arange(L, dtype=jnp.int32).reshape(L, 1)
    sel = (lane == src_lane).astype(jnp.float32)                 # (L, L//4)
    row = jnp.arange(DT, dtype=jnp.int32).reshape(DT, 1)
    col = jnp.arange(2 * DT, dtype=jnp.int32).reshape(1, 2 * DT)
    ed_even = (col == 2 * row).astype(jnp.float32)               # (DT, 2*DT)
    ed_odd = (col == 2 * row + 1).astype(jnp.float32)            # (DT, 2*DT)

    # Free reshape: H, W are contiguous in NCDHW, so flattening them makes the
    # kernel's loads/stores lane-dense with no data movement.
    x_flat = x_ncdhw.reshape(N, Cin, D, HW)

    # Grid: put the largest-extent axis first so megacore sharding (v7x)
    # splits real work even when N == 1.  All axes are fully parallel.
    extents = (N, D // (2 * DT), H // TH)
    perm = sorted(range(3), key=lambda i: -extents[i])
    grid = tuple(extents[i] for i in perm)
    pos = [0, 0, 0]
    for g_pos, ax in enumerate(perm):
        pos[ax] = g_pos

    def blk_idx(*g):
        return (g[pos[0]], 0, g[pos[1]], g[pos[2]])

    def const2_idx(*g):
        return (0, 0)

    kernel = functools.partial(_transition_kernel, neg_slope=neg_slope,
                               cin=Cin, cout=Cout, w_len=W)
    smem = pltpu.MemorySpace.SMEM

    k_flat, y_flat = pl.pallas_call(
        kernel,
        out_shape=(
            jax.ShapeDtypeStruct((N, Cout, D, HW), out_dtype),
            jax.ShapeDtypeStruct((N, Cout, D // 2, HW // 4), out_dtype),
        ),
        grid_spec=pltpu.PrefetchScalarGridSpec(
            num_scalar_prefetch=0,
            grid=grid,
            in_specs=[
                pl.BlockSpec((1, Cin, 2 * DT, L), blk_idx),
                pl.BlockSpec(memory_space=smem),     # scale  (Cin,)
                pl.BlockSpec(memory_space=smem),     # shift  (Cin,)
                pl.BlockSpec(memory_space=smem),     # conv w (Cout, Cin)
                pl.BlockSpec(memory_space=smem),     # conv b (Cout,)
                pl.BlockSpec((L, L // 4), const2_idx),      # sel
                pl.BlockSpec((DT, 2 * DT), const2_idx),     # ed_even
                pl.BlockSpec((DT, 2 * DT), const2_idx),     # ed_odd
            ],
            out_specs=(
                pl.BlockSpec((1, Cout, 2 * DT, L), blk_idx),
                pl.BlockSpec((1, Cout, DT, L // 4), blk_idx),
            ),
            scratch_shapes=[pltpu.VMEM((Cout, 2 * DT, L), jnp.float32)],
        ),
        compiler_params=pltpu.CompilerParams(
            dimension_semantics=("parallel", "parallel", "parallel"),
            vmem_limit_bytes=int(vmem_limit),
        ),
    )(x_flat, scale, shift, w2, b2, sel, ed_even, ed_odd)

    k = k_flat.reshape(N, Cout, D, H, W)
    y = y_flat.reshape(N, Cout, D // 2, H // 2, W // 2)
    return y, k


if __name__ == "__main__":
    N, Cin, Cout = 2, 4, 8
    D = H = W = 16

    key = jax.random.PRNGKey(0)
    kx, kg, kb, kw, kc = jax.random.split(key, 5)

    x = jax.random.normal(kx, (N, Cin, D, H, W), dtype=jnp.float32)
    gamma = 1.0 + 0.1 * jax.random.normal(kg, (Cin,), dtype=jnp.float32)
    beta = 0.1 * jax.random.normal(kb, (Cin,), dtype=jnp.float32)
    conv_w = jax.random.normal(kw, (Cout, Cin, 1, 1, 1),
                               dtype=jnp.float32) / jnp.sqrt(Cin)
    conv_b = 0.05 * jax.random.normal(kc, (Cout,), dtype=jnp.float32)

    y, k = transition_forward(x, gamma, beta, conv_w, conv_b)
    jax.block_until_ready((y, k))

    assert y.shape == (N, Cout, D // 2, H // 2, W // 2)
    assert k.shape == (N, Cout, D, H, W)

    # Pure-JAX reference (training-mode BN, LeakyReLU 0.1, 1x1x1 conv,
    # 2x2x2 max-pool) for a sanity check.
    mean = jnp.mean(x, axis=(0, 2, 3, 4), keepdims=True)
    var = jnp.mean(jnp.square(x - mean), axis=(0, 2, 3, 4), keepdims=True)
    a = (x - mean) / jnp.sqrt(var + 1e-5)
    a = a * gamma.reshape(1, Cin, 1, 1, 1) + beta.reshape(1, Cin, 1, 1, 1)
    a = jnp.where(a >= 0, a, 0.1 * a)
    k_expected = jnp.einsum("oc,ncdhw->nodhw", conv_w.reshape(Cout, Cin), a)
    k_expected = k_expected + conv_b.reshape(1, Cout, 1, 1, 1)
    y_expected = k_expected.reshape(
        N, Cout, D // 2, 2, H // 2, 2, W // 2, 2).max(axis=(3, 5, 7))

    assert jnp.allclose(k, k_expected, atol=2e-3, rtol=2e-3)
    assert jnp.allclose(y, y_expected, atol=2e-3, rtol=2e-3)

    print("KERNEL_OK")
</pallas_src>

<mosaic_0001>
module attributes {stable_mosaic.version = 11 : i64} {
  func.func @_transition_kernel(%arg0: i32, %arg1: i32, %arg2: i32, %arg3: memref<1x4x16x256xf32, #tpu.memory_space<vmem>>, %arg4: memref<4xf32, #tpu.memory_space<smem>>, %arg5: memref<4xf32, #tpu.memory_space<smem>>, %arg6: memref<8x4xf32, #tpu.memory_space<smem>>, %arg7: memref<8xf32, #tpu.memory_space<smem>>, %arg8: memref<256x64xf32, #tpu.memory_space<vmem>>, %arg9: memref<8x16xf32, #tpu.memory_space<vmem>>, %arg10: memref<8x16xf32, #tpu.memory_space<vmem>>, %arg11: memref<1x8x16x256xf32, #tpu.memory_space<vmem>>, %arg12: memref<1x8x8x64xf32, #tpu.memory_space<vmem>>, %arg13: memref<8x16x256xf32, #tpu.memory_space<vmem>>) attributes {dimension_semantics = [#tpu.dimension_semantics<parallel>, #tpu.dimension_semantics<parallel>, #tpu.dimension_semantics<parallel>], iteration_bounds = array<i64: 2, 1, 1>, scalar_prefetch = 0 : i64, scratch_operands = 1 : i64, tpu.core_type = #tpu.core_type<tc>, window_params = [{transform_indices = @transform_0, window_bounds = array<i64: 1, 4, 16, 256>}, {transform_indices = @transform_1, window_bounds = array<i64: 4>}, {transform_indices = @transform_2, window_bounds = array<i64: 4>}, {transform_indices = @transform_3, window_bounds = array<i64: 8, 4>}, {transform_indices = @transform_4, window_bounds = array<i64: 8>}, {pipeline_mode = #tpu.pipeline_mode<synchronous>, transform_indices = @transform_5, window_bounds = array<i64: 256, 64>}, {pipeline_mode = #tpu.pipeline_mode<synchronous>, transform_indices = @transform_6, window_bounds = array<i64: 8, 16>}, {pipeline_mode = #tpu.pipeline_mode<synchronous>, transform_indices = @transform_7, window_bounds = array<i64: 8, 16>}, {transform_indices = @transform_8, window_bounds = array<i64: 1, 8, 16, 256>}, {transform_indices = @transform_9, window_bounds = array<i64: 1, 8, 8, 64>}]} {
    %c0 = arith.constant 0 : index
    %c0_0 = arith.constant 0 : index
    %c0_1 = arith.constant 0 : index
    %c0_2 = arith.constant 0 : index
    %0 = vector.load %arg3[%c0, %c0_0, %c0_1, %c0_2] : memref<1x4x16x256xf32, #tpu.memory_space<vmem>>, vector<1x1x16x256xf32>
    %1 = vector.shape_cast %0 : vector<1x1x16x256xf32> to vector<16x256xf32>
    %c0_3 = arith.constant 0 : index
    %2 = memref.load %arg4[%c0_3] : memref<4xf32, #tpu.memory_space<smem>>
    %3 = vector.broadcast %2 : f32 to vector<16x256xf32>
    %4 = arith.mulf %1, %3 : vector<16x256xf32>
    %c0_4 = arith.constant 0 : index
    %5 = memref.load %arg5[%c0_4] : memref<4xf32, #tpu.memory_space<smem>>
    %6 = vector.broadcast %5 : f32 to vector<16x256xf32>
    %7 = arith.addf %4, %6 : vector<16x256xf32>
    %cst = arith.constant 0.000000e+00 : f32
    %8 = vector.broadcast %cst : f32 to vector<16x256xf32>
    %9 = arith.cmpf oge, %7, %8 : vector<16x256xf32>
    %cst_5 = arith.constant 1.000000e-01 : f32
    %10 = vector.broadcast %cst_5 : f32 to vector<16x256xf32>
    %11 = arith.mulf %10, %7 : vector<16x256xf32>
    %12 = arith.select %9, %7, %11 : vector<16x256xi1>, vector<16x256xf32>
    %c0_6 = arith.constant 0 : index
    %c0_7 = arith.constant 0 : index
    %13 = memref.load %arg6[%c0_6, %c0_7] : memref<8x4xf32, #tpu.memory_space<smem>>
    %14 = vector.broadcast %13 : f32 to vector<16x256xf32>
    %15 = arith.mulf %14, %12 : vector<16x256xf32>
    %c0_8 = arith.constant 0 : index
    %16 = memref.load %arg7[%c0_8] : memref<8xf32, #tpu.memory_space<smem>>
    %17 = vector.broadcast %16 : f32 to vector<16x256xf32>
    %18 = arith.addf %15, %17 : vector<16x256xf32>
    %c0_9 = arith.constant 0 : index
    %c0_10 = arith.constant 0 : index
    %c0_11 = arith.constant 0 : index
    %19 = vector.load %arg13[%c0_9, %c0_10, %c0_11] : memref<8x16x256xf32, #tpu.memory_space<vmem>>, vector<1x16x256xf32>
    %20 = vector.shape_cast %19 : vector<1x16x256xf32> to vector<16x256xf32>
    %21 = vector.shape_cast %18 : vector<16x256xf32> to vector<1x16x256xf32>
    tpu.vector_store %arg13[%c0_9, %c0_10, %c0_11], %21 {strides = array<i32>} : memref<8x16x256xf32, #tpu.memory_space<vmem>>, vector<1x16x256xf32>,
    %c1 = arith.constant 1 : index
    %c0_12 = arith.constant 0 : index
    %22 = memref.load %arg6[%c1, %c0_12] : memref<8x4xf32, #tpu.memory_space<smem>>
    %23 = vector.broadcast %22 : f32 to vector<16x256xf32>
    %24 = arith.mulf %23, %12 : vector<16x256xf32>
    %c1_13 = arith.constant 1 : index
    %25 = memref.load %arg7[%c1_13] : memref<8xf32, #tpu.memory_space<smem>>
    %26 = vector.broadcast %25 : f32 to vector<16x256xf32>
    %27 = arith.addf %24, %26 : vector<16x256xf32>
    %c1_14 = arith.constant 1 : index
    %c0_15 = arith.constant 0 : index
    %c0_16 = arith.constant 0 : index
    %28 = vector.load %arg13[%c1_14, %c0_15, %c0_16] : memref<8x16x256xf32, #tpu.memory_space<vmem>>, vector<1x16x256xf32>
    %29 = vector.shape_cast %28 : vector<1x16x256xf32> to vector<16x256xf32>
    %30 = vector.shape_cast %27 : vector<16x256xf32> to vector<1x16x256xf32>
    tpu.vector_store %arg13[%c1_14, %c0_15, %c0_16], %30 {strides = array<i32>} : memref<8x16x256xf32, #tpu.memory_space<vmem>>, vector<1x16x256xf32>,
    %c2 = arith.constant 2 : index
    %c0_17 = arith.constant 0 : index
    %31 = memref.load %arg6[%c2, %c0_17] : memref<8x4xf32, #tpu.memory_space<smem>>
    %32 = vector.broadcast %31 : f32 to vector<16x256xf32>
    %33 = arith.mulf %32, %12 : vector<16x256xf32>
    %c2_18 = arith.constant 2 : index
    %34 = memref.load %arg7[%c2_18] : memref<8xf32, #tpu.memory_space<smem>>
    %35 = vector.broadcast %34 : f32 to vector<16x256xf32>
    %36 = arith.addf %33, %35 : vector<16x256xf32>
    %c2_19 = arith.constant 2 : index
    %c0_20 = arith.constant 0 : index
    %c0_21 = arith.constant 0 : index
    %37 = vector.load %arg13[%c2_19, %c0_20, %c0_21] : memref<8x16x256xf32, #tpu.memory_space<vmem>>, vector<1x16x256xf32>
    %38 = vector.shape_cast %37 : vector<1x16x256xf32> to vector<16x256xf32>
    %39 = vector.shape_cast %36 : vector<16x256xf32> to vector<1x16x256xf32>
    tpu.vector_store %arg13[%c2_19, %c0_20, %c0_21], %39 {strides = array<i32>} : memref<8x16x256xf32, #tpu.memory_space<vmem>>, vector<1x16x256xf32>,
    %c3 = arith.constant 3 : index
    %c0_22 = arith.constant 0 : index
    %40 = memref.load %arg6[%c3, %c0_22] : memref<8x4xf32, #tpu.memory_space<smem>>
    %41 = vector.broadcast %40 : f32 to vector<16x256xf32>
    %42 = arith.mulf %41, %12 : vector<16x256xf32>
    %c3_23 = arith.constant 3 : index
    %43 = memref.load %arg7[%c3_23] : memref<8xf32, #tpu.memory_space<smem>>
    %44 = vector.broadcast %43 : f32 to vector<16x256xf32>
    %45 = arith.addf %42, %44 : vector<16x256xf32>
    %c3_24 = arith.constant 3 : index
    %c0_25 = arith.constant 0 : index
    %c0_26 = arith.constant 0 : index
    %46 = vector.load %arg13[%c3_24, %c0_25, %c0_26] : memref<8x16x256xf32, #tpu.memory_space<vmem>>, vector<1x16x256xf32>
    %47 = vector.shape_cast %46 : vector<1x16x256xf32> to vector<16x256xf32>
    %48 = vector.shape_cast %45 : vector<16x256xf32> to vector<1x16x256xf32>
    tpu.vector_store %arg13[%c3_24, %c0_25, %c0_26], %48 {strides = array<i32>} : memref<8x16x256xf32, #tpu.memory_space<vmem>>, vector<1x16x256xf32>,
    %c4 = arith.constant 4 : index
    %c0_27 = arith.constant 0 : index
    %49 = memref.load %arg6[%c4, %c0_27] : memref<8x4xf32, #tpu.memory_space<smem>>
    %50 = vector.broadcast %49 : f32 to vector<16x256xf32>
    %51 = arith.mulf %50, %12 : vector<16x256xf32>
    %c4_28 = arith.constant 4 : index
    %52 = memref.load %arg7[%c4_28] : memref<8xf32, #tpu.memory_space<smem>>
    %53 = vector.broadcast %52 : f32 to vector<16x256xf32>
    %54 = arith.addf %51, %53 : vector<16x256xf32>
    %c4_29 = arith.constant 4 : index
    %c0_30 = arith.constant 0 : index
    %c0_31 = arith.constant 0 : index
    %55 = vector.load %arg13[%c4_29, %c0_30, %c0_31] : memref<8x16x256xf32, #tpu.memory_space<vmem>>, vector<1x16x256xf32>
    %56 = vector.shape_cast %55 : vector<1x16x256xf32> to vector<16x256xf32>
    %57 = vector.shape_cast %54 : vector<16x256xf32> to vector<1x16x256xf32>
    tpu.vector_store %arg13[%c4_29, %c0_30, %c0_31], %57 {strides = array<i32>} : memref<8x16x256xf32, #tpu.memory_space<vmem>>, vector<1x16x256xf32>,
    %c5 = arith.constant 5 : index
    %c0_32 = arith.constant 0 : index
    %58 = memref.load %arg6[%c5, %c0_32] : memref<8x4xf32, #tpu.memory_space<smem>>
    %59 = vector.broadcast %58 : f32 to vector<16x256xf32>
    %60 = arith.mulf %59, %12 : vector<16x256xf32>
    %c5_33 = arith.constant 5 : index
    %61 = memref.load %arg7[%c5_33] : memref<8xf32, #tpu.memory_space<smem>>
    %62 = vector.broadcast %61 : f32 to vector<16x256xf32>
    %63 = arith.addf %60, %62 : vector<16x256xf32>
    %c5_34 = arith.constant 5 : index
    %c0_35 = arith.constant 0 : index
    %c0_36 = arith.constant 0 : index
    %64 = vector.load %arg13[%c5_34, %c0_35, %c0_36] : memref<8x16x256xf32, #tpu.memory_space<vmem>>, vector<1x16x256xf32>
    %65 = vector.shape_cast %64 : vector<1x16x256xf32> to vector<16x256xf32>
    %66 = vector.shape_cast %63 : vector<16x256xf32> to vector<1x16x256xf32>
    tpu.vector_store %arg13[%c5_34, %c0_35, %c0_36], %66 {strides = array<i32>} : memref<8x16x256xf32, #tpu.memory_space<vmem>>, vector<1x16x256xf32>,
    %c6 = arith.constant 6 : index
    %c0_37 = arith.constant 0 : index
    %67 = memref.load %arg6[%c6, %c0_37] : memref<8x4xf32, #tpu.memory_space<smem>>
    %68 = vector.broadcast %67 : f32 to vector<16x256xf32>
    %69 = arith.mulf %68, %12 : vector<16x256xf32>
    %c6_38 = arith.constant 6 : index
    %70 = memref.load %arg7[%c6_38] : memref<8xf32, #tpu.memory_space<smem>>
    %71 = vector.broadcast %70 : f32 to vector<16x256xf32>
    %72 = arith.addf %69, %71 : vector<16x256xf32>
    %c6_39 = arith.constant 6 : index
    %c0_40 = arith.constant 0 : index
    %c0_41 = arith.constant 0 : index
    %73 = vector.load %arg13[%c6_39, %c0_40, %c0_41] : memref<8x16x256xf32, #tpu.memory_space<vmem>>, vector<1x16x256xf32>
    %74 = vector.shape_cast %73 : vector<1x16x256xf32> to vector<16x256xf32>
    %75 = vector.shape_cast %72 : vector<16x256xf32> to vector<1x16x256xf32>
    tpu.vector_store %arg13[%c6_39, %c0_40, %c0_41], %75 {strides = array<i32>} : memref<8x16x256xf32, #tpu.memory_space<vmem>>, vector<1x16x256xf32>,
    %c7 = arith.constant 7 : index
    %c0_42 = arith.constant 0 : index
    %76 = memref.load %arg6[%c7, %c0_42] : memref<8x4xf32, #tpu.memory_space<smem>>
    %77 = vector.broadcast %76 : f32 to vector<16x256xf32>
    %78 = arith.mulf %77, %12 : vector<16x256xf32>
    %c7_43 = arith.constant 7 : index
    %79 = memref.load %arg7[%c7_43] : memref<8xf32, #tpu.memory_space<smem>>
    %80 = vector.broadcast %79 : f32 to vector<16x256xf32>
    %81 = arith.addf %78, %80 : vector<16x256xf32>
    %c7_44 = arith.constant 7 : index
    %c0_45 = arith.constant 0 : index
    %c0_46 = arith.constant 0 : index
    %82 = vector.load %arg13[%c7_44, %c0_45, %c0_46] : memref<8x16x256xf32, #tpu.memory_space<vmem>>, vector<1x16x256xf32>
    %83 = vector.shape_cast %82 : vector<1x16x256xf32> to vector<16x256xf32>
    %84 = vector.shape_cast %81 : vector<16x256xf32> to vector<1x16x256xf32>
    tpu.vector_store %arg13[%c7_44, %c0_45, %c0_46], %84 {strides = array<i32>} : memref<8x16x256xf32, #tpu.memory_space<vmem>>, vector<1x16x256xf32>,
    %c0_47 = arith.constant 0 : index
    %c1_48 = arith.constant 1 : index
    %c0_49 = arith.constant 0 : index
    %c0_50 = arith.constant 0 : index
    %85 = vector.load %arg3[%c0_47, %c1_48, %c0_49, %c0_50] : memref<1x4x16x256xf32, #tpu.memory_space<vmem>>, vector<1x1x16x256xf32>
    %86 = vector.shape_cast %85 : vector<1x1x16x256xf32> to vector<16x256xf32>
    %c1_51 = arith.constant 1 : index
    %87 = memref.load %arg4[%c1_51] : memref<4xf32, #tpu.memory_space<smem>>
    %88 = vector.broadcast %87 : f32 to vector<16x256xf32>
    %89 = arith.mulf %86, %88 : vector<16x256xf32>
    %c1_52 = arith.constant 1 : index
    %90 = memref.load %arg5[%c1_52] : memref<4xf32, #tpu.memory_space<smem>>
    %91 = vector.broadcast %90 : f32 to vector<16x256xf32>
    %92 = arith.addf %89, %91 : vector<16x256xf32>
    %cst_53 = arith.constant 0.000000e+00 : f32
    %93 = vector.broadcast %cst_53 : f32 to vector<16x256xf32>
    %94 = arith.cmpf oge, %92, %93 : vector<16x256xf32>
    %cst_54 = arith.constant 1.000000e-01 : f32
    %95 = vector.broadcast %cst_54 : f32 to vector<16x256xf32>
    %96 = arith.mulf %95, %92 : vector<16x256xf32>
    %97 = arith.select %94, %92, %96 : vector<16x256xi1>, vector<16x256xf32>
    %c0_55 = arith.constant 0 : index
    %c1_56 = arith.constant 1 : index
    %98 = memref.load %arg6[%c0_55, %c1_56] : memref<8x4xf32, #tpu.memory_space<smem>>
    %99 = vector.broadcast %98 : f32 to vector<16x256xf32>
    %100 = arith.mulf %99, %97 : vector<16x256xf32>
    %c0_57 = arith.constant 0 : index
    %c0_58 = arith.constant 0 : index
    %c0_59 = arith.constant 0 : index
    %101 = vector.load %arg13[%c0_57, %c0_58, %c0_59] : memref<8x16x256xf32, #tpu.memory_space<vmem>>, vector<1x16x256xf32>
    %102 = vector.shape_cast %101 : vector<1x16x256xf32> to vector<16x256xf32>
    %103 = arith.addf %102, %100 : vector<16x256xf32>
    %c0_60 = arith.constant 0 : index
    %c0_61 = arith.constant 0 : index
    %c0_62 = arith.constant 0 : index
    %104 = vector.load %arg13[%c0_60, %c0_61, %c0_62] : memref<8x16x256xf32, #tpu.memory_space<vmem>>, vector<1x16x256xf32>
    %105 = vector.shape_cast %104 : vector<1x16x256xf32> to vector<16x256xf32>
    %106 = vector.shape_cast %103 : vector<16x256xf32> to vector<1x16x256xf32>
    tpu.vector_store %arg13[%c0_60, %c0_61, %c0_62], %106 {strides = array<i32>} : memref<8x16x256xf32, #tpu.memory_space<vmem>>, vector<1x16x256xf32>,
    %c1_63 = arith.constant 1 : index
    %c1_64 = arith.constant 1 : index
    %107 = memref.load %arg6[%c1_63, %c1_64] : memref<8x4xf32, #tpu.memory_space<smem>>
    %108 = vector.broadcast %107 : f32 to vector<16x256xf32>
    %109 = arith.mulf %108, %97 : vector<16x256xf32>
    %c1_65 = arith.constant 1 : index
    %c0_66 = arith.constant 0 : index
    %c0_67 = arith.constant 0 : index
    %110 = vector.load %arg13[%c1_65, %c0_66, %c0_67] : memref<8x16x256xf32, #tpu.memory_space<vmem>>, vector<1x16x256xf32>
    %111 = vector.shape_cast %110 : vector<1x16x256xf32> to vector<16x256xf32>
    %112 = arith.addf %111, %109 : vector<16x256xf32>
    %c1_68 = arith.constant 1 : index
    %c0_69 = arith.constant 0 : index
    %c0_70 = arith.constant 0 : index
    %113 = vector.load %arg13[%c1_68, %c0_69, %c0_70] : memref<8x16x256xf32, #tpu.memory_space<vmem>>, vector<1x16x256xf32>
    %114 = vector.shape_cast %113 : vector<1x16x256xf32> to vector<16x256xf32>
    %115 = vector.shape_cast %112 : vector<16x256xf32> to vector<1x16x256xf32>
    tpu.vector_store %arg13[%c1_68, %c0_69, %c0_70], %115 {strides = array<i32>} : memref<8x16x256xf32, #tpu.memory_space<vmem>>, vector<1x16x256xf32>,
    %c2_71 = arith.constant 2 : index
    %c1_72 = arith.constant 1 : index
    %116 = memref.load %arg6[%c2_71, %c1_72] : memref<8x4xf32, #tpu.memory_space<smem>>
    %117 = vector.broadcast %116 : f32 to vector<16x256xf32>
    %118 = arith.mulf %117, %97 : vector<16x256xf32>
    %c2_73 = arith.constant 2 : index
    %c0_74 = arith.constant 0 : index
    %c0_75 = arith.constant 0 : index
    %119 = vector.load %arg13[%c2_73, %c0_74, %c0_75] : memref<8x16x256xf32, #tpu.memory_space<vmem>>, vector<1x16x256xf32>
    %120 = vector.shape_cast %119 : vector<1x16x256xf32> to vector<16x256xf32>
    %121 = arith.addf %120, %118 : vector<16x256xf32>
    %c2_76 = arith.constant 2 : index
    %c0_77 = arith.constant 0 : index
    %c0_78 = arith.constant 0 : index
    %122 = vector.load %arg13[%c2_76, %c0_77, %c0_78] : memref<8x16x256xf32, #tpu.memory_space<vmem>>, vector<1x16x256xf32>
    %123 = vector.shape_cast %122 : vector<1x16x256xf32> to vector<16x256xf32>
    %124 = vector.shape_cast %121 : vector<16x256xf32> to vector<1x16x256xf32>
    tpu.vector_store %arg13[%c2_76, %c0_77, %c0_78], %124 {strides = array<i32>} : memref<8x16x256xf32, #tpu.memory_space<vmem>>, vector<1x16x256xf32>,
    %c3_79 = arith.constant 3 : index
    %c1_80 = arith.constant 1 : index
    %125 = memref.load %arg6[%c3_79, %c1_80] : memref<8x4xf32, #tpu.memory_space<smem>>
    %126 = vector.broadcast %125 : f32 to vector<16x256xf32>
    %127 = arith.mulf %126, %97 : vector<16x256xf32>
    %c3_81 = arith.constant 3 : index
    %c0_82 = arith.constant 0 : index
    %c0_83 = arith.constant 0 : index
    %128 = vector.load %arg13[%c3_81, %c0_82, %c0_83] : memref<8x16x256xf32, #tpu.memory_space<vmem>>, vector<1x16x256xf32>
    %129 = vector.shape_cast %128 : vector<1x16x256xf32> to vector<16x256xf32>
    %130 = arith.addf %129, %127 : vector<16x256xf32>
    %c3_84 = arith.constant 3 : index
    %c0_85 = arith.constant 0 : index
    %c0_86 = arith.constant 0 : index
    %131 = vector.load %arg13[%c3_84, %c0_85, %c0_86] : memref<8x16x256xf32, #tpu.memory_space<vmem>>, vector<1x16x256xf32>
    %132 = vector.shape_cast %131 : vector<1x16x256xf32> to vector<16x256xf32>
    %133 = vector.shape_cast %130 : vector<16x256xf32> to vector<1x16x256xf32>
    tpu.vector_store %arg13[%c3_84, %c0_85, %c0_86], %133 {strides = array<i32>} : memref<8x16x256xf32, #tpu.memory_space<vmem>>, vector<1x16x256xf32>,
    %c4_87 = arith.constant 4 : index
    %c1_88 = arith.constant 1 : index
    %134 = memref.load %arg6[%c4_87, %c1_88] : memref<8x4xf32, #tpu.memory_space<smem>>
    %135 = vector.broadcast %134 : f32 to vector<16x256xf32>
    %136 = arith.mulf %135, %97 : vector<16x256xf32>
    %c4_89 = arith.constant 4 : index
    %c0_90 = arith.constant 0 : index
    %c0_91 = arith.constant 0 : index
    %137 = vector.load %arg13[%c4_89, %c0_90, %c0_91] : memref<8x16x256xf32, #tpu.memory_space<vmem>>, vector<1x16x256xf32>
    %138 = vector.shape_cast %137 : vector<1x16x256xf32> to vector<16x256xf32>
    %139 = arith.addf %138, %136 : vector<16x256xf32>
    %c4_92 = arith.constant 4 : index
    %c0_93 = arith.constant 0 : index
    %c0_94 = arith.constant 0 : index
    %140 = vector.load %arg13[%c4_92, %c0_93, %c0_94] : memref<8x16x256xf32, #tpu.memory_space<vmem>>, vector<1x16x256xf32>
    %141 = vector.shape_cast %140 : vector<1x16x256xf32> to vector<16x256xf32>
    %142 = vector.shape_cast %139 : vector<16x256xf32> to vector<1x16x256xf32>
    tpu.vector_store %arg13[%c4_92, %c0_93, %c0_94], %142 {strides = array<i32>} : memref<8x16x256xf32, #tpu.memory_space<vmem>>, vector<1x16x256xf32>,
    %c5_95 = arith.constant 5 : index
    %c1_96 = arith.constant 1 : index
    %143 = memref.load %arg6[%c5_95, %c1_96] : memref<8x4xf32, #tpu.memory_space<smem>>
    %144 = vector.broadcast %143 : f32 to vector<16x256xf32>
    %145 = arith.mulf %144, %97 : vector<16x256xf32>
    %c5_97 = arith.constant 5 : index
    %c0_98 = arith.constant 0 : index
    %c0_99 = arith.constant 0 : index
    %146 = vector.load %arg13[%c5_97, %c0_98, %c0_99] : memref<8x16x256xf32, #tpu.memory_space<vmem>>, vector<1x16x256xf32>
    %147 = vector.shape_cast %146 : vector<1x16x256xf32> to vector<16x256xf32>
    %148 = arith.addf %147, %145 : vector<16x256xf32>
    %c5_100 = arith.constant 5 : index
    %c0_101 = arith.constant 0 : index
    %c0_102 = arith.constant 0 : index
    %149 = vector.load %arg13[%c5_100, %c0_101, %c0_102] : memref<8x16x256xf32, #tpu.memory_space<vmem>>, vector<1x16x256xf32>
    %150 = vector.shape_cast %149 : vector<1x16x256xf32> to vector<16x256xf32>
    %151 = vector.shape_cast %148 : vector<16x256xf32> to vector<1x16x256xf32>
    tpu.vector_store %arg13[%c5_100, %c0_101, %c0_102], %151 {strides = array<i32>} : memref<8x16x256xf32, #tpu.memory_space<vmem>>, vector<1x16x256xf32>,
    %c6_103 = arith.constant 6 : index
    %c1_104 = arith.constant 1 : index
    %152 = memref.load %arg6[%c6_103, %c1_104] : memref<8x4xf32, #tpu.memory_space<smem>>
    %153 = vector.broadcast %152 : f32 to vector<16x256xf32>
    %154 = arith.mulf %153, %97 : vector<16x256xf32>
    %c6_105 = arith.constant 6 : index
    %c0_106 = arith.constant 0 : index
    %c0_107 = arith.constant 0 : index
    %155 = vector.load %arg13[%c6_105, %c0_106, %c0_107] : memref<8x16x256xf32, #tpu.memory_space<vmem>>, vector<1x16x256xf32>
    %156 = vector.shape_cast %155 : vector<1x16x256xf32> to vector<16x256xf32>
    %157 = arith.addf %156, %154 : vector<16x256xf32>
    %c6_108 = arith.constant 6 : index
    %c0_109 = arith.constant 0 : index
    %c0_110 = arith.constant 0 : index
    %158 = vector.load %arg13[%c6_108, %c0_109, %c0_110] : memref<8x16x256xf32, #tpu.memory_space<vmem>>, vector<1x16x256xf32>
    %159 = vector.shape_cast %158 : vector<1x16x256xf32> to vector<16x256xf32>
    %160 = vector.shape_cast %157 : vector<16x256xf32> to vector<1x16x256xf32>
    tpu.vector_store %arg13[%c6_108, %c0_109, %c0_110], %160 {strides = array<i32>} : memref<8x16x256xf32, #tpu.memory_space<vmem>>, vector<1x16x256xf32>,
    %c7_111 = arith.constant 7 : index
    %c1_112 = arith.constant 1 : index
    %161 = memref.load %arg6[%c7_111, %c1_112] : memref<8x4xf32, #tpu.memory_space<smem>>
    %162 = vector.broadcast %161 : f32 to vector<16x256xf32>
    %163 = arith.mulf %162, %97 : vector<16x256xf32>
    %c7_113 = arith.constant 7 : index
    %c0_114 = arith.constant 0 : index
    %c0_115 = arith.constant 0 : index
    %164 = vector.load %arg13[%c7_113, %c0_114, %c0_115] : memref<8x16x256xf32, #tpu.memory_space<vmem>>, vector<1x16x256xf32>
    %165 = vector.shape_cast %164 : vector<1x16x256xf32> to vector<16x256xf32>
    %166 = arith.addf %165, %163 : vector<16x256xf32>
    %c7_116 = arith.constant 7 : index
    %c0_117 = arith.constant 0 : index
    %c0_118 = arith.constant 0 : index
    %167 = vector.load %arg13[%c7_116, %c0_117, %c0_118] : memref<8x16x256xf32, #tpu.memory_space<vmem>>, vector<1x16x256xf32>
    %168 = vector.shape_cast %167 : vector<1x16x256xf32> to vector<16x256xf32>
    %169 = vector.shape_cast %166 : vector<16x256xf32> to vector<1x16x256xf32>
    tpu.vector_store %arg13[%c7_116, %c0_117, %c0_118], %169 {strides = array<i32>} : memref<8x16x256xf32, #tpu.memory_space<vmem>>, vector<1x16x256xf32>,
    %c0_119 = arith.constant 0 : index
    %c2_120 = arith.constant 2 : index
    %c0_121 = arith.constant 0 : index
    %c0_122 = arith.constant 0 : index
    %170 = vector.load %arg3[%c0_119, %c2_120, %c0_121, %c0_122] : memref<1x4x16x256xf32, #tpu.memory_space<vmem>>, vector<1x1x16x256xf32>
    %171 = vector.shape_cast %170 : vector<1x1x16x256xf32> to vector<16x256xf32>
    %c2_123 = arith.constant 2 : index
    %172 = memref.load %arg4[%c2_123] : memref<4xf32, #tpu.memory_space<smem>>
    %173 = vector.broadcast %172 : f32 to vector<16x256xf32>
    %174 = arith.mulf %171, %173 : vector<16x256xf32>
    %c2_124 = arith.constant 2 : index
    %175 = memref.load %arg5[%c2_124] : memref<4xf32, #tpu.memory_space<smem>>
    %176 = vector.broadcast %175 : f32 to vector<16x256xf32>
    %177 = arith.addf %174, %176 : vector<16x256xf32>
    %cst_125 = arith.constant 0.000000e+00 : f32
    %178 = vector.broadcast %cst_125 : f32 to vector<16x256xf32>
    %179 = arith.cmpf oge, %177, %178 : vector<16x256xf32>
    %cst_126 = arith.constant 1.000000e-01 : f32
    %180 = vector.broadcast %cst_126 : f32 to vector<16x256xf32>
    %181 = arith.mulf %180, %177 : vector<16x256xf32>
    %182 = arith.select %179, %177, %181 : vector<16x256xi1>, vector<16x256xf32>
    %c0_127 = arith.constant 0 : index
    %c2_128 = arith.constant 2 : index
    %183 = memref.load %arg6[%c0_127, %c2_128] : memref<8x4xf32, #tpu.memory_space<smem>>
    %184 = vector.broadcast %183 : f32 to vector<16x256xf32>
    %185 = arith.mulf %184, %182 : vector<16x256xf32>
    %c0_129 = arith.constant 0 : index
    %c0_130 = arith.constant 0 : index
    %c0_131 = arith.constant 0 : index
    %186 = vector.load %arg13[%c0_129, %c0_130, %c0_131] : memref<8x16x256xf32, #tpu.memory_space<vmem>>, vector<1x16x256xf32>
    %187 = vector.shape_cast %186 : vector<1x16x256xf32> to vector<16x256xf32>
    %188 = arith.addf %187, %185 : vector<16x256xf32>
    %c0_132 = arith.constant 0 : index
    %c0_133 = arith.constant 0 : index
    %c0_134 = arith.constant 0 : index
    %189 = vector.load %arg13[%c0_132, %c0_133, %c0_134] : memref<8x16x256xf32, #tpu.memory_space<vmem>>, vector<1x16x256xf32>
    %190 = vector.shape_cast %189 : vector<1x16x256xf32> to vector<16x256xf32>
    %191 = vector.shape_cast %188 : vector<16x256xf32> to vector<1x16x256xf32>
    tpu.vector_store %arg13[%c0_132, %c0_133, %c0_134], %191 {strides = array<i32>} : memref<8x16x256xf32, #tpu.memory_space<vmem>>, vector<1x16x256xf32>,
    %c1_135 = arith.constant 1 : index
    %c2_136 = arith.constant 2 : index
    %192 = memref.load %arg6[%c1_135, %c2_136] : memref<8x4xf32, #tpu.memory_space<smem>>
    %193 = vector.broadcast %192 : f32 to vector<16x256xf32>
    %194 = arith.mulf %193, %182 : vector<16x256xf32>
    %c1_137 = arith.constant 1 : index
    %c0_138 = arith.constant 0 : index
    %c0_139 = arith.constant 0 : index
    %195 = vector.load %arg13[%c1_137, %c0_138, %c0_139] : memref<8x16x256xf32, #tpu.memory_space<vmem>>, vector<1x16x256xf32>
    %196 = vector.shape_cast %195 : vector<1x16x256xf32> to vector<16x256xf32>
    %197 = arith.addf %196, %194 : vector<16x256xf32>
    %c1_140 = arith.constant 1 : index
    %c0_141 = arith.constant 0 : index
    %c0_142 = arith.constant 0 : index
    %198 = vector.load %arg13[%c1_140, %c0_141, %c0_142] : memref<8x16x256xf32, #tpu.memory_space<vmem>>, vector<1x16x256xf32>
    %199 = vector.shape_cast %198 : vector<1x16x256xf32> to vector<16x256xf32>
    %200 = vector.shape_cast %197 : vector<16x256xf32> to vector<1x16x256xf32>
    tpu.vector_store %arg13[%c1_140, %c0_141, %c0_142], %200 {strides = array<i32>} : memref<8x16x256xf32, #tpu.memory_space<vmem>>, vector<1x16x256xf32>,
    %c2_143 = arith.constant 2 : index
    %c2_144 = arith.constant 2 : index
    %201 = memref.load %arg6[%c2_143, %c2_144] : memref<8x4xf32, #tpu.memory_space<smem>>
    %202 = vector.broadcast %201 : f32 to vector<16x256xf32>
    %203 = arith.mulf %202, %182 : vector<16x256xf32>
    %c2_145 = arith.constant 2 : index
    %c0_146 = arith.constant 0 : index
    %c0_147 = arith.constant 0 : index
    %204 = vector.load %arg13[%c2_145, %c0_146, %c0_147] : memref<8x16x256xf32, #tpu.memory_space<vmem>>, vector<1x16x256xf32>
    %205 = vector.shape_cast %204 : vector<1x16x256xf32> to vector<16x256xf32>
    %206 = arith.addf %205, %203 : vector<16x256xf32>
    %c2_148 = arith.constant 2 : index
    %c0_149 = arith.constant 0 : index
    %c0_150 = arith.constant 0 : index
    %207 = vector.load %arg13[%c2_148, %c0_149, %c0_150] : memref<8x16x256xf32, #tpu.memory_space<vmem>>, vector<1x16x256xf32>
    %208 = vector.shape_cast %207 : vector<1x16x256xf32> to vector<16x256xf32>
    %209 = vector.shape_cast %206 : vector<16x256xf32> to vector<1x16x256xf32>
    tpu.vector_store %arg13[%c2_148, %c0_149, %c0_150], %209 {strides = array<i32>} : memref<8x16x256xf32, #tpu.memory_space<vmem>>, vector<1x16x256xf32>,
    %c3_151 = arith.constant 3 : index
    %c2_152 = arith.constant 2 : index
    %210 = memref.load %arg6[%c3_151, %c2_152] : memref<8x4xf32, #tpu.memory_space<smem>>
    %211 = vector.broadcast %210 : f32 to vector<16x256xf32>
    %212 = arith.mulf %211, %182 : vector<16x256xf32>
    %c3_153 = arith.constant 3 : index
    %c0_154 = arith.constant 0 : index
    %c0_155 = arith.constant 0 : index
    %213 = vector.load %arg13[%c3_153, %c0_154, %c0_155] : memref<8x16x256xf32, #tpu.memory_space<vmem>>, vector<1x16x256xf32>
    %214 = vector.shape_cast %213 : vector<1x16x256xf32> to vector<16x256xf32>
    %215 = arith.addf %214, %212 : vector<16x256xf32>
    %c3_156 = arith.constant 3 : index
    %c0_157 = arith.constant 0 : index
    %c0_158 = arith.constant 0 : index
    %216 = vector.load %arg13[%c3_156, %c0_157, %c0_158] : memref<8x16x256xf32, #tpu.memory_space<vmem>>, vector<1x16x256xf32>
    %217 = vector.shape_cast %216 : vector<1x16x256xf32> to vector<16x256xf32>
    %218 = vector.shape_cast %215 : vector<16x256xf32> to vector<1x16x256xf32>
    tpu.vector_store %arg13[%c3_156, %c0_157, %c0_158], %218 {strides = array<i32>} : memref<8x16x256xf32, #tpu.memory_space<vmem>>, vector<1x16x256xf32>,
    %c4_159 = arith.constant 4 : index
    %c2_160 = arith.constant 2 : index
    %219 = memref.load %arg6[%c4_159, %c2_160] : memref<8x4xf32, #tpu.memory_space<smem>>
    %220 = vector.broadcast %219 : f32 to vector<16x256xf32>
    %221 = arith.mulf %220, %182 : vector<16x256xf32>
    %c4_161 = arith.constant 4 : index
    %c0_162 = arith.constant 0 : index
    %c0_163 = arith.constant 0 : index
    %222 = vector.load %arg13[%c4_161, %c0_162, %c0_163] : memref<8x16x256xf32, #tpu.memory_space<vmem>>, vector<1x16x256xf32>
    %223 = vector.shape_cast %222 : vector<1x16x256xf32> to vector<16x256xf32>
    %224 = arith.addf %223, %221 : vector<16x256xf32>
    %c4_164 = arith.constant 4 : index
    %c0_165 = arith.constant 0 : index
    %c0_166 = arith.constant 0 : index
    %225 = vector.load %arg13[%c4_164, %c0_165, %c0_166] : memref<8x16x256xf32, #tpu.memory_space<vmem>>, vector<1x16x256xf32>
    %226 = vector.shape_cast %225 : vector<1x16x256xf32> to vector<16x256xf32>
    %227 = vector.shape_cast %224 : vector<16x256xf32> to vector<1x16x256xf32>
    tpu.vector_store %arg13[%c4_164, %c0_165, %c0_166], %227 {strides = array<i32>} : memref<8x16x256xf32, #tpu.memory_space<vmem>>, vector<1x16x256xf32>,
    %c5_167 = arith.constant 5 : index
    %c2_168 = arith.constant 2 : index
    %228 = memref.load %arg6[%c5_167, %c2_168] : memref<8x4xf32, #tpu.memory_space<smem>>
    %229 = vector.broadcast %228 : f32 to vector<16x256xf32>
    %230 = arith.mulf %229, %182 : vector<16x256xf32>
    %c5_169 = arith.constant 5 : index
    %c0_170 = arith.constant 0 : index
    %c0_171 = arith.constant 0 : index
    %231 = vector.load %arg13[%c5_169, %c0_170, %c0_171] : memref<8x16x256xf32, #tpu.memory_space<vmem>>, vector<1x16x256xf32>
    %232 = vector.shape_cast %231 : vector<1x16x256xf32> to vector<16x256xf32>
    %233 = arith.addf %232, %230 : vector<16x256xf32>
    %c5_172 = arith.constant 5 : index
    %c0_173 = arith.constant 0 : index
    %c0_174 = arith.constant 0 : index
    %234 = vector.load %arg13[%c5_172, %c0_173, %c0_174] : memref<8x16x256xf32, #tpu.memory_space<vmem>>, vector<1x16x256xf32>
    %235 = vector.shape_cast %234 : vector<1x16x256xf32> to vector<16x256xf32>
    %236 = vector.shape_cast %233 : vector<16x256xf32> to vector<1x16x256xf32>
    tpu.vector_store %arg13[%c5_172, %c0_173, %c0_174], %236 {strides = array<i32>} : memref<8x16x256xf32, #tpu.memory_space<vmem>>, vector<1x16x256xf32>,
    %c6_175 = arith.constant 6 : index
    %c2_176 = arith.constant 2 : index
    %237 = memref.load %arg6[%c6_175, %c2_176] : memref<8x4xf32, #tpu.memory_space<smem>>
    %238 = vector.broadcast %237 : f32 to vector<16x256xf32>
    %239 = arith.mulf %238, %182 : vector<16x256xf32>
    %c6_177 = arith.constant 6 : index
    %c0_178 = arith.constant 0 : index
    %c0_179 = arith.constant 0 : index
    %240 = vector.load %arg13[%c6_177, %c0_178, %c0_179] : memref<8x16x256xf32, #tpu.memory_space<vmem>>, vector<1x16x256xf32>
    %241 = vector.shape_cast %240 : vector<1x16x256xf32> to vector<16x256xf32>
    %242 = arith.addf %241, %239 : vector<16x256xf32>
    %c6_180 = arith.constant 6 : index
    %c0_181 = arith.constant 0 : index
    %c0_182 = arith.constant 0 : index
    %243 = vector.load %arg13[%c6_180, %c0_181, %c0_182] : memref<8x16x256xf32, #tpu.memory_space<vmem>>, vector<1x16x256xf32>
    %244 = vector.shape_cast %243 : vector<1x16x256xf32> to vector<16x256xf32>
    %245 = vector.shape_cast %242 : vector<16x256xf32> to vector<1x16x256xf32>
    tpu.vector_store %arg13[%c6_180, %c0_181, %c0_182], %245 {strides = array<i32>} : memref<8x16x256xf32, #tpu.memory_space<vmem>>, vector<1x16x256xf32>,
    %c7_183 = arith.constant 7 : index
    %c2_184 = arith.constant 2 : index
    %246 = memref.load %arg6[%c7_183, %c2_184] : memref<8x4xf32, #tpu.memory_space<smem>>
    %247 = vector.broadcast %246 : f32 to vector<16x256xf32>
    %248 = arith.mulf %247, %182 : vector<16x256xf32>
    %c7_185 = arith.constant 7 : index
    %c0_186 = arith.constant 0 : index
    %c0_187 = arith.constant 0 : index
    %249 = vector.load %arg13[%c7_185, %c0_186, %c0_187] : memref<8x16x256xf32, #tpu.memory_space<vmem>>, vector<1x16x256xf32>
    %250 = vector.shape_cast %249 : vector<1x16x256xf32> to vector<16x256xf32>
    %251 = arith.addf %250, %248 : vector<16x256xf32>
    %c7_188 = arith.constant 7 : index
    %c0_189 = arith.constant 0 : index
    %c0_190 = arith.constant 0 : index
    %252 = vector.load %arg13[%c7_188, %c0_189, %c0_190] : memref<8x16x256xf32, #tpu.memory_space<vmem>>, vector<1x16x256xf32>
    %253 = vector.shape_cast %252 : vector<1x16x256xf32> to vector<16x256xf32>
    %254 = vector.shape_cast %251 : vector<16x256xf32> to vector<1x16x256xf32>
    tpu.vector_store %arg13[%c7_188, %c0_189, %c0_190], %254 {strides = array<i32>} : memref<8x16x256xf32, #tpu.memory_space<vmem>>, vector<1x16x256xf32>,
    %c0_191 = arith.constant 0 : index
    %c3_192 = arith.constant 3 : index
    %c0_193 = arith.constant 0 : index
    %c0_194 = arith.constant 0 : index
    %255 = vector.load %arg3[%c0_191, %c3_192, %c0_193, %c0_194] : memref<1x4x16x256xf32, #tpu.memory_space<vmem>>, vector<1x1x16x256xf32>
    %256 = vector.shape_cast %255 : vector<1x1x16x256xf32> to vector<16x256xf32>
    %c3_195 = arith.constant 3 : index
    %257 = memref.load %arg4[%c3_195] : memref<4xf32, #tpu.memory_space<smem>>
    %258 = vector.broadcast %257 : f32 to vector<16x256xf32>
    %259 = arith.mulf %256, %258 : vector<16x256xf32>
    %c3_196 = arith.constant 3 : index
    %260 = memref.load %arg5[%c3_196] : memref<4xf32, #tpu.memory_space<smem>>
    %261 = vector.broadcast %260 : f32 to vector<16x256xf32>
    %262 = arith.addf %259, %261 : vector<16x256xf32>
    %cst_197 = arith.constant 0.000000e+00 : f32
    %263 = vector.broadcast %cst_197 : f32 to vector<16x256xf32>
    %264 = arith.cmpf oge, %262, %263 : vector<16x256xf32>
    %cst_198 = arith.constant 1.000000e-01 : f32
    %265 = vector.broadcast %cst_198 : f32 to vector<16x256xf32>
    %266 = arith.mulf %265, %262 : vector<16x256xf32>
    %267 = arith.select %264, %262, %266 : vector<16x256xi1>, vector<16x256xf32>
    %c0_199 = arith.constant 0 : index
    %c3_200 = arith.constant 3 : index
    %268 = memref.load %arg6[%c0_199, %c3_200] : memref<8x4xf32, #tpu.memory_space<smem>>
    %269 = vector.broadcast %268 : f32 to vector<16x256xf32>
    %270 = arith.mulf %269, %267 : vector<16x256xf32>
    %c0_201 = arith.constant 0 : index
    %c0_202 = arith.constant 0 : index
    %c0_203 = arith.constant 0 : index
    %271 = vector.load %arg13[%c0_201, %c0_202, %c0_203] : memref<8x16x256xf32, #tpu.memory_space<vmem>>, vector<1x16x256xf32>
    %272 = vector.shape_cast %271 : vector<1x16x256xf32> to vector<16x256xf32>
    %273 = arith.addf %272, %270 : vector<16x256xf32>
    %c0_204 = arith.constant 0 : index
    %c0_205 = arith.constant 0 : index
    %c0_206 = arith.constant 0 : index
    %274 = vector.load %arg13[%c0_204, %c0_205, %c0_206] : memref<8x16x256xf32, #tpu.memory_space<vmem>>, vector<1x16x256xf32>
    %275 = vector.shape_cast %274 : vector<1x16x256xf32> to vector<16x256xf32>
    %276 = vector.shape_cast %273 : vector<16x256xf32> to vector<1x16x256xf32>
    tpu.vector_store %arg13[%c0_204, %c0_205, %c0_206], %276 {strides = array<i32>} : memref<8x16x256xf32, #tpu.memory_space<vmem>>, vector<1x16x256xf32>,
    %c1_207 = arith.constant 1 : index
    %c3_208 = arith.constant 3 : index
    %277 = memref.load %arg6[%c1_207, %c3_208] : memref<8x4xf32, #tpu.memory_space<smem>>
    %278 = vector.broadcast %277 : f32 to vector<16x256xf32>
    %279 = arith.mulf %278, %267 : vector<16x256xf32>
    %c1_209 = arith.constant 1 : index
    %c0_210 = arith.constant 0 : index
    %c0_211 = arith.constant 0 : index
    %280 = vector.load %arg13[%c1_209, %c0_210, %c0_211] : memref<8x16x256xf32, #tpu.memory_space<vmem>>, vector<1x16x256xf32>
    %281 = vector.shape_cast %280 : vector<1x16x256xf32> to vector<16x256xf32>
    %282 = arith.addf %281, %279 : vector<16x256xf32>
    %c1_212 = arith.constant 1 : index
    %c0_213 = arith.constant 0 : index
    %c0_214 = arith.constant 0 : index
    %283 = vector.load %arg13[%c1_212, %c0_213, %c0_214] : memref<8x16x256xf32, #tpu.memory_space<vmem>>, vector<1x16x256xf32>
    %284 = vector.shape_cast %283 : vector<1x16x256xf32> to vector<16x256xf32>
    %285 = vector.shape_cast %282 : vector<16x256xf32> to vector<1x16x256xf32>
    tpu.vector_store %arg13[%c1_212, %c0_213, %c0_214], %285 {strides = array<i32>} : memref<8x16x256xf32, #tpu.memory_space<vmem>>, vector<1x16x256xf32>,
    %c2_215 = arith.constant 2 : index
    %c3_216 = arith.constant 3 : index
    %286 = memref.load %arg6[%c2_215, %c3_216] : memref<8x4xf32, #tpu.memory_space<smem>>
    %287 = vector.broadcast %286 : f32 to vector<16x256xf32>
    %288 = arith.mulf %287, %267 : vector<16x256xf32>
    %c2_217 = arith.constant 2 : index
    %c0_218 = arith.constant 0 : index
    %c0_219 = arith.constant 0 : index
    %289 = vector.load %arg13[%c2_217, %c0_218, %c0_219] : memref<8x16x256xf32, #tpu.memory_space<vmem>>, vector<1x16x256xf32>
    %290 = vector.shape_cast %289 : vector<1x16x256xf32> to vector<16x256xf32>
    %291 = arith.addf %290, %288 : vector<16x256xf32>
    %c2_220 = arith.constant 2 : index
    %c0_221 = arith.constant 0 : index
    %c0_222 = arith.constant 0 : index
    %292 = vector.load %arg13[%c2_220, %c0_221, %c0_222] : memref<8x16x256xf32, #tpu.memory_space<vmem>>, vector<1x16x256xf32>
    %293 = vector.shape_cast %292 : vector<1x16x256xf32> to vector<16x256xf32>
    %294 = vector.shape_cast %291 : vector<16x256xf32> to vector<1x16x256xf32>
    tpu.vector_store %arg13[%c2_220, %c0_221, %c0_222], %294 {strides = array<i32>} : memref<8x16x256xf32, #tpu.memory_space<vmem>>, vector<1x16x256xf32>,
    %c3_223 = arith.constant 3 : index
    %c3_224 = arith.constant 3 : index
    %295 = memref.load %arg6[%c3_223, %c3_224] : memref<8x4xf32, #tpu.memory_space<smem>>
    %296 = vector.broadcast %295 : f32 to vector<16x256xf32>
    %297 = arith.mulf %296, %267 : vector<16x256xf32>
    %c3_225 = arith.constant 3 : index
    %c0_226 = arith.constant 0 : index
    %c0_227 = arith.constant 0 : index
    %298 = vector.load %arg13[%c3_225, %c0_226, %c0_227] : memref<8x16x256xf32, #tpu.memory_space<vmem>>, vector<1x16x256xf32>
    %299 = vector.shape_cast %298 : vector<1x16x256xf32> to vector<16x256xf32>
    %300 = arith.addf %299, %297 : vector<16x256xf32>
    %c3_228 = arith.constant 3 : index
    %c0_229 = arith.constant 0 : index
    %c0_230 = arith.constant 0 : index
    %301 = vector.load %arg13[%c3_228, %c0_229, %c0_230] : memref<8x16x256xf32, #tpu.memory_space<vmem>>, vector<1x16x256xf32>
    %302 = vector.shape_cast %301 : vector<1x16x256xf32> to vector<16x256xf32>
    %303 = vector.shape_cast %300 : vector<16x256xf32> to vector<1x16x256xf32>
    tpu.vector_store %arg13[%c3_228, %c0_229, %c0_230], %303 {strides = array<i32>} : memref<8x16x256xf32, #tpu.memory_space<vmem>>, vector<1x16x256xf32>,
    %c4_231 = arith.constant 4 : index
    %c3_232 = arith.constant 3 : index
    %304 = memref.load %arg6[%c4_231, %c3_232] : memref<8x4xf32, #tpu.memory_space<smem>>
    %305 = vector.broadcast %304 : f32 to vector<16x256xf32>
    %306 = arith.mulf %305, %267 : vector<16x256xf32>
    %c4_233 = arith.constant 4 : index
    %c0_234 = arith.constant 0 : index
    %c0_235 = arith.constant 0 : index
    %307 = vector.load %arg13[%c4_233, %c0_234, %c0_235] : memref<8x16x256xf32, #tpu.memory_space<vmem>>, vector<1x16x256xf32>
    %308 = vector.shape_cast %307 : vector<1x16x256xf32> to vector<16x256xf32>
    %309 = arith.addf %308, %306 : vector<16x256xf32>
    %c4_236 = arith.constant 4 : index
    %c0_237 = arith.constant 0 : index
    %c0_238 = arith.constant 0 : index
    %310 = vector.load %arg13[%c4_236, %c0_237, %c0_238] : memref<8x16x256xf32, #tpu.memory_space<vmem>>, vector<1x16x256xf32>
    %311 = vector.shape_cast %310 : vector<1x16x256xf32> to vector<16x256xf32>
    %312 = vector.shape_cast %309 : vector<16x256xf32> to vector<1x16x256xf32>
    tpu.vector_store %arg13[%c4_236, %c0_237, %c0_238], %312 {strides = array<i32>} : memref<8x16x256xf32, #tpu.memory_space<vmem>>, vector<1x16x256xf32>,
    %c5_239 = arith.constant 5 : index
    %c3_240 = arith.constant 3 : index
    %313 = memref.load %arg6[%c5_239, %c3_240] : memref<8x4xf32, #tpu.memory_space<smem>>
    %314 = vector.broadcast %313 : f32 to vector<16x256xf32>
    %315 = arith.mulf %314, %267 : vector<16x256xf32>
    %c5_241 = arith.constant 5 : index
    %c0_242 = arith.constant 0 : index
    %c0_243 = arith.constant 0 : index
    %316 = vector.load %arg13[%c5_241, %c0_242, %c0_243] : memref<8x16x256xf32, #tpu.memory_space<vmem>>, vector<1x16x256xf32>
    %317 = vector.shape_cast %316 : vector<1x16x256xf32> to vector<16x256xf32>
    %318 = arith.addf %317, %315 : vector<16x256xf32>
    %c5_244 = arith.constant 5 : index
    %c0_245 = arith.constant 0 : index
    %c0_246 = arith.constant 0 : index
    %319 = vector.load %arg13[%c5_244, %c0_245, %c0_246] : memref<8x16x256xf32, #tpu.memory_space<vmem>>, vector<1x16x256xf32>
    %320 = vector.shape_cast %319 : vector<1x16x256xf32> to vector<16x256xf32>
    %321 = vector.shape_cast %318 : vector<16x256xf32> to vector<1x16x256xf32>
    tpu.vector_store %arg13[%c5_244, %c0_245, %c0_246], %321 {strides = array<i32>} : memref<8x16x256xf32, #tpu.memory_space<vmem>>, vector<1x16x256xf32>,
    %c6_247 = arith.constant 6 : index
    %c3_248 = arith.constant 3 : index
    %322 = memref.load %arg6[%c6_247, %c3_248] : memref<8x4xf32, #tpu.memory_space<smem>>
    %323 = vector.broadcast %322 : f32 to vector<16x256xf32>
    %324 = arith.mulf %323, %267 : vector<16x256xf32>
    %c6_249 = arith.constant 6 : index
    %c0_250 = arith.constant 0 : index
    %c0_251 = arith.constant 0 : index
    %325 = vector.load %arg13[%c6_249, %c0_250, %c0_251] : memref<8x16x256xf32, #tpu.memory_space<vmem>>, vector<1x16x256xf32>
    %326 = vector.shape_cast %325 : vector<1x16x256xf32> to vector<16x256xf32>
    %327 = arith.addf %326, %324 : vector<16x256xf32>
    %c6_252 = arith.constant 6 : index
    %c0_253 = arith.constant 0 : index
    %c0_254 = arith.constant 0 : index
    %328 = vector.load %arg13[%c6_252, %c0_253, %c0_254] : memref<8x16x256xf32, #tpu.memory_space<vmem>>, vector<1x16x256xf32>
    %329 = vector.shape_cast %328 : vector<1x16x256xf32> to vector<16x256xf32>
    %330 = vector.shape_cast %327 : vector<16x256xf32> to vector<1x16x256xf32>
    tpu.vector_store %arg13[%c6_252, %c0_253, %c0_254], %330 {strides = array<i32>} : memref<8x16x256xf32, #tpu.memory_space<vmem>>, vector<1x16x256xf32>,
    %c7_255 = arith.constant 7 : index
    %c3_256 = arith.constant 3 : index
    %331 = memref.load %arg6[%c7_255, %c3_256] : memref<8x4xf32, #tpu.memory_space<smem>>
    %332 = vector.broadcast %331 : f32 to vector<16x256xf32>
    %333 = arith.mulf %332, %267 : vector<16x256xf32>
    %c7_257 = arith.constant 7 : index
    %c0_258 = arith.constant 0 : index
    %c0_259 = arith.constant 0 : index
    %334 = vector.load %arg13[%c7_257, %c0_258, %c0_259] : memref<8x16x256xf32, #tpu.memory_space<vmem>>, vector<1x16x256xf32>
    %335 = vector.shape_cast %334 : vector<1x16x256xf32> to vector<16x256xf32>
    %336 = arith.addf %335, %333 : vector<16x256xf32>
    %c7_260 = arith.constant 7 : index
    %c0_261 = arith.constant 0 : index
    %c0_262 = arith.constant 0 : index
    %337 = vector.load %arg13[%c7_260, %c0_261, %c0_262] : memref<8x16x256xf32, #tpu.memory_space<vmem>>, vector<1x16x256xf32>
    %338 = vector.shape_cast %337 : vector<1x16x256xf32> to vector<16x256xf32>
    %339 = vector.shape_cast %336 : vector<16x256xf32> to vector<1x16x256xf32>
    tpu.vector_store %arg13[%c7_260, %c0_261, %c0_262], %339 {strides = array<i32>} : memref<8x16x256xf32, #tpu.memory_space<vmem>>, vector<1x16x256xf32>,
    %c0_263 = arith.constant 0 : index
    %c0_264 = arith.constant 0 : index
    %340 = vector.load %arg8[%c0_263, %c0_264] : memref<256x64xf32, #tpu.memory_space<vmem>>, vector<256x64xf32>
    %c0_265 = arith.constant 0 : index
    %c0_266 = arith.constant 0 : index
    %341 = vector.load %arg9[%c0_265, %c0_266] : memref<8x16xf32, #tpu.memory_space<vmem>>, vector<8x16xf32>
    %c0_267 = arith.constant 0 : index
    %c0_268 = arith.constant 0 : index
    %342 = vector.load %arg10[%c0_267, %c0_268] : memref<8x16xf32, #tpu.memory_space<vmem>>, vector<8x16xf32>
    %c0_269 = arith.constant 0 : index
    %c0_270 = arith.constant 0 : index
    %c0_271 = arith.constant 0 : index
    %343 = vector.load %arg13[%c0_269, %c0_270, %c0_271] : memref<8x16x256xf32, #tpu.memory_space<vmem>>, vector<1x16x256xf32>
    %344 = vector.shape_cast %343 : vector<1x16x256xf32> to vector<16x256xf32>
    %c0_272 = arith.constant 0 : index
    %c0_273 = arith.constant 0 : index
    %c0_274 = arith.constant 0 : index
    %c0_275 = arith.constant 0 : index
    %345 = vector.load %arg11[%c0_272, %c0_273, %c0_274, %c0_275] : memref<1x8x16x256xf32, #tpu.memory_space<vmem>>, vector<1x1x16x256xf32>
    %346 = vector.shape_cast %345 : vector<1x1x16x256xf32> to vector<16x256xf32>
    %347 = vector.shape_cast %344 : vector<16x256xf32> to vector<1x1x16x256xf32>
    tpu.vector_store %arg11[%c0_272, %c0_273, %c0_274, %c0_275], %347 {strides = array<i32>} : memref<1x8x16x256xf32, #tpu.memory_space<vmem>>, vector<1x1x16x256xf32>,
    %c255_i32 = arith.constant 255 : i32
    %348 = tpu.dynamic_rotate %344 by %c255_i32 dim 1 : vector<16x256xf32>, i32 -> vector<16x256xf32>
    %349 = arith.maximumf %344, %348 : vector<16x256xf32>
    %c240_i32 = arith.constant 240 : i32
    %350 = tpu.dynamic_rotate %349 by %c240_i32 dim 1 : vector<16x256xf32>, i32 -> vector<16x256xf32>
    %351 = arith.maximumf %349, %350 : vector<16x256xf32>
    %cst_276 = arith.constant dense<0.000000e+00> : vector<8x256xf32>
    %352 = tpu.matmul %341, %351, %cst_276 {dimension_numbers = #tpu.dot_dimension_numbers<[1], [0], [0], [1], [0, 0, 1, 1], [], []>} : vector<8x16xf32>, vector<16x256xf32>, vector<8x256xf32> -> vector<8x256xf32>
    %cst_277 = arith.constant dense<0.000000e+00> : vector<8x256xf32>
    %353 = tpu.matmul %342, %351, %cst_277 {dimension_numbers = #tpu.dot_dimension_numbers<[1], [0], [0], [1], [0, 0, 1, 1], [], []>} : vector<8x16xf32>, vector<16x256xf32>, vector<8x256xf32> -> vector<8x256xf32>
    %354 = arith.maximumf %352, %353 : vector<8x256xf32>
    %cst_278 = arith.constant dense<0.000000e+00> : vector<8x64xf32>
    %355 = tpu.matmul %354, %340, %cst_278 {dimension_numbers = #tpu.dot_dimension_numbers<[1], [0], [0], [1], [0, 0, 1, 1], [], []>} : vector<8x256xf32>, vector<256x64xf32>, vector<8x64xf32> -> vector<8x64xf32>
    %c0_279 = arith.constant 0 : index
    %c0_280 = arith.constant 0 : index
    %c0_281 = arith.constant 0 : index
    %c0_282 = arith.constant 0 : index
    %356 = vector.load %arg12[%c0_279, %c0_280, %c0_281, %c0_282] : memref<1x8x8x64xf32, #tpu.memory_space<vmem>>, vector<1x1x8x64xf32>
    %357 = vector.shape_cast %356 : vector<1x1x8x64xf32> to vector<8x64xf32>
    %358 = vector.shape_cast %355 : vector<8x64xf32> to vector<1x1x8x64xf32>
    tpu.vector_store %arg12[%c0_279, %c0_280, %c0_281, %c0_282], %358 {strides = array<i32>} : memref<1x8x8x64xf32, #tpu.memory_space<vmem>>, vector<1x1x8x64xf32>,
    %c1_283 = arith.constant 1 : index
    %c0_284 = arith.constant 0 : index
    %c0_285 = arith.constant 0 : index
    %359 = vector.load %arg13[%c1_283, %c0_284, %c0_285] : memref<8x16x256xf32, #tpu.memory_space<vmem>>, vector<1x16x256xf32>
    %360 = vector.shape_cast %359 : vector<1x16x256xf32> to vector<16x256xf32>
    %c0_286 = arith.constant 0 : index
    %c1_287 = arith.constant 1 : index
    %c0_288 = arith.constant 0 : index
    %c0_289 = arith.constant 0 : index
    %361 = vector.load %arg11[%c0_286, %c1_287, %c0_288, %c0_289] : memref<1x8x16x256xf32, #tpu.memory_space<vmem>>, vector<1x1x16x256xf32>
    %362 = vector.shape_cast %361 : vector<1x1x16x256xf32> to vector<16x256xf32>
    %363 = vector.shape_cast %360 : vector<16x256xf32> to vector<1x1x16x256xf32>
    tpu.vector_store %arg11[%c0_286, %c1_287, %c0_288, %c0_289], %363 {strides = array<i32>} : memref<1x8x16x256xf32, #tpu.memory_space<vmem>>, vector<1x1x16x256xf32>,
    %c255_i32_290 = arith.constant 255 : i32
    %364 = tpu.dynamic_rotate %360 by %c255_i32_290 dim 1 : vector<16x256xf32>, i32 -> vector<16x256xf32>
    %365 = arith.maximumf %360, %364 : vector<16x256xf32>
    %c240_i32_291 = arith.constant 240 : i32
    %366 = tpu.dynamic_rotate %365 by %c240_i32_291 dim 1 : vector<16x256xf32>, i32 -> vector<16x256xf32>
    %367 = arith.maximumf %365, %366 : vector<16x256xf32>
    %cst_292 = arith.constant dense<0.000000e+00> : vector<8x256xf32>
    %368 = tpu.matmul %341, %367, %cst_292 {dimension_numbers = #tpu.dot_dimension_numbers<[1], [0], [0], [1], [0, 0, 1, 1], [], []>} : vector<8x16xf32>, vector<16x256xf32>, vector<8x256xf32> -> vector<8x256xf32>
    %cst_293 = arith.constant dense<0.000000e+00> : vector<8x256xf32>
    %369 = tpu.matmul %342, %367, %cst_293 {dimension_numbers = #tpu.dot_dimension_numbers<[1], [0], [0], [1], [0, 0, 1, 1], [], []>} : vector<8x16xf32>, vector<16x256xf32>, vector<8x256xf32> -> vector<8x256xf32>
    %370 = arith.maximumf %368, %369 : vector<8x256xf32>
    %cst_294 = arith.constant dense<0.000000e+00> : vector<8x64xf32>
    %371 = tpu.matmul %370, %340, %cst_294 {dimension_numbers = #tpu.dot_dimension_numbers<[1], [0], [0], [1], [0, 0, 1, 1], [], []>} : vector<8x256xf32>, vector<256x64xf32>, vector<8x64xf32> -> vector<8x64xf32>
    %c0_295 = arith.constant 0 : index
    %c1_296 = arith.constant 1 : index
    %c0_297 = arith.constant 0 : index
    %c0_298 = arith.constant 0 : index
    %372 = vector.load %arg12[%c0_295, %c1_296, %c0_297, %c0_298] : memref<1x8x8x64xf32, #tpu.memory_space<vmem>>, vector<1x1x8x64xf32>
    %373 = vector.shape_cast %372 : vector<1x1x8x64xf32> to vector<8x64xf32>
    %374 = vector.shape_cast %371 : vector<8x64xf32> to vector<1x1x8x64xf32>
    tpu.vector_store %arg12[%c0_295, %c1_296, %c0_297, %c0_298], %374 {strides = array<i32>} : memref<1x8x8x64xf32, #tpu.memory_space<vmem>>, vector<1x1x8x64xf32>,
    %c2_299 = arith.constant 2 : index
    %c0_300 = arith.constant 0 : index
    %c0_301 = arith.constant 0 : index
    %375 = vector.load %arg13[%c2_299, %c0_300, %c0_301] : memref<8x16x256xf32, #tpu.memory_space<vmem>>, vector<1x16x256xf32>
    %376 = vector.shape_cast %375 : vector<1x16x256xf32> to vector<16x256xf32>
    %c0_302 = arith.constant 0 : index
    %c2_303 = arith.constant 2 : index
    %c0_304 = arith.constant 0 : index
    %c0_305 = arith.constant 0 : index
    %377 = vector.load %arg11[%c0_302, %c2_303, %c0_304, %c0_305] : memref<1x8x16x256xf32, #tpu.memory_space<vmem>>, vector<1x1x16x256xf32>
    %378 = vector.shape_cast %377 : vector<1x1x16x256xf32> to vector<16x256xf32>
    %379 = vector.shape_cast %376 : vector<16x256xf32> to vector<1x1x16x256xf32>
    tpu.vector_store %arg11[%c0_302, %c2_303, %c0_304, %c0_305], %379 {strides = array<i32>} : memref<1x8x16x256xf32, #tpu.memory_space<vmem>>, vector<1x1x16x256xf32>,
    %c255_i32_306 = arith.constant 255 : i32
    %380 = tpu.dynamic_rotate %376 by %c255_i32_306 dim 1 : vector<16x256xf32>, i32 -> vector<16x256xf32>
    %381 = arith.maximumf %376, %380 : vector<16x256xf32>
    %c240_i32_307 = arith.constant 240 : i32
    %382 = tpu.dynamic_rotate %381 by %c240_i32_307 dim 1 : vector<16x256xf32>, i32 -> vector<16x256xf32>
    %383 = arith.maximumf %381, %382 : vector<16x256xf32>
    %cst_308 = arith.constant dense<0.000000e+00> : vector<8x256xf32>
    %384 = tpu.matmul %341, %383, %cst_308 {dimension_numbers = #tpu.dot_dimension_numbers<[1], [0], [0], [1], [0, 0, 1, 1], [], []>} : vector<8x16xf32>, vector<16x256xf32>, vector<8x256xf32> -> vector<8x256xf32>
    %cst_309 = arith.constant dense<0.000000e+00> : vector<8x256xf32>
    %385 = tpu.matmul %342, %383, %cst_309 {dimension_numbers = #tpu.dot_dimension_numbers<[1], [0], [0], [1], [0, 0, 1, 1], [], []>} : vector<8x16xf32>, vector<16x256xf32>, vector<8x256xf32> -> vector<8x256xf32>
    %386 = arith.maximumf %384, %385 : vector<8x256xf32>
    %cst_310 = arith.constant dense<0.000000e+00> : vector<8x64xf32>
    %387 = tpu.matmul %386, %340, %cst_310 {dimension_numbers = #tpu.dot_dimension_numbers<[1], [0], [0], [1], [0, 0, 1, 1], [], []>} : vector<8x256xf32>, vector<256x64xf32>, vector<8x64xf32> -> vector<8x64xf32>
    %c0_311 = arith.constant 0 : index
    %c2_312 = arith.constant 2 : index
    %c0_313 = arith.constant 0 : index
    %c0_314 = arith.constant 0 : index
    %388 = vector.load %arg12[%c0_311, %c2_312, %c0_313, %c0_314] : memref<1x8x8x64xf32, #tpu.memory_space<vmem>>, vector<1x1x8x64xf32>
    %389 = vector.shape_cast %388 : vector<1x1x8x64xf32> to vector<8x64xf32>
    %390 = vector.shape_cast %387 : vector<8x64xf32> to vector<1x1x8x64xf32>
    tpu.vector_store %arg12[%c0_311, %c2_312, %c0_313, %c0_314], %390 {strides = array<i32>} : memref<1x8x8x64xf32, #tpu.memory_space<vmem>>, vector<1x1x8x64xf32>,
    %c3_315 = arith.constant 3 : index
    %c0_316 = arith.constant 0 : index
    %c0_317 = arith.constant 0 : index
    %391 = vector.load %arg13[%c3_315, %c0_316, %c0_317] : memref<8x16x256xf32, #tpu.memory_space<vmem>>, vector<1x16x256xf32>
    %392 = vector.shape_cast %391 : vector<1x16x256xf32> to vector<16x256xf32>
    %c0_318 = arith.constant 0 : index
    %c3_319 = arith.constant 3 : index
    %c0_320 = arith.constant 0 : index
    %c0_321 = arith.constant 0 : index
    %393 = vector.load %arg11[%c0_318, %c3_319, %c0_320, %c0_321] : memref<1x8x16x256xf32, #tpu.memory_space<vmem>>, vector<1x1x16x256xf32>
    %394 = vector.shape_cast %393 : vector<1x1x16x256xf32> to vector<16x256xf32>
    %395 = vector.shape_cast %392 : vector<16x256xf32> to vector<1x1x16x256xf32>
    tpu.vector_store %arg11[%c0_318, %c3_319, %c0_320, %c0_321], %395 {strides = array<i32>} : memref<1x8x16x256xf32, #tpu.memory_space<vmem>>, vector<1x1x16x256xf32>,
    %c255_i32_322 = arith.constant 255 : i32
    %396 = tpu.dynamic_rotate %392 by %c255_i32_322 dim 1 : vector<16x256xf32>, i32 -> vector<16x256xf32>
    %397 = arith.maximumf %392, %396 : vector<16x256xf32>
    %c240_i32_323 = arith.constant 240 : i32
    %398 = tpu.dynamic_rotate %397 by %c240_i32_323 dim 1 : vector<16x256xf32>, i32 -> vector<16x256xf32>
    %399 = arith.maximumf %397, %398 : vector<16x256xf32>
    %cst_324 = arith.constant dense<0.000000e+00> : vector<8x256xf32>
    %400 = tpu.matmul %341, %399, %cst_324 {dimension_numbers = #tpu.dot_dimension_numbers<[1], [0], [0], [1], [0, 0, 1, 1], [], []>} : vector<8x16xf32>, vector<16x256xf32>, vector<8x256xf32> -> vector<8x256xf32>
    %cst_325 = arith.constant dense<0.000000e+00> : vector<8x256xf32>
    %401 = tpu.matmul %342, %399, %cst_325 {dimension_numbers = #tpu.dot_dimension_numbers<[1], [0], [0], [1], [0, 0, 1, 1], [], []>} : vector<8x16xf32>, vector<16x256xf32>, vector<8x256xf32> -> vector<8x256xf32>
    %402 = arith.maximumf %400, %401 : vector<8x256xf32>
    %cst_326 = arith.constant dense<0.000000e+00> : vector<8x64xf32>
    %403 = tpu.matmul %402, %340, %cst_326 {dimension_numbers = #tpu.dot_dimension_numbers<[1], [0], [0], [1], [0, 0, 1, 1], [], []>} : vector<8x256xf32>, vector<256x64xf32>, vector<8x64xf32> -> vector<8x64xf32>
    %c0_327 = arith.constant 0 : index
    %c3_328 = arith.constant 3 : index
    %c0_329 = arith.constant 0 : index
    %c0_330 = arith.constant 0 : index
    %404 = vector.load %arg12[%c0_327, %c3_328, %c0_329, %c0_330] : memref<1x8x8x64xf32, #tpu.memory_space<vmem>>, vector<1x1x8x64xf32>
    %405 = vector.shape_cast %404 : vector<1x1x8x64xf32> to vector<8x64xf32>
    %406 = vector.shape_cast %403 : vector<8x64xf32> to vector<1x1x8x64xf32>
    tpu.vector_store %arg12[%c0_327, %c3_328, %c0_329, %c0_330], %406 {strides = array<i32>} : memref<1x8x8x64xf32, #tpu.memory_space<vmem>>, vector<1x1x8x64xf32>,
    %c4_331 = arith.constant 4 : index
    %c0_332 = arith.constant 0 : index
    %c0_333 = arith.constant 0 : index
    %407 = vector.load %arg13[%c4_331, %c0_332, %c0_333] : memref<8x16x256xf32, #tpu.memory_space<vmem>>, vector<1x16x256xf32>
    %408 = vector.shape_cast %407 : vector<1x16x256xf32> to vector<16x256xf32>
    %c0_334 = arith.constant 0 : index
    %c4_335 = arith.constant 4 : index
    %c0_336 = arith.constant 0 : index
    %c0_337 = arith.constant 0 : index
    %409 = vector.load %arg11[%c0_334, %c4_335, %c0_336, %c0_337] : memref<1x8x16x256xf32, #tpu.memory_space<vmem>>, vector<1x1x16x256xf32>
    %410 = vector.shape_cast %409 : vector<1x1x16x256xf32> to vector<16x256xf32>
    %411 = vector.shape_cast %408 : vector<16x256xf32> to vector<1x1x16x256xf32>
    tpu.vector_store %arg11[%c0_334, %c4_335, %c0_336, %c0_337], %411 {strides = array<i32>} : memref<1x8x16x256xf32, #tpu.memory_space<vmem>>, vector<1x1x16x256xf32>,
    %c255_i32_338 = arith.constant 255 : i32
    %412 = tpu.dynamic_rotate %408 by %c255_i32_338 dim 1 : vector<16x256xf32>, i32 -> vector<16x256xf32>
    %413 = arith.maximumf %408, %412 : vector<16x256xf32>
    %c240_i32_339 = arith.constant 240 : i32
    %414 = tpu.dynamic_rotate %413 by %c240_i32_339 dim 1 : vector<16x256xf32>, i32 -> vector<16x256xf32>
    %415 = arith.maximumf %413, %414 : vector<16x256xf32>
    %cst_340 = arith.constant dense<0.000000e+00> : vector<8x256xf32>
    %416 = tpu.matmul %341, %415, %cst_340 {dimension_numbers = #tpu.dot_dimension_numbers<[1], [0], [0], [1], [0, 0, 1, 1], [], []>} : vector<8x16xf32>, vector<16x256xf32>, vector<8x256xf32> -> vector<8x256xf32>
    %cst_341 = arith.constant dense<0.000000e+00> : vector<8x256xf32>
    %417 = tpu.matmul %342, %415, %cst_341 {dimension_numbers = #tpu.dot_dimension_numbers<[1], [0], [0], [1], [0, 0, 1, 1], [], []>} : vector<8x16xf32>, vector<16x256xf32>, vector<8x256xf32> -> vector<8x256xf32>
    %418 = arith.maximumf %416, %417 : vector<8x256xf32>
    %cst_342 = arith.constant dense<0.000000e+00> : vector<8x64xf32>
    %419 = tpu.matmul %418, %340, %cst_342 {dimension_numbers = #tpu.dot_dimension_numbers<[1], [0], [0], [1], [0, 0, 1, 1], [], []>} : vector<8x256xf32>, vector<256x64xf32>, vector<8x64xf32> -> vector<8x64xf32>
    %c0_343 = arith.constant 0 : index
    %c4_344 = arith.constant 4 : index
    %c0_345 = arith.constant 0 : index
    %c0_346 = arith.constant 0 : index
    %420 = vector.load %arg12[%c0_343, %c4_344, %c0_345, %c0_346] : memref<1x8x8x64xf32, #tpu.memory_space<vmem>>, vector<1x1x8x64xf32>
    %421 = vector.shape_cast %420 : vector<1x1x8x64xf32> to vector<8x64xf32>
    %422 = vector.shape_cast %419 : vector<8x64xf32> to vector<1x1x8x64xf32>
    tpu.vector_store %arg12[%c0_343, %c4_344, %c0_345, %c0_346], %422 {strides = array<i32>} : memref<1x8x8x64xf32, #tpu.memory_space<vmem>>, vector<1x1x8x64xf32>,
    %c5_347 = arith.constant 5 : index
    %c0_348 = arith.constant 0 : index
    %c0_349 = arith.constant 0 : index
    %423 = vector.load %arg13[%c5_347, %c0_348, %c0_349] : memref<8x16x256xf32, #tpu.memory_space<vmem>>, vector<1x16x256xf32>
    %424 = vector.shape_cast %423 : vector<1x16x256xf32> to vector<16x256xf32>
    %c0_350 = arith.constant 0 : index
    %c5_351 = arith.constant 5 : index
    %c0_352 = arith.constant 0 : index
    %c0_353 = arith.constant 0 : index
    %425 = vector.load %arg11[%c0_350, %c5_351, %c0_352, %c0_353] : memref<1x8x16x256xf32, #tpu.memory_space<vmem>>, vector<1x1x16x256xf32>
    %426 = vector.shape_cast %425 : vector<1x1x16x256xf32> to vector<16x256xf32>
    %427 = vector.shape_cast %424 : vector<16x256xf32> to vector<1x1x16x256xf32>
    tpu.vector_store %arg11[%c0_350, %c5_351, %c0_352, %c0_353], %427 {strides = array<i32>} : memref<1x8x16x256xf32, #tpu.memory_space<vmem>>, vector<1x1x16x256xf32>,
    %c255_i32_354 = arith.constant 255 : i32
    %428 = tpu.dynamic_rotate %424 by %c255_i32_354 dim 1 : vector<16x256xf32>, i32 -> vector<16x256xf32>
    %429 = arith.maximumf %424, %428 : vector<16x256xf32>
    %c240_i32_355 = arith.constant 240 : i32
    %430 = tpu.dynamic_rotate %429 by %c240_i32_355 dim 1 : vector<16x256xf32>, i32 -> vector<16x256xf32>
    %431 = arith.maximumf %429, %430 : vector<16x256xf32>
    %cst_356 = arith.constant dense<0.000000e+00> : vector<8x256xf32>
    %432 = tpu.matmul %341, %431, %cst_356 {dimension_numbers = #tpu.dot_dimension_numbers<[1], [0], [0], [1], [0, 0, 1, 1], [], []>} : vector<8x16xf32>, vector<16x256xf32>, vector<8x256xf32> -> vector<8x256xf32>
    %cst_357 = arith.constant dense<0.000000e+00> : vector<8x256xf32>
    %433 = tpu.matmul %342, %431, %cst_357 {dimension_numbers = #tpu.dot_dimension_numbers<[1], [0], [0], [1], [0, 0, 1, 1], [], []>} : vector<8x16xf32>, vector<16x256xf32>, vector<8x256xf32> -> vector<8x256xf32>
    %434 = arith.maximumf %432, %433 : vector<8x256xf32>
    %cst_358 = arith.constant dense<0.000000e+00> : vector<8x64xf32>
    %435 = tpu.matmul %434, %340, %cst_358 {dimension_numbers = #tpu.dot_dimension_numbers<[1], [0], [0], [1], [0, 0, 1, 1], [], []>} : vector<8x256xf32>, vector<256x64xf32>, vector<8x64xf32> -> vector<8x64xf32>
    %c0_359 = arith.constant 0 : index
    %c5_360 = arith.constant 5 : index
    %c0_361 = arith.constant 0 : index
    %c0_362 = arith.constant 0 : index
    %436 = vector.load %arg12[%c0_359, %c5_360, %c0_361, %c0_362] : memref<1x8x8x64xf32, #tpu.memory_space<vmem>>, vector<1x1x8x64xf32>
    %437 = vector.shape_cast %436 : vector<1x1x8x64xf32> to vector<8x64xf32>
    %438 = vector.shape_cast %435 : vector<8x64xf32> to vector<1x1x8x64xf32>
    tpu.vector_store %arg12[%c0_359, %c5_360, %c0_361, %c0_362], %438 {strides = array<i32>} : memref<1x8x8x64xf32, #tpu.memory_space<vmem>>, vector<1x1x8x64xf32>,
    %c6_363 = arith.constant 6 : index
    %c0_364 = arith.constant 0 : index
    %c0_365 = arith.constant 0 : index
    %439 = vector.load %arg13[%c6_363, %c0_364, %c0_365] : memref<8x16x256xf32, #tpu.memory_space<vmem>>, vector<1x16x256xf32>
    %440 = vector.shape_cast %439 : vector<1x16x256xf32> to vector<16x256xf32>
    %c0_366 = arith.constant 0 : index
    %c6_367 = arith.constant 6 : index
    %c0_368 = arith.constant 0 : index
    %c0_369 = arith.constant 0 : index
    %441 = vector.load %arg11[%c0_366, %c6_367, %c0_368, %c0_369] : memref<1x8x16x256xf32, #tpu.memory_space<vmem>>, vector<1x1x16x256xf32>
    %442 = vector.shape_cast %441 : vector<1x1x16x256xf32> to vector<16x256xf32>
    %443 = vector.shape_cast %440 : vector<16x256xf32> to vector<1x1x16x256xf32>
    tpu.vector_store %arg11[%c0_366, %c6_367, %c0_368, %c0_369], %443 {strides = array<i32>} : memref<1x8x16x256xf32, #tpu.memory_space<vmem>>, vector<1x1x16x256xf32>,
    %c255_i32_370 = arith.constant 255 : i32
    %444 = tpu.dynamic_rotate %440 by %c255_i32_370 dim 1 : vector<16x256xf32>, i32 -> vector<16x256xf32>
    %445 = arith.maximumf %440, %444 : vector<16x256xf32>
    %c240_i32_371 = arith.constant 240 : i32
    %446 = tpu.dynamic_rotate %445 by %c240_i32_371 dim 1 : vector<16x256xf32>, i32 -> vector<16x256xf32>
    %447 = arith.maximumf %445, %446 : vector<16x256xf32>
    %cst_372 = arith.constant dense<0.000000e+00> : vector<8x256xf32>
    %448 = tpu.matmul %341, %447, %cst_372 {dimension_numbers = #tpu.dot_dimension_numbers<[1], [0], [0], [1], [0, 0, 1, 1], [], []>} : vector<8x16xf32>, vector<16x256xf32>, vector<8x256xf32> -> vector<8x256xf32>
    %cst_373 = arith.constant dense<0.000000e+00> : vector<8x256xf32>
    %449 = tpu.matmul %342, %447, %cst_373 {dimension_numbers = #tpu.dot_dimension_numbers<[1], [0], [0], [1], [0, 0, 1, 1], [], []>} : vector<8x16xf32>, vector<16x256xf32>, vector<8x256xf32> -> vector<8x256xf32>
    %450 = arith.maximumf %448, %449 : vector<8x256xf32>
    %cst_374 = arith.constant dense<0.000000e+00> : vector<8x64xf32>
    %451 = tpu.matmul %450, %340, %cst_374 {dimension_numbers = #tpu.dot_dimension_numbers<[1], [0], [0], [1], [0, 0, 1, 1], [], []>} : vector<8x256xf32>, vector<256x64xf32>, vector<8x64xf32> -> vector<8x64xf32>
    %c0_375 = arith.constant 0 : index
    %c6_376 = arith.constant 6 : index
    %c0_377 = arith.constant 0 : index
    %c0_378 = arith.constant 0 : index
    %452 = vector.load %arg12[%c0_375, %c6_376, %c0_377, %c0_378] : memref<1x8x8x64xf32, #tpu.memory_space<vmem>>, vector<1x1x8x64xf32>
    %453 = vector.shape_cast %452 : vector<1x1x8x64xf32> to vector<8x64xf32>
    %454 = vector.shape_cast %451 : vector<8x64xf32> to vector<1x1x8x64xf32>
    tpu.vector_store %arg12[%c0_375, %c6_376, %c0_377, %c0_378], %454 {strides = array<i32>} : memref<1x8x8x64xf32, #tpu.memory_space<vmem>>, vector<1x1x8x64xf32>,
    %c7_379 = arith.constant 7 : index
    %c0_380 = arith.constant 0 : index
    %c0_381 = arith.constant 0 : index
    %455 = vector.load %arg13[%c7_379, %c0_380, %c0_381] : memref<8x16x256xf32, #tpu.memory_space<vmem>>, vector<1x16x256xf32>
    %456 = vector.shape_cast %455 : vector<1x16x256xf32> to vector<16x256xf32>
    %c0_382 = arith.constant 0 : index
    %c7_383 = arith.constant 7 : index
    %c0_384 = arith.constant 0 : index
    %c0_385 = arith.constant 0 : index
    %457 = vector.load %arg11[%c0_382, %c7_383, %c0_384, %c0_385] : memref<1x8x16x256xf32, #tpu.memory_space<vmem>>, vector<1x1x16x256xf32>
    %458 = vector.shape_cast %457 : vector<1x1x16x256xf32> to vector<16x256xf32>
    %459 = vector.shape_cast %456 : vector<16x256xf32> to vector<1x1x16x256xf32>
    tpu.vector_store %arg11[%c0_382, %c7_383, %c0_384, %c0_385], %459 {strides = array<i32>} : memref<1x8x16x256xf32, #tpu.memory_space<vmem>>, vector<1x1x16x256xf32>,
    %c255_i32_386 = arith.constant 255 : i32
    %460 = tpu.dynamic_rotate %456 by %c255_i32_386 dim 1 : vector<16x256xf32>, i32 -> vector<16x256xf32>
    %461 = arith.maximumf %456, %460 : vector<16x256xf32>
    %c240_i32_387 = arith.constant 240 : i32
    %462 = tpu.dynamic_rotate %461 by %c240_i32_387 dim 1 : vector<16x256xf32>, i32 -> vector<16x256xf32>
    %463 = arith.maximumf %461, %462 : vector<16x256xf32>
    %cst_388 = arith.constant dense<0.000000e+00> : vector<8x256xf32>
    %464 = tpu.matmul %341, %463, %cst_388 {dimension_numbers = #tpu.dot_dimension_numbers<[1], [0], [0], [1], [0, 0, 1, 1], [], []>} : vector<8x16xf32>, vector<16x256xf32>, vector<8x256xf32> -> vector<8x256xf32>
    %cst_389 = arith.constant dense<0.000000e+00> : vector<8x256xf32>
    %465 = tpu.matmul %342, %463, %cst_389 {dimension_numbers = #tpu.dot_dimension_numbers<[1], [0], [0], [1], [0, 0, 1, 1], [], []>} : vector<8x16xf32>, vector<16x256xf32>, vector<8x256xf32> -> vector<8x256xf32>
    %466 = arith.maximumf %464, %465 : vector<8x256xf32>
    %cst_390 = arith.constant dense<0.000000e+00> : vector<8x64xf32>
    %467 = tpu.matmul %466, %340, %cst_390 {dimension_numbers = #tpu.dot_dimension_numbers<[1], [0], [0], [1], [0, 0, 1, 1], [], []>} : vector<8x256xf32>, vector<256x64xf32>, vector<8x64xf32> -> vector<8x64xf32>
    %c0_391 = arith.constant 0 : index
    %c7_392 = arith.constant 7 : index
    %c0_393 = arith.constant 0 : index
    %c0_394 = arith.constant 0 : index
    %468 = vector.load %arg12[%c0_391, %c7_392, %c0_393, %c0_394] : memref<1x8x8x64xf32, #tpu.memory_space<vmem>>, vector<1x1x8x64xf32>
    %469 = vector.shape_cast %468 : vector<1x1x8x64xf32> to vector<8x64xf32>
    %470 = vector.shape_cast %467 : vector<8x64xf32> to vector<1x1x8x64xf32>
    tpu.vector_store %arg12[%c0_391, %c7_392, %c0_393, %c0_394], %470 {strides = array<i32>} : memref<1x8x8x64xf32, #tpu.memory_space<vmem>>, vector<1x1x8x64xf32>,
    return
  }
  func.func @transform_0(%arg0: i32, %arg1: i32, %arg2: i32) -> (i32, i32, i32, i32) {
    %c0_i32 = arith.constant 0 : i32
    %c0_i32_0 = arith.constant 0 : i32
    return %arg0, %c0_i32, %arg1, %arg2 : i32, i32, i32, i32
  }
  func.func @transform_1(%arg0: i32, %arg1: i32, %arg2: i32) -> i32 {
    %c0_i32 = arith.constant 0 : i32
    %c0_i32_0 = arith.constant 0 : i32
    return %c0_i32 : i32
  }
  func.func @transform_2(%arg0: i32, %arg1: i32, %arg2: i32) -> i32 {
    %c0_i32 = arith.constant 0 : i32
    %c0_i32_0 = arith.constant 0 : i32
    return %c0_i32 : i32
  }
  func.func @transform_3(%arg0: i32, %arg1: i32, %arg2: i32) -> (i32, i32) {
    %c0_i32 = arith.constant 0 : i32
    %c0_i32_0 = arith.constant 0 : i32
    %c0_i32_1 = arith.constant 0 : i32
    return %c0_i32, %c0_i32_0 : i32, i32
  }
  func.func @transform_4(%arg0: i32, %arg1: i32, %arg2: i32) -> i32 {
    %c0_i32 = arith.constant 0 : i32
    %c0_i32_0 = arith.constant 0 : i32
    return %c0_i32 : i32
  }
  func.func @transform_5(%arg0: i32, %arg1: i32, %arg2: i32) -> (i32, i32) {
    %c0_i32 = arith.constant 0 : i32
    %c0_i32_0 = arith.constant 0 : i32
    %c0_i32_1 = arith.constant 0 : i32
    return %c0_i32, %c0_i32_0 : i32, i32
  }
  func.func @transform_6(%arg0: i32, %arg1: i32, %arg2: i32) -> (i32, i32) {
    %c0_i32 = arith.constant 0 : i32
    %c0_i32_0 = arith.constant 0 : i32
    %c0_i32_1 = arith.constant 0 : i32
    return %c0_i32, %c0_i32_0 : i32, i32
  }
  func.func @transform_7(%arg0: i32, %arg1: i32, %arg2: i32) -> (i32, i32) {
    %c0_i32 = arith.constant 0 : i32
    %c0_i32_0 = arith.constant 0 : i32
    %c0_i32_1 = arith.constant 0 : i32
    return %c0_i32, %c0_i32_0 : i32, i32
  }
  func.func @transform_8(%arg0: i32, %arg1: i32, %arg2: i32) -> (i32, i32, i32, i32) {
    %c0_i32 = arith.constant 0 : i32
    %c0_i32_0 = arith.constant 0 : i32
    return %arg0, %c0_i32, %arg1, %arg2 : i32, i32, i32, i32
  }
  func.func @transform_9(%arg0: i32, %arg1: i32, %arg2: i32) -> (i32, i32, i32, i32) {
    %c0_i32 = arith.constant 0 : i32
    %c0_i32_0 = arith.constant 0 : i32
    return %arg0, %c0_i32, %arg1, %arg2 : i32, i32, i32, i32
  }
}

</mosaic_0001>

<llo_original>
// kernel: tpu_custom_call.1
$region0: #{tpu_custom_call.1}
  #allocation0 [shape = 'u32[]', space=smem, size = 0x4, offset = 0x4, fixed_abs, tag = 'smem constant byte address 0x4 - core index']
  #allocation1 [shape = 'u32[144,128]{1,0:T(1,128)}', space=vmem, size = 0x12000, scoped, tag = 'internal scratch']
  #allocation2 [shape = 'f32[8,16,256]{2,1,0:T(8,128)}', space=vmem, size = 0x20000, scoped, tag = 'scratch operand']
  %s0 = inlined_call_operand.vmem [shape: f32[2,4,16,256], index: 0, kind: input, shape index: {}]
  %s1 = inlined_call_operand.vmem [shape: f32[4], index: 1, kind: input, shape index: {}]
  %s2 = inlined_call_operand.vmem [shape: f32[4], index: 2, kind: input, shape index: {}]
  %s3 = inlined_call_operand.vmem [shape: f32[8,4], index: 3, kind: input, shape index: {}]
  %s4 = inlined_call_operand.vmem [shape: f32[8], index: 4, kind: input, shape index: {}]
  %s5 = inlined_call_operand.vmem [shape: f32[256,64], index: 5, kind: input, shape index: {}]
  %s6 = inlined_call_operand.vmem [shape: f32[8,16], index: 6, kind: input, shape index: {}]
  %s7 = inlined_call_operand.vmem [shape: f32[8,16], index: 7, kind: input, shape index: {}]
  %s8 = inlined_call_operand.hbm [shape: f32[2,8,16,256], index: 8, kind: output, shape index: {0}]
  %s9 = inlined_call_operand.hbm [shape: f32[2,8,8,64], index: 9, kind: output, shape index: {1}]
  %10 = xla_tuple %s8, %s9
  %s11 = sld [smem:[#allocation0]]
  $region89: #{tpu_custom_call.1} parent=0
    _
  %s13 = ssub.s32 1, %s11
  %s14 = scalar_select 0, %s13, %s11
  $region1: #{tpu_custom_call.1} parent=0
    #allocation3 [shape = 'u8[512]{0}', space=smem, size = 0x200, scoped, tag = 'input window, operand 1, single buffered']
    #allocation4 [shape = 's32[2]{0}', space=sflag, size = 0x8, scoped, tag = 'scoped memory for tpu_custom_call.1']
    #allocation5 [shape = 's32[2]{0}', space=sflag, size = 0x8, scoped, tag = 'scoped memory for tpu_custom_call.1']
    #allocation6 [shape = 'u8[512]{0}', space=smem, size = 0x200, scoped, tag = 'input window, operand 2, single buffered']
    #allocation7 [shape = 's32[1]{0}', space=sflag, size = 0x4, scoped, tag = 'scoped memory for tpu_custom_call.1']
    #allocation8 [shape = 'u8[4096]{0}', space=smem, size = 0x1000, scoped, tag = 'input window, operand 3, single buffered']
    #allocation9 [shape = 'u8[512]{0}', space=smem, size = 0x200, scoped, tag = 'input window, operand 4, single buffered']
    #allocation10 [shape = 's32[1]{0}', space=sflag, size = 0x4, scoped, tag = 'scoped memory for tpu_custom_call.1']
    #allocation11 [shape = 'u8[262144]{0}', space=vmem, size = 0x40000, scoped, tag = 'output window, operand 0']
    #allocation12 [shape = 'u8[65536]{0}', space=vmem, size = 0x10000, scoped, tag = 'output window, operand 1']
    #allocation13 [shape = 's32[2]{0}', space=sflag, size = 0x8, scoped, tag = 'scoped memory for tpu_custom_call.1']
    %15 = vsyncpa [#allocation5], 0
    %16 = vsyncpa [#allocation7], 0
    %17 = vsyncpa [#allocation10], 0
    %18 = vsyncpa [#allocation4], 0
    %s19 = scalar_lea.sflag [#allocation4], 1
    %20 = vsyncpa %s19, 0
    %21 = vsyncpa [#allocation13], 0
    %s22 = scalar_lea.sflag [#allocation13], 1
    %23 = vsyncpa %s22, 0
    loop: start=0, step=1, limit=4
    $region2: #{tpu_custom_call.1} parent=1 // loop_pre_header
      _
    $region3: #{tpu_custom_call.1} parent=1 // loop_header
      %s25 = sphi 0, %s29
      %p26 = scmp.ge.s32.totalorder %s25, 4
      %s32 = sphi 0, %s51
      %s33 = sphi 0, %s47
      %s34 = sphi 0, %s43
      %s35 = sphi 0, %s32
      %s36 = sphi 0, %s33
      %s37 = sphi 0, %s34
      %s38 = sphi 0, %s35
      %s39 = sphi 0, %s36
      %s40 = sphi 0, %s37
      %s58 = sphi 0, %s60
      %s61 = sphi 0, %s58
      %s62 = sphi 0, %s61
      %s78 = sphi 0, %s62
      %s82 = sphi 0, %s82
      %s84 = sphi 0, %s82
      %s85 = sphi 0, %s84
      %s99 = sphi 0, %s85
      %s103 = sphi 0, %s103
      %s105 = sphi 0, %s103
      %s106 = sphi 0, %s105
      %s120 = sphi 0, %s106
      %s124 = sphi 0, %s124
      %s126 = sphi 0, %s124
      %s127 = sphi 0, %s126
      %s141 = sphi 0, %s127
      %s145 = sphi 0, %s145
      %s147 = sphi 0, %s145
      %s148 = sphi 0, %s147
      %s162 = sphi 0, %s148
      %s166 = sphi 0, %s166
      %s168 = sphi 0, %s166
      %s169 = sphi 0, %s168
      %s183 = sphi 0, %s169
      %s187 = sphi 0, %s187
      %s189 = sphi 0, %s187
      %s190 = sphi 0, %s189
      %s204 = sphi 0, %s190
      %s208 = sphi 0, %s208
      %s210 = sphi 0, %s208
      %s211 = sphi 0, %s210
      %s225 = sphi 0, %s211
      %s235 = sphi 0, %s237
      %s238 = sphi 0, %s235
      %s239 = sphi 0, %s238
      %s255 = sphi 0, %s239
      %s265 = sphi 0, %s267
      %s268 = sphi 0, %s265
      %s269 = sphi 0, %s268
      %s285 = sphi 0, %s269
    $region4: #{tpu_custom_call.1} parent=1 // loop_header_branch
      %28 = sbr.rel (%p26) target = $region8
    $region5: #{tpu_custom_call.1} parent=1 // loop_body
      %s30 = ssub.s32 %s25, 1
      %s31 = ssub.s32 %s25, 2
      %s41 = sadd.s32 1, %s34
      %p42 = scmp.ge.s32.totalorder %s41, 1
      %s43 = scalar_select %p42, 0, %s41
      %s44 = sadd.s32 1, %s33
      %s45 = scalar_select %p42, %s44, %s33
      %p46 = scmp.ge.s32.totalorder %s45, 1
      %s47 = scalar_select %p46, 0, %s45
      %s48 = sadd.s32 1, %s32
      %s49 = scalar_select %p46, %s48, %s32
      %p50 = scmp.ge.s32.totalorder %s49, 2
      %s51 = scalar_select %p50, 0, %s49
      %s52 = ssub.s32 %s32, %s51
      %s53 = ssub.s32 %s33, %s47
      %s54 = sor.u32 %s52, %s53
      %s55 = ssub.s32 %s34, %s43
      %s56 = sor.u32 %s54, %s55
      %p57 = scmp.eq.s32.totalorder %s56, 0
      %s59 = sadd.s32 %s58, 1
      %s60 = scalar_select %p57, %s58, %s59
      %p63 = pneg %p57
      %p64 = scmp.eq.s32.totalorder %s25, 1
      %p65 = por %p63, %p64
      %p66 = scmp.ne.s32.totalorder %s58, %s61
      %p67 = scmp.eq.s32.totalorder %s25, 0
      %p68 = por %p66, %p67
      %p69 = scmp.ne.s32.totalorder %s58, %s61
      %p70 = scmp.eq.s32.totalorder %s30, 1
      %p71 = por %p69, %p70
      %p72 = scmp.ne.s32.totalorder %s61, %s62
      %p73 = scmp.eq.s32.totalorder %s30, 0
      %p74 = por %p72, %p73
      %p75 = scmp.ne.s32.totalorder %s61, %s62
      %p76 = scmp.eq.s32.totalorder %s31, 1
      %p77 = por %p75, %p76
      %p79 = scmp.ne.s32.totalorder %s62, %s78
      %p80 = scmp.eq.s32.totalorder %s31, 0
      %p81 = por %p79, %p80
      %s83 = sadd.s32 %s82, 1
      %p86 = scmp.eq.s32.totalorder %s25, 1
      %p87 = scmp.ne.s32.totalorder %s82, %s84
      %p88 = scmp.eq.s32.totalorder %s25, 0
      %p89 = por %p87, %p88
      %p90 = scmp.ne.s32.totalorder %s82, %s84
      %p91 = scmp.eq.s32.totalorder %s30, 1
      %p92 = por %p90, %p91
      %p93 = scmp.ne.s32.totalorder %s84, %s85
      %p94 = scmp.eq.s32.totalorder %s30, 0
      %p95 = por %p93, %p94
      %p96 = scmp.ne.s32.totalorder %s84, %s85
      %p97 = scmp.eq.s32.totalorder %s31, 1
      %p98 = por %p96, %p97
      %p100 = scmp.ne.s32.totalorder %s85, %s99
      %p101 = scmp.eq.s32.totalorder %s31, 0
      %p102 = por %p100, %p101
      %s104 = sadd.s32 %s103, 1
      %p107 = scmp.eq.s32.totalorder %s25, 1
      %p108 = scmp.ne.s32.totalorder %s103, %s105
      %p109 = scmp.eq.s32.totalorder %s25, 0
      %p110 = por %p108, %p109
      %p111 = scmp.ne.s32.totalorder %s103, %s105
      %p112 = scmp.eq.s32.totalorder %s30, 1
      %p113 = por %p111, %p112
      %p114 = scmp.ne.s32.totalorder %s105, %s106
      %p115 = scmp.eq.s32.totalorder %s30, 0
      %p116 = por %p114, %p115
      %p117 = scmp.ne.s32.totalorder %s105, %s106
      %p118 = scmp.eq.s32.totalorder %s31, 1
      %p119 = por %p117, %p118
      %p121 = scmp.ne.s32.totalorder %s106, %s120
      %p122 = scmp.eq.s32.totalorder %s31, 0
      %p123 = por %p121, %p122
      %s125 = sadd.s32 %s124, 1
      %p128 = scmp.eq.s32.totalorder %s25, 1
      %p129 = scmp.ne.s32.totalorder %s124, %s126
      %p130 = scmp.eq.s32.totalorder %s25, 0
      %p131 = por %p129, %p130
      %p132 = scmp.ne.s32.totalorder %s124, %s126
      %p133 = scmp.eq.s32.totalorder %s30, 1
      %p134 = por %p132, %p133
      %p135 = scmp.ne.s32.totalorder %s126, %s127
      %p136 = scmp.eq.s32.totalorder %s30, 0
      %p137 = por %p135, %p136
      %p138 = scmp.ne.s32.totalorder %s126, %s127
      %p139 = scmp.eq.s32.totalorder %s31, 1
      %p140 = por %p138, %p139
      %p142 = scmp.ne.s32.totalorder %s127, %s141
      %p143 = scmp.eq.s32.totalorder %s31, 0
      %p144 = por %p142, %p143
      %s146 = sadd.s32 %s145, 1
      %p149 = scmp.eq.s32.totalorder %s25, 1
      %p150 = scmp.ne.s32.totalorder %s145, %s147
      %p151 = scmp.eq.s32.totalorder %s25, 0
      %p152 = por %p150, %p151
      %p153 = scmp.ne.s32.totalorder %s145, %s147
      %p154 = scmp.eq.s32.totalorder %s30, 1
      %p155 = por %p153, %p154
      %p156 = scmp.ne.s32.totalorder %s147, %s148
      %p157 = scmp.eq.s32.totalorder %s30, 0
      %p158 = por %p156, %p157
      %p159 = scmp.ne.s32.totalorder %s147, %s148
      %p160 = scmp.eq.s32.totalorder %s31, 1
      %p161 = por %p159, %p160
      %p163 = scmp.ne.s32.totalorder %s148, %s162
      %p164 = scmp.eq.s32.totalorder %s31, 0
      %p165 = por %p163, %p164
      %s167 = sadd.s32 %s166, 1
      %p170 = scmp.eq.s32.totalorder %s25, 1
      %p171 = scmp.ne.s32.totalorder %s166, %s168
      %p172 = scmp.eq.s32.totalorder %s25, 0
      %p173 = por %p171, %p172
      %p174 = scmp.ne.s32.totalorder %s166, %s168
      %p175 = scmp.eq.s32.totalorder %s30, 1
      %p176 = por %p174, %p175
      %p177 = scmp.ne.s32.totalorder %s168, %s169
      %p178 = scmp.eq.s32.totalorder %s30, 0
      %p179 = por %p177, %p178
      %p180 = scmp.ne.s32.totalorder %s168, %s169
      %p181 = scmp.eq.s32.totalorder %s31, 1
      %p182 = por %p180, %p181
      %p184 = scmp.ne.s32.totalorder %s169, %s183
      %p185 = scmp.eq.s32.totalorder %s31, 0
      %p186 = por %p184, %p185
      %s188 = sadd.s32 %s187, 1
      %p191 = scmp.eq.s32.totalorder %s25, 1
      %p192 = scmp.ne.s32.totalorder %s187, %s189
      %p193 = scmp.eq.s32.totalorder %s25, 0
      %p194 = por %p192, %p193
      %p195 = scmp.ne.s32.totalorder %s187, %s189
      %p196 = scmp.eq.s32.totalorder %s30, 1
      %p197 = por %p195, %p196
      %p198 = scmp.ne.s32.totalorder %s189, %s190
      %p199 = scmp.eq.s32.totalorder %s30, 0
      %p200 = por %p198, %p199
      %p201 = scmp.ne.s32.totalorder %s189, %s190
      %p202 = scmp.eq.s32.totalorder %s31, 1
      %p203 = por %p201, %p202
      %p205 = scmp.ne.s32.totalorder %s190, %s204
      %p206 = scmp.eq.s32.totalorder %s31, 0
      %p207 = por %p205, %p206
      %s209 = sadd.s32 %s208, 1
      %p212 = scmp.eq.s32.totalorder %s25, 1
      %p213 = scmp.ne.s32.totalorder %s208, %s210
      %p214 = scmp.eq.s32.totalorder %s25, 0
      %p215 = por %p213, %p214
      %p216 = scmp.ne.s32.totalorder %s208, %s210
      %p217 = scmp.eq.s32.totalorder %s30, 1
      %p218 = por %p216, %p217
      %p219 = scmp.ne.s32.totalorder %s210, %s211
      %p220 = scmp.eq.s32.totalorder %s30, 0
      %p221 = por %p219, %p220
      %p222 = scmp.ne.s32.totalorder %s210, %s211
      %p223 = scmp.eq.s32.totalorder %s31, 1
      %p224 = por %p222, %p223
      %p226 = scmp.ne.s32.totalorder %s211, %s225
      %p227 = scmp.eq.s32.totalorder %s31, 0
      %p228 = por %p226, %p227
      %s229 = ssub.s32 %s32, %s51
      %s230 = ssub.s32 %s33, %s47
      %s231 = sor.u32 %s229, %s230
      %s232 = ssub.s32 %s34, %s43
      %s233 = sor.u32 %s231, %s232
      %p234 = scmp.eq.s32.totalorder %s233, 0
      %s236 = sadd.s32 %s235, 1
      %s237 = scalar_select %p234, %s235, %s236
      %p240 = pneg %p234
      %p241 = scmp.eq.s32.totalorder %s25, 1
      %p242 = por %p240, %p241
      %p243 = scmp.ne.s32.totalorder %s235, %s238
      %p244 = scmp.eq.s32.totalorder %s25, 0
      %p245 = por %p243, %p244
      %p246 = scmp.ne.s32.totalorder %s235, %s238
      %p247 = scmp.eq.s32.totalorder %s30, 1
      %p248 = por %p246, %p247
      %p249 = scmp.ne.s32.totalorder %s238, %s239
      %p250 = scmp.eq.s32.totalorder %s30, 0
      %p251 = por %p249, %p250
      %p252 = scmp.ne.s32.totalorder %s238, %s239
      %p253 = scmp.eq.s32.totalorder %s31, 1
      %p254 = por %p252, %p253
      %p256 = scmp.ne.s32.totalorder %s239, %s255
      %p257 = scmp.eq.s32.totalorder %s31, 0
      %p258 = por %p256, %p257
      %s259 = ssub.s32 %s32, %s51
      %s260 = ssub.s32 %s33, %s47
      %s261 = sor.u32 %s259, %s260
      %s262 = ssub.s32 %s34, %s43
      %s263 = sor.u32 %s261, %s262
      %p264 = scmp.eq.s32.totalorder %s263, 0
      %s266 = sadd.s32 %s265, 1
      %s267 = scalar_select %p264, %s265, %s266
      %p270 = pneg %p264
      %p271 = scmp.eq.s32.totalorder %s25, 1
      %p272 = por %p270, %p271
      %p273 = scmp.ne.s32.totalorder %s265, %s268
      %p274 = scmp.eq.s32.totalorder %s25, 0
      %p275 = por %p273, %p274
      %p276 = scmp.ne.s32.totalorder %s265, %s268
      %p277 = scmp.eq.s32.totalorder %s30, 1
      %p278 = por %p276, %p277
      %p279 = scmp.ne.s32.totalorder %s268, %s269
      %p280 = scmp.eq.s32.totalorder %s30, 0
      %p281 = por %p279, %p280
      %p282 = scmp.ne.s32.totalorder %s268, %s269
      %p283 = scmp.eq.s32.totalorder %s31, 1
      %p284 = por %p282, %p283
      %p286 = scmp.ne.s32.totalorder %s269, %s285
      %p287 = scmp.eq.s32.totalorder %s31, 0
      %p288 = por %p286, %p287
      %p289 = scmp.le.s32.totalorder 1, %s25
      %p290 = scmp.lt.s32.totalorder %s25, 3
      %p291 = pnand %p289, %p290
      %p292 = pneg %p291
      // Predicated region
      $region9: #{tpu_custom_call.1} parent=5 // pred_check
        _
      $region10: #{tpu_custom_call.1} parent=5 // pred_check_branch
        %294 = sbr.rel (%p291) target = $region12
      $region11: #{tpu_custom_call.1} parent=5 // pred_region
        %s295 = ssub.s32 %s25, 1
        // Predicated region
        $region13: #{tpu_custom_call.1} parent=11 // pred_check
          %p296 = pneg %p95
        $region14: #{tpu_custom_call.1} parent=11 // pred_check_branch
          %298 = sbr.rel (%p296) target = $region16
        $region15: #{tpu_custom_call.1} parent=11 // pred_region
          %s300 = ssub.s32 16, 16
          %301 = vsyncadd [#allocation5], %s300
          %s303 = sshll.u32 %s1, 4
          %s304 = int_to_ptr.vmem [resolvable:$true] %s303
          %306 = dma.vmem_to_smem %s304, 16, [#allocation3], [#allocation5]
        $region16: #{tpu_custom_call.1} parent=11 // pred_fallthru
          _
        // Predicated region
        $region17: #{tpu_custom_call.1} parent=11 // pred_check
          %p307 = pneg %p116
        $region18: #{tpu_custom_call.1} parent=11 // pred_check_branch
          %309 = sbr.rel (%p307) target = $region20
        $region19: #{tpu_custom_call.1} parent=11 // pred_region
          %s311 = ssub.s32 16, 16
          %312 = vsyncadd [#allocation7], %s311
          %s314 = sshll.u32 %s2, 4
          %s315 = int_to_ptr.vmem [resolvable:$true] %s314
          %317 = dma.vmem_to_smem %s315, 16, [#allocation6], [#allocation7]
        $region20: #{tpu_custom_call.1} parent=11 // pred_fallthru
          _
        // Predicated region
        $region21: #{tpu_custom_call.1} parent=11 // pred_check
          %p318 = pneg %p137
        $region22: #{tpu_custom_call.1} parent=11 // pred_check_branch
          %320 = sbr.rel (%p318) target = $region24
        $region23: #{tpu_custom_call.1} parent=11 // pred_region
          %s322 = ssub.s32 128, 128
          %323 = vsyncadd [#allocation7], %s322
          %s325 = sshll.u32 %s3, 4
          %s326 = int_to_ptr.vmem [resolvable:$true] %s325
          %328 = dma.vmem_to_smem %s326, 128, [#allocation8], [#allocation7]
        $region24: #{tpu_custom_call.1} parent=11 // pred_fallthru
          _
        // Predicated region
        $region25: #{tpu_custom_call.1} parent=11 // pred_check
          %p329 = pneg %p158
        $region26: #{tpu_custom_call.1} parent=11 // pred_check_branch
          %331 = sbr.rel (%p329) target = $region28
        $region27: #{tpu_custom_call.1} parent=11 // pred_region
          %s333 = ssub.s32 16, 16
          %334 = vsyncadd [#allocation10], %s333
          %s336 = sshll.u32 %s4, 4
          %s337 = int_to_ptr.vmem [resolvable:$true] %s336
          %339 = dma.vmem_to_smem %s337, 16, [#allocation9], [#allocation10]
        $region28: #{tpu_custom_call.1} parent=11 // pred_fallthru
          _
        // Predicated region
        $region29: #{tpu_custom_call.1} parent=11 // pred_check
          %p340 = pneg %p179
        $region30: #{tpu_custom_call.1} parent=11 // pred_check_branch
          %342 = sbr.rel (%p340) target = $region32
        $region31: #{tpu_custom_call.1} parent=11 // pred_region
          _
        $region32: #{tpu_custom_call.1} parent=11 // pred_fallthru
          _
        // Predicated region
        $region33: #{tpu_custom_call.1} parent=11 // pred_check
          %p343 = pneg %p200
        $region34: #{tpu_custom_call.1} parent=11 // pred_check_branch
          %345 = sbr.rel (%p343) target = $region36
        $region35: #{tpu_custom_call.1} parent=11 // pred_region
          _
        $region36: #{tpu_custom_call.1} parent=11 // pred_fallthru
          _
        // Predicated region
        $region37: #{tpu_custom_call.1} parent=11 // pred_check
          %p346 = pneg %p221
        $region38: #{tpu_custom_call.1} parent=11 // pred_check_branch
          %348 = sbr.rel (%p346) target = $region40
        $region39: #{tpu_custom_call.1} parent=11 // pred_region
          _
        $region40: #{tpu_custom_call.1} parent=11 // pred_fallthru
          _
      $region12: #{tpu_custom_call.1} parent=5 // pred_fallthru
        _
      %p349 = scmp.lt.s32.totalorder %s25, 2
      // Predicated region
      $region41: #{tpu_custom_call.1} parent=5 // pred_check
        %p350 = pneg %p349
      $region42: #{tpu_custom_call.1} parent=5 // pred_check_branch
        %352 = sbr.rel (%p350) target = $region44
      $region43: #{tpu_custom_call.1} parent=5 // pred_region
        // Predicated region
        $region45: #{tpu_custom_call.1} parent=43 // pred_check
          %p353 = pneg %p68
        $region46: #{tpu_custom_call.1} parent=43 // pred_check_branch
          %355 = sbr.rel (%p353) target = $region48
        $region47: #{tpu_custom_call.1} parent=43 // pred_region
          %s356 = smul.u32 2, %s33
          %s357 = smul.u32 2, %s34
          %p358 = scmp.lt.s32.totalorder %s32, 1
          %s359 = scalar_select %p358, %s32, 1
          %p360 = scmp.lt.s32.totalorder %s356, 1
          %s361 = scalar_select %p360, %s356, 1
          %p362 = scmp.lt.s32.totalorder %s357, 1
          %s363 = scalar_select %p362, %s357, 1
          %s364 = smul.addr %s361, 2
          %s365 = sadd.s32 %s363, %s364
          %s366 = smul.addr %s359, 16
          %s367 = sadd.s32 %s365, %s366
          %s368 = smul.addr %s367, 8
          %s369 = scalar_lea.vmem %s0, %s368
          %s370 = smul.u32 2, %s33
          %s371 = smul.u32 2, %s34
        $region48: #{tpu_custom_call.1} parent=43 // pred_fallthru
          _
      $region44: #{tpu_custom_call.1} parent=5 // pred_fallthru
        _
      %p372 = scmp.le.s32.totalorder 1, %s25
      %p373 = scmp.lt.s32.totalorder %s25, 3
      %p374 = pnand %p372, %p373
      %p375 = pneg %p374
      // Predicated region
      $region49: #{tpu_custom_call.1} parent=5 // pred_check
        _
      $region50: #{tpu_custom_call.1} parent=5 // pred_check_branch
        %377 = sbr.rel (%p374) target = $region52
      $region51: #{tpu_custom_call.1} parent=5 // pred_region
        %s378 = ssub.s32 %s25, 1
        // Predicated region
        $region53: #{tpu_custom_call.1} parent=51 // pred_check
          %p379 = pneg %p95
        $region54: #{tpu_custom_call.1} parent=51 // pred_check_branch
          %381 = sbr.rel (%p379) target = $region56
        $region55: #{tpu_custom_call.1} parent=51 // pred_region
          %382 = dma.done [#allocation5], 16
        $region56: #{tpu_custom_call.1} parent=51 // pred_fallthru
          _
        // Predicated region
        $region57: #{tpu_custom_call.1} parent=51 // pred_check
          %p383 = pneg %p116
        $region58: #{tpu_custom_call.1} parent=51 // pred_check_branch
          %385 = sbr.rel (%p383) target = $region60
        $region59: #{tpu_custom_call.1} parent=51 // pred_region
          %386 = dma.done [#allocation7], 16
        $region60: #{tpu_custom_call.1} parent=51 // pred_fallthru
          _
        // Predicated region
        $region61: #{tpu_custom_call.1} parent=51 // pred_check
          %p387 = pneg %p137
        $region62: #{tpu_custom_call.1} parent=51 // pred_check_branch
          %389 = sbr.rel (%p387) target = $region64
        $region63: #{tpu_custom_call.1} parent=51 // pred_region
          %390 = dma.done [#allocation7], 128
        $region64: #{tpu_custom_call.1} parent=51 // pred_fallthru
          _
        // Predicated region
        $region65: #{tpu_custom_call.1} parent=51 // pred_check
          %p391 = pneg %p158
        $region66: #{tpu_custom_call.1} parent=51 // pred_check_branch
          %393 = sbr.rel (%p391) target = $region68
        $region67: #{tpu_custom_call.1} parent=51 // pred_region
          %394 = dma.done [#allocation10], 16
        $region68: #{tpu_custom_call.1} parent=51 // pred_fallthru
          _
        %395 = sfence
        %s396 = smul.u32 2, %s36
        %s397 = smul.u32 2, %s37
        %p398 = scmp.lt.s32.totalorder %s35, 1
        %s399 = scalar_select %p398, %s35, 1
        %p400 = scmp.lt.s32.totalorder %s396, 1
        %s401 = scalar_select %p400, %s396, 1
        %p402 = scmp.lt.s32.totalorder %s397, 1
        %s403 = scalar_select %p402, %s397, 1
        %s404 = smul.addr %s401, 2
        %s405 = sadd.s32 %s403, %s404
        %s406 = smul.addr %s399, 16
        %s407 = sadd.s32 %s405, %s406
        %s408 = smul.addr %s407, 8
        %s409 = scalar_lea.vmem %s0, %s408
        %p410 = pneg %p74
        %p411 = pneg %p71
        %p412 = pneg %p95
        %p413 = pneg %p92
        %p414 = pneg %p116
        %p415 = pneg %p113
        %p416 = pneg %p137
        %p417 = pneg %p134
        %p418 = pneg %p158
        %p419 = pneg %p155
        %p420 = pneg %p179
        %p421 = pneg %p176
        %p422 = pneg %p200
        %p423 = pneg %p197
        %p424 = pneg %p221
        %p425 = pneg %p218
        %p426 = pneg %p251
        %p427 = pneg %p248
        %s428 = sand.u32 %s238, 1
        %s429 = scalar_lea.sflag [#allocation4], %s428
        %s430 = sand.u32 %s238, 1
        %s431 = smul.addr %s430, 256
        %s432 = scalar_lea.vmem [#allocation11], %s431
        %p433 = pneg %p281
        %p434 = pneg %p278
        %s435 = sand.u32 %s268, 1
        %s436 = scalar_lea.sflag [#allocation13], %s435
        %s437 = sand.u32 %s268, 1
        %s438 = smul.addr %s437, 64
        %s439 = scalar_lea.vmem [#allocation12], %s438
        %s440 = smul.u32 2, %s36
        %s441 = smul.u32 2, %s37
        %p442 = scmp.lt.s32.totalorder %s35, 1
        %s443 = scalar_select %p442, %s35, 1
        %p444 = scmp.lt.s32.totalorder %s440, 1
        %s445 = scalar_select %p444, %s440, 1
        %p446 = scmp.lt.s32.totalorder %s441, 1
        %s447 = scalar_select %p446, %s441, 1
        %s448 = smul.addr %s445, 2
        %s449 = sadd.s32 %s447, %s448
        %s450 = smul.addr %s443, 16
        %s451 = sadd.s32 %s449, %s450
        %s452 = smul.addr %s451, 8
        %s453 = scalar_lea.vmem %s0, %s452
        %s454 = smul.u32 2, %s36
        %s455 = smul.u32 2, %s37
        %s456 = smul.u32 2, %s36
        %s457 = smul.u32 2, %s37
        %v458 = vld [vmem:[%s453] sm:$0xff]
        %v459 = vld [vmem:[%s453 + $0x8] sm:$0xff]
        %v460 = vld [vmem:[%s453 + $0x10] sm:$0xff]
        %v461 = vld [vmem:[%s453 + $0x18] sm:$0xff]
        %s462 = sld [smem:[#allocation3]]
        %v463 = vstv %s462
        %v464 = vmul.f32 %v458, %v463
        %v465 = vmul.f32 %v459, %v463
        %v466 = vmul.f32 %v460, %v463
        %v467 = vmul.f32 %v461, %v463
        %s468 = sld [smem:[#allocation6]]
        %v469 = vstv %s468
        %v470 = vadd.f32 %v464, %v469
        %v471 = vadd.f32 %v465, %v469
        %v472 = vadd.f32 %v466, %v469
        %v473 = vadd.f32 %v467, %v469
        %vm474 = vcmp.ge.f32.partialorder %v470, 0.0
        %vm475 = vcmp.ge.f32.partialorder %v471, 0.0
        %vm476 = vcmp.ge.f32.partialorder %v472, 0.0
        %vm477 = vcmp.ge.f32.partialorder %v473, 0.0
        %v478 = vmul.f32 %v470, 0.1
        %v479 = vmul.f32 %v471, 0.1
        %v480 = vmul.f32 %v472, 0.1
        %v481 = vmul.f32 %v473, 0.1
        %v482 = vsel %vm474, %v470, %v478
        %v483 = vsel %vm475, %v471, %v479
        %v484 = vsel %vm476, %v472, %v480
        %v485 = vsel %vm477, %v473, %v481
        %s486 = sld [smem:[#allocation8]]
        %v487 = vstv %s486
        %v488 = vmul.f32 %v487, %v482
        %v489 = vmul.f32 %v487, %v483
        %v490 = vmul.f32 %v487, %v484
        %v491 = vmul.f32 %v487, %v485
        %s492 = sld [smem:[#allocation9]]
        %v493 = vstv %s492
        %v494 = vadd.f32 %v488, %v493
        %v495 = vadd.f32 %v489, %v493
        %v496 = vadd.f32 %v490, %v493
        %v497 = vadd.f32 %v491, %v493
        %498 = vst [vmem:[#allocation2] sm:$0xff] %v494
        %499 = vst [vmem:[#allocation2 + $0x8] sm:$0xff] %v495
        %500 = vst [vmem:[#allocation2 + $0x10] sm:$0xff] %v496
        %501 = vst [vmem:[#allocation2 + $0x18] sm:$0xff] %v497
        %s502 = sld [smem:[#allocation8 + $0x80]]
        %v503 = vstv %s502
        %v504 = vmul.f32 %v503, %v482
        %v505 = vmul.f32 %v503, %v483
        %v506 = vmul.f32 %v503, %v484
        %v507 = vmul.f32 %v503, %v485
        %s508 = sld [smem:[#allocation9 + $0x1]]
        %v509 = vstv %s508
        %v510 = vadd.f32 %v504, %v509
        %v511 = vadd.f32 %v505, %v509
        %v512 = vadd.f32 %v506, %v509
        %v513 = vadd.f32 %v507, %v509
        %s514 = scalar_lea.vmem [#allocation2], 32
        %515 = vst [vmem:[%s514] sm:$0xff] %v510
        %516 = vst [vmem:[%s514 + $0x8] sm:$0xff] %v511
        %517 = vst [vmem:[%s514 + $0x10] sm:$0xff] %v512
        %518 = vst [vmem:[%s514 + $0x18] sm:$0xff] %v513
        %s519 = sld [smem:[#allocation8 + $0x100]]
        %v520 = vstv %s519
        %v521 = vmul.f32 %v520, %v482
        %v522 = vmul.f32 %v520, %v483
        %v523 = vmul.f32 %v520, %v484
        %v524 = vmul.f32 %v520, %v485
        %s525 = sld [smem:[#allocation9 + $0x2]]
        %v526 = vstv %s525
        %v527 = vadd.f32 %v521, %v526
        %v528 = vadd.f32 %v522, %v526
        %v529 = vadd.f32 %v523, %v526
        %v530 = vadd.f32 %v524, %v526
        %s531 = scalar_lea.vmem [#allocation2], 64
        %532 = vst [vmem:[%s531] sm:$0xff] %v527
        %533 = vst [vmem:[%s531 + $0x8] sm:$0xff] %v528
        %534 = vst [vmem:[%s531 + $0x10] sm:$0xff] %v529
        %535 = vst [vmem:[%s531 + $0x18] sm:$0xff] %v530
        %s536 = sld [smem:[#allocation8 + $0x180]]
        %v537 = vstv %s536
        %v538 = vmul.f32 %v537, %v482
        %v539 = vmul.f32 %v537, %v483
        %v540 = vmul.f32 %v537, %v484
        %v541 = vmul.f32 %v537, %v485
        %s542 = sld [smem:[#allocation9 + $0x3]]
        %v543 = vstv %s542
        %v544 = vadd.f32 %v538, %v543
        %v545 = vadd.f32 %v539, %v543
        %v546 = vadd.f32 %v540, %v543
        %v547 = vadd.f32 %v541, %v543
        %s548 = scalar_lea.vmem [#allocation2], 96
        %549 = vst [vmem:[%s548] sm:$0xff] %v544
        %550 = vst [vmem:[%s548 + $0x8] sm:$0xff] %v545
        %551 = vst [vmem:[%s548 + $0x10] sm:$0xff] %v546
        %552 = vst [vmem:[%s548 + $0x18] sm:$0xff] %v547
        %s553 = sld [smem:[#allocation8 + $0x200]]
        %v554 = vstv %s553
        %v555 = vmul.f32 %v554, %v482
        %v556 = vmul.f32 %v554, %v483
        %v557 = vmul.f32 %v554, %v484
        %v558 = vmul.f32 %v554, %v485
        %s559 = sld [smem:[#allocation9 + $0x4]]
        %v560 = vstv %s559
        %v561 = vadd.f32 %v555, %v560
        %v562 = vadd.f32 %v556, %v560
        %v563 = vadd.f32 %v557, %v560
        %v564 = vadd.f32 %v558, %v560
        %s565 = scalar_lea.vmem [#allocation2], 128
        %566 = vst [vmem:[%s565] sm:$0xff] %v561
        %567 = vst [vmem:[%s565 + $0x8] sm:$0xff] %v562
        %568 = vst [vmem:[%s565 + $0x10] sm:$0xff] %v563
        %569 = vst [vmem:[%s565 + $0x18] sm:$0xff] %v564
        %s570 = sld [smem:[#allocation8 + $0x280]]
        %v571 = vstv %s570
        %v572 = vmul.f32 %v571, %v482
        %v573 = vmul.f32 %v571, %v483
        %v574 = vmul.f32 %v571, %v484
        %v575 = vmul.f32 %v571, %v485
        %s576 = sld [smem:[#allocation9 + $0x5]]
        %v577 = vstv %s576
        %v578 = vadd.f32 %v572, %v577
        %v579 = vadd.f32 %v573, %v577
        %v580 = vadd.f32 %v574, %v577
        %v581 = vadd.f32 %v575, %v577
        %s582 = scalar_lea.vmem [#allocation2], 160
        %583 = vst [vmem:[%s582] sm:$0xff] %v578
        %584 = vst [vmem:[%s582 + $0x8] sm:$0xff] %v579
        %585 = vst [vmem:[%s582 + $0x10] sm:$0xff] %v580
        %586 = vst [vmem:[%s582 + $0x18] sm:$0xff] %v581
        %s587 = sld [smem:[#allocation8 + $0x300]]
        %v588 = vstv %s587
        %v589 = vmul.f32 %v588, %v482
        %v590 = vmul.f32 %v588, %v483
        %v591 = vmul.f32 %v588, %v484
        %v592 = vmul.f32 %v588, %v485
        %s593 = sld [smem:[#allocation9 + $0x6]]
        %v594 = vstv %s593
        %v595 = vadd.f32 %v589, %v594
        %v596 = vadd.f32 %v590, %v594
        %v597 = vadd.f32 %v591, %v594
        %v598 = vadd.f32 %v592, %v594
        %s599 = scalar_lea.vmem [#allocation2], 192
        %600 = vst [vmem:[%s599] sm:$0xff] %v595
        %601 = vst [vmem:[%s599 + $0x8] sm:$0xff] %v596
        %602 = vst [vmem:[%s599 + $0x10] sm:$0xff] %v597
        %603 = vst [vmem:[%s599 + $0x18] sm:$0xff] %v598
        %s604 = sld [smem:[#allocation8 + $0x380]]
        %v605 = vstv %s604
        %v606 = vmul.f32 %v605, %v482
        %v607 = vmul.f32 %v605, %v483
        %v608 = vmul.f32 %v605, %v484
        %v609 = vmul.f32 %v605, %v485
        %s610 = sld [smem:[#allocation9 + $0x7]]
        %v611 = vstv %s610
        %v612 = vadd.f32 %v606, %v611
        %v613 = vadd.f32 %v607, %v611
        %v614 = vadd.f32 %v608, %v611
        %v615 = vadd.f32 %v609, %v611
        %s616 = scalar_lea.vmem [#allocation2], 224
        %617 = vst [vmem:[%s616] sm:$0xff] %v612
        %618 = vst [vmem:[%s616 + $0x8] sm:$0xff] %v613
        %619 = vst [vmem:[%s616 + $0x10] sm:$0xff] %v614
        %620 = vst [vmem:[%s616 + $0x18] sm:$0xff] %v615
        %s621 = scalar_lea.vmem %s453, 32
        %v622 = vld [vmem:[%s621] sm:$0xff]
        %v623 = vld [vmem:[%s621 + $0x8] sm:$0xff]
        %v624 = vld [vmem:[%s621 + $0x10] sm:$0xff]
        %v625 = vld [vmem:[%s621 + $0x18] sm:$0xff]
        %s626 = sld [smem:[#allocation3 + $0x1]]
        %v627 = vstv %s626
        %v628 = vmul.f32 %v622, %v627
        %v629 = vmul.f32 %v623, %v627
        %v630 = vmul.f32 %v624, %v627
        %v631 = vmul.f32 %v625, %v627
        %s632 = sld [smem:[#allocation6 + $0x1]]
        %v633 = vstv %s632
        %v634 = vadd.f32 %v628, %v633
        %v635 = vadd.f32 %v629, %v633
        %v636 = vadd.f32 %v630, %v633
        %v637 = vadd.f32 %v631, %v633
        %vm638 = vcmp.ge.f32.partialorder %v634, 0.0
        %vm639 = vcmp.ge.f32.partialorder %v635, 0.0
        %vm640 = vcmp.ge.f32.partialorder %v636, 0.0
        %vm641 = vcmp.ge.f32.partialorder %v637, 0.0
        %v642 = vmul.f32 %v634, 0.1
        %v643 = vmul.f32 %v635, 0.1
        %v644 = vmul.f32 %v636, 0.1
        %v645 = vmul.f32 %v637, 0.1
        %v646 = vsel %vm638, %v634, %v642
        %v647 = vsel %vm639, %v635, %v643
        %v648 = vsel %vm640, %v636, %v644
        %v649 = vsel %vm641, %v637, %v645
        %s650 = sld [smem:[#allocation8 + $0x1]]
        %v651 = vstv %s650
        %v652 = vmul.f32 %v651, %v646
        %v653 = vmul.f32 %v651, %v647
        %v654 = vmul.f32 %v651, %v648
        %v655 = vmul.f32 %v651, %v649
        %v656 = vld [vmem:[#allocation2] sm:$0xff]
        %v657 = vld [vmem:[#allocation2 + $0x8] sm:$0xff]
        %v658 = vld [vmem:[#allocation2 + $0x10] sm:$0xff]
        %v659 = vld [vmem:[#allocation2 + $0x18] sm:$0xff]
        %v660 = vadd.f32 %v656, %v652
        %v661 = vadd.f32 %v657, %v653
        %v662 = vadd.f32 %v658, %v654
        %v663 = vadd.f32 %v659, %v655
        %664 = vst [vmem:[#allocation2] sm:$0xff] %v660
        %665 = vst [vmem:[#allocation2 + $0x8] sm:$0xff] %v661
        %666 = vst [vmem:[#allocation2 + $0x10] sm:$0xff] %v662
        %667 = vst [vmem:[#allocation2 + $0x18] sm:$0xff] %v663
        %s668 = sld [smem:[#allocation8 + $0x81]]
        %v669 = vstv %s668
        %v670 = vmul.f32 %v669, %v646
        %v671 = vmul.f32 %v669, %v647
        %v672 = vmul.f32 %v669, %v648
        %v673 = vmul.f32 %v669, %v649
        %v674 = vld [vmem:[%s514] sm:$0xff]
        %v675 = vld [vmem:[%s514 + $0x8] sm:$0xff]
        %v676 = vld [vmem:[%s514 + $0x10] sm:$0xff]
        %v677 = vld [vmem:[%s514 + $0x18] sm:$0xff]
        %v678 = vadd.f32 %v674, %v670
        %v679 = vadd.f32 %v675, %v671
        %v680 = vadd.f32 %v676, %v672
        %v681 = vadd.f32 %v677, %v673
        %682 = vst [vmem:[%s514] sm:$0xff] %v678
        %683 = vst [vmem:[%s514 + $0x8] sm:$0xff] %v679
        %684 = vst [vmem:[%s514 + $0x10] sm:$0xff] %v680
        %685 = vst [vmem:[%s514 + $0x18] sm:$0xff] %v681
        %s686 = sld [smem:[#allocation8 + $0x101]]
        %v687 = vstv %s686
        %v688 = vmul.f32 %v687, %v646
        %v689 = vmul.f32 %v687, %v647
        %v690 = vmul.f32 %v687, %v648
        %v691 = vmul.f32 %v687, %v649
        %v692 = vld [vmem:[%s531] sm:$0xff]
        %v693 = vld [vmem:[%s531 + $0x8] sm:$0xff]
        %v694 = vld [vmem:[%s531 + $0x10] sm:$0xff]
        %v695 = vld [vmem:[%s531 + $0x18] sm:$0xff]
        %v696 = vadd.f32 %v692, %v688
        %v697 = vadd.f32 %v693, %v689
        %v698 = vadd.f32 %v694, %v690
        %v699 = vadd.f32 %v695, %v691
        %700 = vst [vmem:[%s531] sm:$0xff] %v696
        %701 = vst [vmem:[%s531 + $0x8] sm:$0xff] %v697
        %702 = vst [vmem:[%s531 + $0x10] sm:$0xff] %v698
        %703 = vst [vmem:[%s531 + $0x18] sm:$0xff] %v699
        %s704 = sld [smem:[#allocation8 + $0x181]]
        %v705 = vstv %s704
        %v706 = vmul.f32 %v705, %v646
        %v707 = vmul.f32 %v705, %v647
        %v708 = vmul.f32 %v705, %v648
        %v709 = vmul.f32 %v705, %v649
        %v710 = vld [vmem:[%s548] sm:$0xff]
        %v711 = vld [vmem:[%s548 + $0x8] sm:$0xff]
        %v712 = vld [vmem:[%s548 + $0x10] sm:$0xff]
        %v713 = vld [vmem:[%s548 + $0x18] sm:$0xff]
        %v714 = vadd.f32 %v710, %v706
        %v715 = vadd.f32 %v711, %v707
        %v716 = vadd.f32 %v712, %v708
        %v717 = vadd.f32 %v713, %v709
        %718 = vst [vmem:[%s548] sm:$0xff] %v714
        %719 = vst [vmem:[%s548 + $0x8] sm:$0xff] %v715
        %720 = vst [vmem:[%s548 + $0x10] sm:$0xff] %v716
        %721 = vst [vmem:[%s548 + $0x18] sm:$0xff] %v717
        %s722 = sld [smem:[#allocation8 + $0x201]]
        %v723 = vstv %s722
        %v724 = vmul.f32 %v723, %v646
        %v725 = vmul.f32 %v723, %v647
        %v726 = vmul.f32 %v723, %v648
        %v727 = vmul.f32 %v723, %v649
        %v728 = vld [vmem:[%s565] sm:$0xff]
        %v729 = vld [vmem:[%s565 + $0x8] sm:$0xff]
        %v730 = vld [vmem:[%s565 + $0x10] sm:$0xff]
        %v731 = vld [vmem:[%s565 + $0x18] sm:$0xff]
        %v732 = vadd.f32 %v728, %v724
        %v733 = vadd.f32 %v729, %v725
        %v734 = vadd.f32 %v730, %v726
        %v735 = vadd.f32 %v731, %v727
        %736 = vst [vmem:[%s565] sm:$0xff] %v732
        %737 = vst [vmem:[%s565 + $0x8] sm:$0xff] %v733
        %738 = vst [vmem:[%s565 + $0x10] sm:$0xff] %v734
        %739 = vst [vmem:[%s565 + $0x18] sm:$0xff] %v735
        %s740 = sld [smem:[#allocation8 + $0x281]]
        %v741 = vstv %s740
        %v742 = vmul.f32 %v741, %v646
        %v743 = vmul.f32 %v741, %v647
        %v744 = vmul.f32 %v741, %v648
        %v745 = vmul.f32 %v741, %v649
        %v746 = vld [vmem:[%s582] sm:$0xff]
        %v747 = vld [vmem:[%s582 + $0x8] sm:$0xff]
        %v748 = vld [vmem:[%s582 + $0x10] sm:$0xff]
        %v749 = vld [vmem:[%s582 + $0x18] sm:$0xff]
        %v750 = vadd.f32 %v746, %v742
        %v751 = vadd.f32 %v747, %v743
        %v752 = vadd.f32 %v748, %v744
        %v753 = vadd.f32 %v749, %v745
        %754 = vst [vmem:[%s582] sm:$0xff] %v750
        %755 = vst [vmem:[%s582 + $0x8] sm:$0xff] %v751
        %756 = vst [vmem:[%s582 + $0x10] sm:$0xff] %v752
        %757 = vst [vmem:[%s582 + $0x18] sm:$0xff] %v753
        %s758 = sld [smem:[#allocation8 + $0x301]]
        %v759 = vstv %s758
        %v760 = vmul.f32 %v759, %v646
        %v761 = vmul.f32 %v759, %v647
        %v762 = vmul.f32 %v759, %v648
        %v763 = vmul.f32 %v759, %v649
        %v764 = vld [vmem:[%s599] sm:$0xff]
        %v765 = vld [vmem:[%s599 + $0x8] sm:$0xff]
        %v766 = vld [vmem:[%s599 + $0x10] sm:$0xff]
        %v767 = vld [vmem:[%s599 + $0x18] sm:$0xff]
        %v768 = vadd.f32 %v764, %v760
        %v769 = vadd.f32 %v765, %v761
        %v770 = vadd.f32 %v766, %v762
        %v771 = vadd.f32 %v767, %v763
        %772 = vst [vmem:[%s599] sm:$0xff] %v768
        %773 = vst [vmem:[%s599 + $0x8] sm:$0xff] %v769
        %774 = vst [vmem:[%s599 + $0x10] sm:$0xff] %v770
        %775 = vst [vmem:[%s599 + $0x18] sm:$0xff] %v771
        %s776 = sld [smem:[#allocation8 + $0x381]]
        %v777 = vstv %s776
        %v778 = vmul.f32 %v777, %v646
        %v779 = vmul.f32 %v777, %v647
        %v780 = vmul.f32 %v777, %v648
        %v781 = vmul.f32 %v777, %v649
        %v782 = vld [vmem:[%s616] sm:$0xff]
        %v783 = vld [vmem:[%s616 + $0x8] sm:$0xff]
        %v784 = vld [vmem:[%s616 + $0x10] sm:$0xff]
        %v785 = vld [vmem:[%s616 + $0x18] sm:$0xff]
        %v786 = vadd.f32 %v782, %v778
        %v787 = vadd.f32 %v783, %v779
        %v788 = vadd.f32 %v784, %v780
        %v789 = vadd.f32 %v785, %v781
        %790 = vst [vmem:[%s616] sm:$0xff] %v786
        %791 = vst [vmem:[%s616 + $0x8] sm:$0xff] %v787
        %792 = vst [vmem:[%s616 + $0x10] sm:$0xff] %v788
        %793 = vst [vmem:[%s616 + $0x18] sm:$0xff] %v789
        %s794 = scalar_lea.vmem %s453, 64
        %v795 = vld [vmem:[%s794] sm:$0xff]
        %v796 = vld [vmem:[%s794 + $0x8] sm:$0xff]
        %v797 = vld [vmem:[%s794 + $0x10] sm:$0xff]
        %v798 = vld [vmem:[%s794 + $0x18] sm:$0xff]
        %s799 = sld [smem:[#allocation3 + $0x2]]
        %v800 = vstv %s799
        %v801 = vmul.f32 %v795, %v800
        %v802 = vmul.f32 %v796, %v800
        %v803 = vmul.f32 %v797, %v800
        %v804 = vmul.f32 %v798, %v800
        %s805 = sld [smem:[#allocation6 + $0x2]]
        %v806 = vstv %s805
        %v807 = vadd.f32 %v801, %v806
        %v808 = vadd.f32 %v802, %v806
        %v809 = vadd.f32 %v803, %v806
        %v810 = vadd.f32 %v804, %v806
        %vm811 = vcmp.ge.f32.partialorder %v807, 0.0
        %vm812 = vcmp.ge.f32.partialorder %v808, 0.0
        %vm813 = vcmp.ge.f32.partialorder %v809, 0.0
        %vm814 = vcmp.ge.f32.partialorder %v810, 0.0
        %v815 = vmul.f32 %v807, 0.1
        %v816 = vmul.f32 %v808, 0.1
        %v817 = vmul.f32 %v809, 0.1
        %v818 = vmul.f32 %v810, 0.1
        %v819 = vsel %vm811, %v807, %v815
        %v820 = vsel %vm812, %v808, %v816
        %v821 = vsel %vm813, %v809, %v817
        %v822 = vsel %vm814, %v810, %v818
        %s823 = sld [smem:[#allocation8 + $0x2]]
        %v824 = vstv %s823
        %v825 = vmul.f32 %v824, %v819
        %v826 = vmul.f32 %v824, %v820
        %v827 = vmul.f32 %v824, %v821
        %v828 = vmul.f32 %v824, %v822
        %v829 = vld [vmem:[#allocation2] sm:$0xff]
        %v830 = vld [vmem:[#allocation2 + $0x8] sm:$0xff]
        %v831 = vld [vmem:[#allocation2 + $0x10] sm:$0xff]
        %v832 = vld [vmem:[#allocation2 + $0x18] sm:$0xff]
        %v833 = vadd.f32 %v829, %v825
        %v834 = vadd.f32 %v830, %v826
        %v835 = vadd.f32 %v831, %v827
        %v836 = vadd.f32 %v832, %v828
        %837 = vst [vmem:[#allocation2] sm:$0xff] %v833
        %838 = vst [vmem:[#allocation2 + $0x8] sm:$0xff] %v834
        %839 = vst [vmem:[#allocation2 + $0x10] sm:$0xff] %v835
        %840 = vst [vmem:[#allocation2 + $0x18] sm:$0xff] %v836
        %s841 = sld [smem:[#allocation8 + $0x82]]
        %v842 = vstv %s841
        %v843 = vmul.f32 %v842, %v819
        %v844 = vmul.f32 %v842, %v820
        %v845 = vmul.f32 %v842, %v821
        %v846 = vmul.f32 %v842, %v822
        %v847 = vld [vmem:[%s514] sm:$0xff]
        %v848 = vld [vmem:[%s514 + $0x8] sm:$0xff]
        %v849 = vld [vmem:[%s514 + $0x10] sm:$0xff]
        %v850 = vld [vmem:[%s514 + $0x18] sm:$0xff]
        %v851 = vadd.f32 %v847, %v843
        %v852 = vadd.f32 %v848, %v844
        %v853 = vadd.f32 %v849, %v845
        %v854 = vadd.f32 %v850, %v846
        %855 = vst [vmem:[%s514] sm:$0xff] %v851
        %856 = vst [vmem:[%s514 + $0x8] sm:$0xff] %v852
        %857 = vst [vmem:[%s514 + $0x10] sm:$0xff] %v853
        %858 = vst [vmem:[%s514 + $0x18] sm:$0xff] %v854
        %s859 = sld [smem:[#allocation8 + $0x102]]
        %v860 = vstv %s859
        %v861 = vmul.f32 %v860, %v819
        %v862 = vmul.f32 %v860, %v820
        %v863 = vmul.f32 %v860, %v821
        %v864 = vmul.f32 %v860, %v822
        %v865 = vld [vmem:[%s531] sm:$0xff]
        %v866 = vld [vmem:[%s531 + $0x8] sm:$0xff]
        %v867 = vld [vmem:[%s531 + $0x10] sm:$0xff]
        %v868 = vld [vmem:[%s531 + $0x18] sm:$0xff]
        %v869 = vadd.f32 %v865, %v861
        %v870 = vadd.f32 %v866, %v862
        %v871 = vadd.f32 %v867, %v863
        %v872 = vadd.f32 %v868, %v864
        %873 = vst [vmem:[%s531] sm:$0xff] %v869
        %874 = vst [vmem:[%s531 + $0x8] sm:$0xff] %v870
        %875 = vst [vmem:[%s531 + $0x10] sm:$0xff] %v871
        %876 = vst [vmem:[%s531 + $0x18] sm:$0xff] %v872
        %s877 = sld [smem:[#allocation8 + $0x182]]
        %v878 = vstv %s877
        %v879 = vmul.f32 %v878, %v819
        %v880 = vmul.f32 %v878, %v820
        %v881 = vmul.f32 %v878, %v821
        %v882 = vmul.f32 %v878, %v822
        %v883 = vld [vmem:[%s548] sm:$0xff]
        %v884 = vld [vmem:[%s548 + $0x8] sm:$0xff]
        %v885 = vld [vmem:[%s548 + $0x10] sm:$0xff]
        %v886 = vld [vmem:[%s548 + $0x18] sm:$0xff]
        %v887 = vadd.f32 %v883, %v879
        %v888 = vadd.f32 %v884, %v880
        %v889 = vadd.f32 %v885, %v881
        %v890 = vadd.f32 %v886, %v882
        %891 = vst [vmem:[%s548] sm:$0xff] %v887
        %892 = vst [vmem:[%s548 + $0x8] sm:$0xff] %v888
        %893 = vst [vmem:[%s548 + $0x10] sm:$0xff] %v889
        %894 = vst [vmem:[%s548 + $0x18] sm:$0xff] %v890
        %s895 = sld [smem:[#allocation8 + $0x202]]
        %v896 = vstv %s895
        %v897 = vmul.f32 %v896, %v819
        %v898 = vmul.f32 %v896, %v820
        %v899 = vmul.f32 %v896, %v821
        %v900 = vmul.f32 %v896, %v822
        %v901 = vld [vmem:[%s565] sm:$0xff]
        %v902 = vld [vmem:[%s565 + $0x8] sm:$0xff]
        %v903 = vld [vmem:[%s565 + $0x10] sm:$0xff]
        %v904 = vld [vmem:[%s565 + $0x18] sm:$0xff]
        %v905 = vadd.f32 %v901, %v897
        %v906 = vadd.f32 %v902, %v898
        %v907 = vadd.f32 %v903, %v899
        %v908 = vadd.f32 %v904, %v900
        %909 = vst [vmem:[%s565] sm:$0xff] %v905
        %910 = vst [vmem:[%s565 + $0x8] sm:$0xff] %v906
        %911 = vst [vmem:[%s565 + $0x10] sm:$0xff] %v907
        %912 = vst [vmem:[%s565 + $0x18] sm:$0xff] %v908
        %s913 = sld [smem:[#allocation8 + $0x282]]
        %v914 = vstv %s913
        %v915 = vmul.f32 %v914, %v819
        %v916 = vmul.f32 %v914, %v820
        %v917 = vmul.f32 %v914, %v821
        %v918 = vmul.f32 %v914, %v822
        %v919 = vld [vmem:[%s582] sm:$0xff]
        %v920 = vld [vmem:[%s582 + $0x8] sm:$0xff]
        %v921 = vld [vmem:[%s582 + $0x10] sm:$0xff]
        %v922 = vld [vmem:[%s582 + $0x18] sm:$0xff]
        %v923 = vadd.f32 %v919, %v915
        %v924 = vadd.f32 %v920, %v916
        %v925 = vadd.f32 %v921, %v917
        %v926 = vadd.f32 %v922, %v918
        %927 = vst [vmem:[%s582] sm:$0xff] %v923
        %928 = vst [vmem:[%s582 + $0x8] sm:$0xff] %v924
        %929 = vst [vmem:[%s582 + $0x10] sm:$0xff] %v925
        %930 = vst [vmem:[%s582 + $0x18] sm:$0xff] %v926
        %s931 = sld [smem:[#allocation8 + $0x302]]
        %v932 = vstv %s931
        %v933 = vmul.f32 %v932, %v819
        %v934 = vmul.f32 %v932, %v820
        %v935 = vmul.f32 %v932, %v821
        %v936 = vmul.f32 %v932, %v822
        %v937 = vld [vmem:[%s599] sm:$0xff]
        %v938 = vld [vmem:[%s599 + $0x8] sm:$0xff]
        %v939 = vld [vmem:[%s599 + $0x10] sm:$0xff]
        %v940 = vld [vmem:[%s599 + $0x18] sm:$0xff]
        %v941 = vadd.f32 %v937, %v933
        %v942 = vadd.f32 %v938, %v934
        %v943 = vadd.f32 %v939, %v935
        %v944 = vadd.f32 %v940, %v936
        %945 = vst [vmem:[%s599] sm:$0xff] %v941
        %946 = vst [vmem:[%s599 + $0x8] sm:$0xff] %v942
        %947 = vst [vmem:[%s599 + $0x10] sm:$0xff] %v943
        %948 = vst [vmem:[%s599 + $0x18] sm:$0xff] %v944
        %s949 = sld [smem:[#allocation8 + $0x382]]
        %v950 = vstv %s949
        %v951 = vmul.f32 %v950, %v819
        %v952 = vmul.f32 %v950, %v820
        %v953 = vmul.f32 %v950, %v821
        %v954 = vmul.f32 %v950, %v822
        %v955 = vld [vmem:[%s616] sm:$0xff]
        %v956 = vld [vmem:[%s616 + $0x8] sm:$0xff]
        %v957 = vld [vmem:[%s616 + $0x10] sm:$0xff]
        %v958 = vld [vmem:[%s616 + $0x18] sm:$0xff]
        %v959 = vadd.f32 %v955, %v951
        %v960 = vadd.f32 %v956, %v952
        %v961 = vadd.f32 %v957, %v953
        %v962 = vadd.f32 %v958, %v954
        %963 = vst [vmem:[%s616] sm:$0xff] %v959
        %964 = vst [vmem:[%s616 + $0x8] sm:$0xff] %v960
        %965 = vst [vmem:[%s616 + $0x10] sm:$0xff] %v961
        %966 = vst [vmem:[%s616 + $0x18] sm:$0xff] %v962
        %s967 = scalar_lea.vmem %s453, 96
        %v968 = vld [vmem:[%s967] sm:$0xff]
        %v969 = vld [vmem:[%s967 + $0x8] sm:$0xff]
        %v970 = vld [vmem:[%s967 + $0x10] sm:$0xff]
        %v971 = vld [vmem:[%s967 + $0x18] sm:$0xff]
        %s972 = sld [smem:[#allocation3 + $0x3]]
        %v973 = vstv %s972
        %v974 = vmul.f32 %v968, %v973
        %v975 = vmul.f32 %v969, %v973
        %v976 = vmul.f32 %v970, %v973
        %v977 = vmul.f32 %v971, %v973
        %s978 = sld [smem:[#allocation6 + $0x3]]
        %v979 = vstv %s978
        %v980 = vadd.f32 %v974, %v979
        %v981 = vadd.f32 %v975, %v979
        %v982 = vadd.f32 %v976, %v979
        %v983 = vadd.f32 %v977, %v979
        %vm984 = vcmp.ge.f32.partialorder %v980, 0.0
        %vm985 = vcmp.ge.f32.partialorder %v981, 0.0
        %vm986 = vcmp.ge.f32.partialorder %v982, 0.0
        %vm987 = vcmp.ge.f32.partialorder %v983, 0.0
        %v988 = vmul.f32 %v980, 0.1
        %v989 = vmul.f32 %v981, 0.1
        %v990 = vmul.f32 %v982, 0.1
        %v991 = vmul.f32 %v983, 0.1
        %v992 = vsel %vm984, %v980, %v988
        %v993 = vsel %vm985, %v981, %v989
        %v994 = vsel %vm986, %v982, %v990
        %v995 = vsel %vm987, %v983, %v991
        %s996 = sld [smem:[#allocation8 + $0x3]]
        %v997 = vstv %s996
        %v998 = vmul.f32 %v997, %v992
        %v999 = vmul.f32 %v997, %v993
        %v1000 = vmul.f32 %v997, %v994
        %v1001 = vmul.f32 %v997, %v995
        %v1002 = vld [vmem:[#allocation2] sm:$0xff]
        %v1003 = vld [vmem:[#allocation2 + $0x8] sm:$0xff]
        %v1004 = vld [vmem:[#allocation2 + $0x10] sm:$0xff]
        %v1005 = vld [vmem:[#allocation2 + $0x18] sm:$0xff]
        %v1006 = vadd.f32 %v1002, %v998
        %v1007 = vadd.f32 %v1003, %v999
        %v1008 = vadd.f32 %v1004, %v1000
        %v1009 = vadd.f32 %v1005, %v1001
        %1010 = vst [vmem:[#allocation2] sm:$0xff] %v1006
        %1011 = vst [vmem:[#allocation2 + $0x8] sm:$0xff] %v1007
        %1012 = vst [vmem:[#allocation2 + $0x10] sm:$0xff] %v1008
        %1013 = vst [vmem:[#allocation2 + $0x18] sm:$0xff] %v1009
        %s1014 = sld [smem:[#allocation8 + $0x83]]
        %v1015 = vstv %s1014
        %v1016 = vmul.f32 %v1015, %v992
        %v1017 = vmul.f32 %v1015, %v993
        %v1018 = vmul.f32 %v1015, %v994
        %v1019 = vmul.f32 %v1015, %v995
        %v1020 = vld [vmem:[%s514] sm:$0xff]
        %v1021 = vld [vmem:[%s514 + $0x8] sm:$0xff]
        %v1022 = vld [vmem:[%s514 + $0x10] sm:$0xff]
        %v1023 = vld [vmem:[%s514 + $0x18] sm:$0xff]
        %v1024 = vadd.f32 %v1020, %v1016
        %v1025 = vadd.f32 %v1021, %v1017
        %v1026 = vadd.f32 %v1022, %v1018
        %v1027 = vadd.f32 %v1023, %v1019
        %1028 = vst [vmem:[%s514] sm:$0xff] %v1024
        %1029 = vst [vmem:[%s514 + $0x8] sm:$0xff] %v1025
        %1030 = vst [vmem:[%s514 + $0x10] sm:$0xff] %v1026
        %1031 = vst [vmem:[%s514 + $0x18] sm:$0xff] %v1027
        %s1032 = sld [smem:[#allocation8 + $0x103]]
        %v1033 = vstv %s1032
        %v1034 = vmul.f32 %v1033, %v992
        %v1035 = vmul.f32 %v1033, %v993
        %v1036 = vmul.f32 %v1033, %v994
        %v1037 = vmul.f32 %v1033, %v995
        %v1038 = vld [vmem:[%s531] sm:$0xff]
        %v1039 = vld [vmem:[%s531 + $0x8] sm:$0xff]
        %v1040 = vld [vmem:[%s531 + $0x10] sm:$0xff]
        %v1041 = vld [vmem:[%s531 + $0x18] sm:$0xff]
        %v1042 = vadd.f32 %v1038, %v1034
        %v1043 = vadd.f32 %v1039, %v1035
        %v1044 = vadd.f32 %v1040, %v1036
        %v1045 = vadd.f32 %v1041, %v1037
        %1046 = vst [vmem:[%s531] sm:$0xff] %v1042
        %1047 = vst [vmem:[%s531 + $0x8] sm:$0xff] %v1043
        %1048 = vst [vmem:[%s531 + $0x10] sm:$0xff] %v1044
        %1049 = vst [vmem:[%s531 + $0x18] sm:$0xff] %v1045
        %s1050 = sld [smem:[#allocation8 + $0x183]]
        %v1051 = vstv %s1050
        %v1052 = vmul.f32 %v1051, %v992
        %v1053 = vmul.f32 %v1051, %v993
        %v1054 = vmul.f32 %v1051, %v994
        %v1055 = vmul.f32 %v1051, %v995
        %v1056 = vld [vmem:[%s548] sm:$0xff]
        %v1057 = vld [vmem:[%s548 + $0x8] sm:$0xff]
        %v1058 = vld [vmem:[%s548 + $0x10] sm:$0xff]
        %v1059 = vld [vmem:[%s548 + $0x18] sm:$0xff]
        %v1060 = vadd.f32 %v1056, %v1052
        %v1061 = vadd.f32 %v1057, %v1053
        %v1062 = vadd.f32 %v1058, %v1054
        %v1063 = vadd.f32 %v1059, %v1055
        %1064 = vst [vmem:[%s548] sm:$0xff] %v1060
        %1065 = vst [vmem:[%s548 + $0x8] sm:$0xff] %v1061
        %1066 = vst [vmem:[%s548 + $0x10] sm:$0xff] %v1062
        %1067 = vst [vmem:[%s548 + $0x18] sm:$0xff] %v1063
        %s1068 = sld [smem:[#allocation8 + $0x203]]
        %v1069 = vstv %s1068
        %v1070 = vmul.f32 %v1069, %v992
        %v1071 = vmul.f32 %v1069, %v993
        %v1072 = vmul.f32 %v1069, %v994
        %v1073 = vmul.f32 %v1069, %v995
        %v1074 = vld [vmem:[%s565] sm:$0xff]
        %v1075 = vld [vmem:[%s565 + $0x8] sm:$0xff]
        %v1076 = vld [vmem:[%s565 + $0x10] sm:$0xff]
        %v1077 = vld [vmem:[%s565 + $0x18] sm:$0xff]
        %v1078 = vadd.f32 %v1074, %v1070
        %v1079 = vadd.f32 %v1075, %v1071
        %v1080 = vadd.f32 %v1076, %v1072
        %v1081 = vadd.f32 %v1077, %v1073
        %1082 = vst [vmem:[%s565] sm:$0xff] %v1078
        %1083 = vst [vmem:[%s565 + $0x8] sm:$0xff] %v1079
        %1084 = vst [vmem:[%s565 + $0x10] sm:$0xff] %v1080
        %1085 = vst [vmem:[%s565 + $0x18] sm:$0xff] %v1081
        %s1086 = sld [smem:[#allocation8 + $0x283]]
        %v1087 = vstv %s1086
        %v1088 = vmul.f32 %v1087, %v992
        %v1089 = vmul.f32 %v1087, %v993
        %v1090 = vmul.f32 %v1087, %v994
        %v1091 = vmul.f32 %v1087, %v995
        %v1092 = vld [vmem:[%s582] sm:$0xff]
        %v1093 = vld [vmem:[%s582 + $0x8] sm:$0xff]
        %v1094 = vld [vmem:[%s582 + $0x10] sm:$0xff]
        %v1095 = vld [vmem:[%s582 + $0x18] sm:$0xff]
        %v1096 = vadd.f32 %v1092, %v1088
        %v1097 = vadd.f32 %v1093, %v1089
        %v1098 = vadd.f32 %v1094, %v1090
        %v1099 = vadd.f32 %v1095, %v1091
        %1100 = vst [vmem:[%s582] sm:$0xff] %v1096
        %1101 = vst [vmem:[%s582 + $0x8] sm:$0xff] %v1097
        %1102 = vst [vmem:[%s582 + $0x10] sm:$0xff] %v1098
        %1103 = vst [vmem:[%s582 + $0x18] sm:$0xff] %v1099
        %s1104 = sld [smem:[#allocation8 + $0x303]]
        %v1105 = vstv %s1104
        %v1106 = vmul.f32 %v1105, %v992
        %v1107 = vmul.f32 %v1105, %v993
        %v1108 = vmul.f32 %v1105, %v994
        %v1109 = vmul.f32 %v1105, %v995
        %v1110 = vld [vmem:[%s599] sm:$0xff]
        %v1111 = vld [vmem:[%s599 + $0x8] sm:$0xff]
        %v1112 = vld [vmem:[%s599 + $0x10] sm:$0xff]
        %v1113 = vld [vmem:[%s599 + $0x18] sm:$0xff]
        %v1114 = vadd.f32 %v1110, %v1106
        %v1115 = vadd.f32 %v1111, %v1107
        %v1116 = vadd.f32 %v1112, %v1108
        %v1117 = vadd.f32 %v1113, %v1109
        %1118 = vst [vmem:[%s599] sm:$0xff] %v1114
        %1119 = vst [vmem:[%s599 + $0x8] sm:$0xff] %v1115
        %1120 = vst [vmem:[%s599 + $0x10] sm:$0xff] %v1116
        %1121 = vst [vmem:[%s599 + $0x18] sm:$0xff] %v1117
        %s1122 = sld [smem:[#allocation8 + $0x383]]
        %v1123 = vstv %s1122
        %v1124 = vmul.f32 %v1123, %v992
        %v1125 = vmul.f32 %v1123, %v993
        %v1126 = vmul.f32 %v1123, %v994
        %v1127 = vmul.f32 %v1123, %v995
        %v1128 = vld [vmem:[%s616] sm:$0xff]
        %v1129 = vld [vmem:[%s616 + $0x8] sm:$0xff]
        %v1130 = vld [vmem:[%s616 + $0x10] sm:$0xff]
        %v1131 = vld [vmem:[%s616 + $0x18] sm:$0xff]
        %v1132 = vadd.f32 %v1128, %v1124
        %v1133 = vadd.f32 %v1129, %v1125
        %v1134 = vadd.f32 %v1130, %v1126
        %v1135 = vadd.f32 %v1131, %v1127
        %1136 = vst [vmem:[%s616] sm:$0xff] %v1132
        %1137 = vst [vmem:[%s616 + $0x8] sm:$0xff] %v1133
        %1138 = vst [vmem:[%s616 + $0x10] sm:$0xff] %v1134
        %1139 = vst [vmem:[%s616 + $0x18] sm:$0xff] %v1135
        %v1140 = vld [vmem:[%s5] sm:$0xff]
        %v1141 = vld [vmem:[%s5 + $0x8] sm:$0xff]
        %v1142 = vld [vmem:[%s5 + $0x10] sm:$0xff]
        %v1143 = vld [vmem:[%s5 + $0x18] sm:$0xff]
        %v1144 = vld [vmem:[%s5 + $0x20] sm:$0xff]
        %v1145 = vld [vmem:[%s5 + $0x28] sm:$0xff]
        %v1146 = vld [vmem:[%s5 + $0x30] sm:$0xff]
        %v1147 = vld [vmem:[%s5 + $0x38] sm:$0xff]
        %v1148 = vld [vmem:[%s5 + $0x40] sm:$0xff]
        %v1149 = vld [vmem:[%s5 + $0x48] sm:$0xff]
        %v1150 = vld [vmem:[%s5 + $0x50] sm:$0xff]
        %v1151 = vld [vmem:[%s5 + $0x58] sm:$0xff]
        %v1152 = vld [vmem:[%s5 + $0x60] sm:$0xff]
        %v1153 = vld [vmem:[%s5 + $0x68] sm:$0xff]
        %v1154 = vld [vmem:[%s5 + $0x70] sm:$0xff]
        %v1155 = vld [vmem:[%s5 + $0x78] sm:$0xff]
        %v1156 = vld [vmem:[%s5 + $0x80] sm:$0xff]
        %v1157 = vld [vmem:[%s5 + $0x88] sm:$0xff]
        %v1158 = vld [vmem:[%s5 + $0x90] sm:$0xff]
        %v1159 = vld [vmem:[%s5 + $0x98] sm:$0xff]
        %v1160 = vld [vmem:[%s5 + $0xa0] sm:$0xff]
        %v1161 = vld [vmem:[%s5 + $0xa8] sm:$0xff]
        %v1162 = vld [vmem:[%s5 + $0xb0] sm:$0xff]
        %v1163 = vld [vmem:[%s5 + $0xb8] sm:$0xff]
        %v1164 = vld [vmem:[%s5 + $0xc0] sm:$0xff]
        %v1165 = vld [vmem:[%s5 + $0xc8] sm:$0xff]
        %v1166 = vld [vmem:[%s5 + $0xd0] sm:$0xff]
        %v1167 = vld [vmem:[%s5 + $0xd8] sm:$0xff]
        %v1168 = vld [vmem:[%s5 + $0xe0] sm:$0xff]
        %v1169 = vld [vmem:[%s5 + $0xe8] sm:$0xff]
        %v1170 = vld [vmem:[%s5 + $0xf0] sm:$0xff]
        %v1171 = vld [vmem:[%s5 + $0xf8] sm:$0xff]
        %v1172 = vld [vmem:[%s6] sm:$0xff]
        %v1173 = vld [vmem:[%s7] sm:$0xff]
        %v1174 = vld [vmem:[#allocation2] sm:$0xff]
        %v1175 = vld [vmem:[#allocation2 + $0x8] sm:$0xff]
        %v1176 = vld [vmem:[#allocation2 + $0x10] sm:$0xff]
        %v1177 = vld [vmem:[#allocation2 + $0x18] sm:$0xff]
        %1178 = vst [vmem:[%s432] sm:$0xff] %v1174
        %1179 = vst [vmem:[%s432 + $0x8] sm:$0xff] %v1175
        %1180 = vst [vmem:[%s432 + $0x10] sm:$0xff] %v1176
        %1181 = vst [vmem:[%s432 + $0x18] sm:$0xff] %v1177
        %1182 = vrot.lane.b32.xlu0 %v1174, 127
        %v1183 = vpop.permute.xlu0 %1182
        %1184 = vrot.lane.b32.xlu0 %v1176, 127
        %v1185 = vpop.permute.xlu0 %1184
        %1186 = vrot.lane.b32.xlu0 %v1175, 127
        %v1187 = vpop.permute.xlu0 %1186
        %1188 = vrot.lane.b32.xlu0 %v1177, 127
        %v1189 = vpop.permute.xlu0 %1188
        %v1190 = vlaneseq
        %v1191 = vand.u32 %v1190, 127
        %vm1192 = vcmp.lt.s32.totalorder %v1191, 127
        %v1193 = vsel %vm1192, %v1183, %v1187
        %v1194 = vsel %vm1192, %v1185, %v1189
        %v1195 = vsel %vm1192, %v1187, %v1183
        %v1196 = vsel %vm1192, %v1189, %v1185
        %v1197 = vmax.f32 %v1174, %v1193
        %v1198 = vmax.f32 %v1175, %v1195
        %v1199 = vmax.f32 %v1176, %v1194
        %v1200 = vmax.f32 %v1177, %v1196
        %1201 = vrot.lane.b32.xlu0 %v1197, 112
        %v1202 = vpop.permute.xlu0 %1201
        %1203 = vrot.lane.b32.xlu0 %v1199, 112
        %v1204 = vpop.permute.xlu0 %1203
        %1205 = vrot.lane.b32.xlu0 %v1198, 112
        %v1206 = vpop.permute.xlu0 %1205
        %1207 = vrot.lane.b32.xlu0 %v1200, 112
        %v1208 = vpop.permute.xlu0 %1207
        %vm1209 = vcmp.lt.s32.totalorder %v1191, 112
        %v1210 = vsel %vm1209, %v1202, %v1206
        %v1211 = vsel %vm1209, %v1204, %v1208
        %v1212 = vsel %vm1209, %v1206, %v1202
        %v1213 = vsel %vm1209, %v1208, %v1204
        %v1214 = vmax.f32 %v1197, %v1210
        %v1215 = vmax.f32 %v1198, %v1212
        %v1216 = vmax.f32 %v1199, %v1211
        %v1217 = vmax.f32 %v1200, %v1213
        %vm1218 = vcmask 130048
        %v1220 = vsel %vm1218, %v1172, 0
        %1222 = vmatprep.subr.mxu0 0.0
        %1223 = vmatpush1.msra.mxu0 0.0
        %1224 = vmatprep.subr.mxu0 0.0
        %1225 = vmatpush1.msra.mxu0 0.0
        %1226 = vmatprep.subr.mxu0 0.0
        %1227 = vmatpush1.msra.mxu0 0.0
        %1228 = vmatprep.subr.mxu0 0.0
        %1229 = vmatpush1.msra.mxu0 0.0
        %1230 = vmatprep.subr.mxu0 0.0
        %1231 = vmatpush1.msra.mxu0 0.0
        %1232 = vmatprep.subr.mxu0 0.0
        %1233 = vmatpush1.msra.mxu0 0.0
        %1234 = vmatprep.subr.mxu0 0.0
        %1235 = vmatpush1.msra.mxu0 0.0
        %1236 = vmatprep.subr.mxu0 0.0
        %1237 = vmatpush1.msra.mxu0 0.0
        %1238 = vmatprep.subr.mxu0 0.0
        %1239 = vmatpush1.msra.mxu0 0.0
        %1240 = vmatprep.subr.mxu0 0.0
        %1241 = vmatpush1.msra.mxu0 0.0
        %1242 = vmatprep.subr.mxu0 0.0
        %1243 = vmatpush1.msra.mxu0 0.0
        %1244 = vmatprep.subr.mxu0 0.0
        %1245 = vmatpush1.msra.mxu0 0.0
        %1246 = vmatprep.subr.mxu0 0.0
        %1247 = vmatpush1.msra.mxu0 0.0
        %1248 = vmatprep.subr.mxu0 0.0
        %1249 = vmatpush1.msra.mxu0 0.0
        %1250 = vmatprep.subr.mxu0 %v1217
        %1251 = vmatpush1.msra.mxu0 %v1216
        %1252 = vmatprep.subr.mxu0 %v1215
        %1253 = vmatpush1.msra.mxu0 %v1214
        %1254 = vmatprep.subr.mxu0 0.0
        %1255 = vmatpush2.msra.mxu0 0.0
        %1256 = vmatprep.subr.mxu0 0.0
        %1257 = vmatpush2.msra.mxu0 0.0
        %1258 = vmatprep.subr.mxu0 0.0
        %1259 = vmatpush2.msra.mxu0 0.0
        %1260 = vmatprep.subr.mxu0 0.0
        %1261 = vmatpush2.msra.mxu0 0.0
        %1262 = vmatprep.subr.mxu0 0.0
        %1263 = vmatpush2.msra.mxu0 0.0
        %1264 = vmatprep.subr.mxu0 0.0
        %1265 = vmatpush2.msra.mxu0 0.0
        %1266 = vmatprep.subr.mxu0 0.0
        %1267 = vmatpush2.msra.mxu0 0.0
        %1268 = vmatprep.subr.mxu0 0.0
        %1269 = vmatpush2.msra.mxu0 0.0
        %1270 = vmatprep.subr.mxu0 0.0
        %1271 = vmatpush2.msra.mxu0 0.0
        %1272 = vmatprep.subr.mxu0 0.0
        %1273 = vmatpush2.msra.mxu0 0.0
        %1274 = vmatprep.subr.mxu0 0.0
        %1275 = vmatpush2.msra.mxu0 0.0
        %1276 = vmatprep.subr.mxu0 0.0
        %1277 = vmatpush2.msra.mxu0 0.0
        %1278 = vmatprep.subr.mxu0 0.0
        %1279 = vmatpush2.msra.mxu0 0.0
        %1280 = vmatprep.subr.mxu0 0.0
        %1281 = vmatpush2.msra.mxu0 0.0
        %1282 = vmatprep.subr.mxu0 0.0
        %1283 = vmatpush2.msra.mxu0 0.0
        %1284 = vmatprep.subr.mxu0 0.0
        %1285 = vmatpush2.msra.mxu0 0.0
        %1286 = vmatprep.mubr.f32.mxu0 0.0
        %1287 = vmatmul.mubr.f32.gmra.mxu0 %v1220
        %v1288 = vpop.f32.mrf.mxu0
        %v1289 = vadd.f32 0.0, %v1288
        %v1290 = vpop.f32.mrf.mxu0
        %v1291 = vadd.f32 0.0, %v1290
        %1292 = vdwg.mxu0
        %v1294 = vsel %vm1218, %v1173, 0
        %1296 = vmatprep.subr.mxu0 0.0
        %1297 = vmatpush1.msra.mxu0 0.0
        %1298 = vmatprep.subr.mxu0 0.0
        %1299 = vmatpush1.msra.mxu0 0.0
        %1300 = vmatprep.subr.mxu0 0.0
        %1301 = vmatpush1.msra.mxu0 0.0
        %1302 = vmatprep.subr.mxu0 0.0
        %1303 = vmatpush1.msra.mxu0 0.0
        %1304 = vmatprep.subr.mxu0 0.0
        %1305 = vmatpush1.msra.mxu0 0.0
        %1306 = vmatprep.subr.mxu0 0.0
        %1307 = vmatpush1.msra.mxu0 0.0
        %1308 = vmatprep.subr.mxu0 0.0
        %1309 = vmatpush1.msra.mxu0 0.0
        %1310 = vmatprep.subr.mxu0 0.0
        %1311 = vmatpush1.msra.mxu0 0.0
        %1312 = vmatprep.subr.mxu0 0.0
        %1313 = vmatpush1.msra.mxu0 0.0
        %1314 = vmatprep.subr.mxu0 0.0
        %1315 = vmatpush1.msra.mxu0 0.0
        %1316 = vmatprep.subr.mxu0 0.0
        %1317 = vmatpush1.msra.mxu0 0.0
        %1318 = vmatprep.subr.mxu0 0.0
        %1319 = vmatpush1.msra.mxu0 0.0
        %1320 = vmatprep.subr.mxu0 0.0
        %1321 = vmatpush1.msra.mxu0 0.0
        %1322 = vmatprep.subr.mxu0 0.0
        %1323 = vmatpush1.msra.mxu0 0.0
        %1324 = vmatprep.subr.mxu0 %v1217
        %1325 = vmatpush1.msra.mxu0 %v1216
        %1326 = vmatprep.subr.mxu0 %v1215
        %1327 = vmatpush1.msra.mxu0 %v1214
        %1328 = vmatprep.subr.mxu0 0.0
        %1329 = vmatpush2.msra.mxu0 0.0
        %1330 = vmatprep.subr.mxu0 0.0
        %1331 = vmatpush2.msra.mxu0 0.0
        %1332 = vmatprep.subr.mxu0 0.0
        %1333 = vmatpush2.msra.mxu0 0.0
        %1334 = vmatprep.subr.mxu0 0.0
        %1335 = vmatpush2.msra.mxu0 0.0
        %1336 = vmatprep.subr.mxu0 0.0
        %1337 = vmatpush2.msra.mxu0 0.0
        %1338 = vmatprep.subr.mxu0 0.0
        %1339 = vmatpush2.msra.mxu0 0.0
        %1340 = vmatprep.subr.mxu0 0.0
        %1341 = vmatpush2.msra.mxu0 0.0
        %1342 = vmatprep.subr.mxu0 0.0
        %1343 = vmatpush2.msra.mxu0 0.0
        %1344 = vmatprep.subr.mxu0 0.0
        %1345 = vmatpush2.msra.mxu0 0.0
        %1346 = vmatprep.subr.mxu0 0.0
        %1347 = vmatpush2.msra.mxu0 0.0
        %1348 = vmatprep.subr.mxu0 0.0
        %1349 = vmatpush2.msra.mxu0 0.0
        %1350 = vmatprep.subr.mxu0 0.0
        %1351 = vmatpush2.msra.mxu0 0.0
        %1352 = vmatprep.subr.mxu0 0.0
        %1353 = vmatpush2.msra.mxu0 0.0
        %1354 = vmatprep.subr.mxu0 0.0
        %1355 = vmatpush2.msra.mxu0 0.0
        %1356 = vmatprep.subr.mxu0 0.0
        %1357 = vmatpush2.msra.mxu0 0.0
        %1358 = vmatprep.subr.mxu0 0.0
        %1359 = vmatpush2.msra.mxu0 0.0
        %1360 = vmatprep.mubr.f32.mxu0 0.0
        %1361 = vmatmul.mubr.f32.gmra.mxu0 %v1294
        %v1362 = vpop.f32.mrf.mxu0
        %v1363 = vadd.f32 0.0, %v1362
        %v1364 = vpop.f32.mrf.mxu0
        %v1365 = vadd.f32 0.0, %v1364
        %1366 = vdwg.mxu0
        %v1367 = vmax.f32 %v1289, %v1363
        %v1368 = vmax.f32 %v1291, %v1365
        %1369 = vmatprep.subr.mxu0 0.0
        %1370 = vmatpush1.msra.mxu0 %v1155
        %1371 = vmatprep.subr.mxu0 0.0
        %1372 = vmatpush1.msra.mxu0 %v1154
        %1373 = vmatprep.subr.mxu0 0.0
        %1374 = vmatpush1.msra.mxu0 %v1153
        %1375 = vmatprep.subr.mxu0 0.0
        %1376 = vmatpush1.msra.mxu0 %v1152
        %1377 = vmatprep.subr.mxu0 0.0
        %1378 = vmatpush1.msra.mxu0 %v1151
        %1379 = vmatprep.subr.mxu0 0.0
        %1380 = vmatpush1.msra.mxu0 %v1150
        %1381 = vmatprep.subr.mxu0 0.0
        %1382 = vmatpush1.msra.mxu0 %v1149
        %1383 = vmatprep.subr.mxu0 0.0
        %1384 = vmatpush1.msra.mxu0 %v1148
        %1385 = vmatprep.subr.mxu0 0.0
        %1386 = vmatpush1.msra.mxu0 %v1147
        %1387 = vmatprep.subr.mxu0 0.0
        %1388 = vmatpush1.msra.mxu0 %v1146
        %1389 = vmatprep.subr.mxu0 0.0
        %1390 = vmatpush1.msra.mxu0 %v1145
        %1391 = vmatprep.subr.mxu0 0.0
        %1392 = vmatpush1.msra.mxu0 %v1144
        %1393 = vmatprep.subr.mxu0 0.0
        %1394 = vmatpush1.msra.mxu0 %v1143
        %1395 = vmatprep.subr.mxu0 0.0
        %1396 = vmatpush1.msra.mxu0 %v1142
        %1397 = vmatprep.subr.mxu0 0.0
        %1398 = vmatpush1.msra.mxu0 %v1141
        %1399 = vmatprep.subr.mxu0 0.0
        %1400 = vmatpush1.msra.mxu0 %v1140
        %1401 = vmatprep.subr.mxu0 0.0
        %1402 = vmatpush2.msra.mxu0 %v1171
        %1403 = vmatprep.subr.mxu0 0.0
        %1404 = vmatpush2.msra.mxu0 %v1170
        %1405 = vmatprep.subr.mxu0 0.0
        %1406 = vmatpush2.msra.mxu0 %v1169
        %1407 = vmatprep.subr.mxu0 0.0
        %1408 = vmatpush2.msra.mxu0 %v1168
        %1409 = vmatprep.subr.mxu0 0.0
        %1410 = vmatpush2.msra.mxu0 %v1167
        %1411 = vmatprep.subr.mxu0 0.0
        %1412 = vmatpush2.msra.mxu0 %v1166
        %1413 = vmatprep.subr.mxu0 0.0
        %1414 = vmatpush2.msra.mxu0 %v1165
        %1415 = vmatprep.subr.mxu0 0.0
        %1416 = vmatpush2.msra.mxu0 %v1164
        %1417 = vmatprep.subr.mxu0 0.0
        %1418 = vmatpush2.msra.mxu0 %v1163
        %1419 = vmatprep.subr.mxu0 0.0
        %1420 = vmatpush2.msra.mxu0 %v1162
        %1421 = vmatprep.subr.mxu0 0.0
        %1422 = vmatpush2.msra.mxu0 %v1161
        %1423 = vmatprep.subr.mxu0 0.0
        %1424 = vmatpush2.msra.mxu0 %v1160
        %1425 = vmatprep.subr.mxu0 0.0
        %1426 = vmatpush2.msra.mxu0 %v1159
        %1427 = vmatprep.subr.mxu0 0.0
        %1428 = vmatpush2.msra.mxu0 %v1158
        %1429 = vmatprep.subr.mxu0 0.0
        %1430 = vmatpush2.msra.mxu0 %v1157
        %1431 = vmatprep.subr.mxu0 0.0
        %1432 = vmatpush2.msra.mxu0 %v1156
        %1433 = vmatprep.mubr.f32.mxu0 %v1368
        %1434 = vmatmul.mubr.f32.gmra.mxu0 %v1367
        %v1435 = vpop.f32.mrf.mxu0
        %v1436 = vadd.f32 0.0, %v1435
        %v1437 = vpop.f32.mrf.mxu0
        %1438 = vdwg.mxu0
        %vm1439 = vcmask 523264
        %1440 = vst.msk [vmem:[%s439] sm:$0xff] %vm1439, %v1436
        %v1441 = vld [vmem:[%s514] sm:$0xff]
        %v1442 = vld [vmem:[%s514 + $0x8] sm:$0xff]
        %v1443 = vld [vmem:[%s514 + $0x10] sm:$0xff]
        %v1444 = vld [vmem:[%s514 + $0x18] sm:$0xff]
        %s1445 = scalar_lea.vmem %s432, 32 [#allocation11]
        %1446 = vst [vmem:[%s1445] sm:$0xff] %v1441
        %1447 = vst [vmem:[%s1445 + $0x8] sm:$0xff] %v1442
        %1448 = vst [vmem:[%s1445 + $0x10] sm:$0xff] %v1443
        %1449 = vst [vmem:[%s1445 + $0x18] sm:$0xff] %v1444
        %1450 = vrot.lane.b32.xlu0 %v1441, 127
        %v1451 = vpop.permute.xlu0 %1450
        %1452 = vrot.lane.b32.xlu0 %v1443, 127
        %v1453 = vpop.permute.xlu0 %1452
        %1454 = vrot.lane.b32.xlu0 %v1442, 127
        %v1455 = vpop.permute.xlu0 %1454
        %1456 = vrot.lane.b32.xlu0 %v1444, 127
        %v1457 = vpop.permute.xlu0 %1456
        %v1458 = vsel %vm1192, %v1451, %v1455
        %v1459 = vsel %vm1192, %v1453, %v1457
        %v1460 = vsel %vm1192, %v1455, %v1451
        %v1461 = vsel %vm1192, %v1457, %v1453
        %v1462 = vmax.f32 %v1441, %v1458
        %v1463 = vmax.f32 %v1442, %v1460
        %v1464 = vmax.f32 %v1443, %v1459
        %v1465 = vmax.f32 %v1444, %v1461
        %1466 = vrot.lane.b32.xlu0 %v1462, 112
        %v1467 = vpop.permute.xlu0 %1466
        %1468 = vrot.lane.b32.xlu0 %v1464, 112
        %v1469 = vpop.permute.xlu0 %1468
        %1470 = vrot.lane.b32.xlu0 %v1463, 112
        %v1471 = vpop.permute.xlu0 %1470
        %1472 = vrot.lane.b32.xlu0 %v1465, 112
        %v1473 = vpop.permute.xlu0 %1472
        %v1474 = vsel %vm1209, %v1467, %v1471
        %v1475 = vsel %vm1209, %v1469, %v1473
        %v1476 = vsel %vm1209, %v1471, %v1467
        %v1477 = vsel %vm1209, %v1473, %v1469
        %v1478 = vmax.f32 %v1462, %v1474
        %v1479 = vmax.f32 %v1463, %v1476
        %v1480 = vmax.f32 %v1464, %v1475
        %v1481 = vmax.f32 %v1465, %v1477
        %1482 = vmatprep.subr.mxu0 0.0
        %1483 = vmatpush1.msra.mxu0 0.0
        %1484 = vmatprep.subr.mxu0 0.0
        %1485 = vmatpush1.msra.mxu0 0.0
        %1486 = vmatprep.subr.mxu0 0.0
        %1487 = vmatpush1.msra.mxu0 0.0
        %1488 = vmatprep.subr.mxu0 0.0
        %1489 = vmatpush1.msra.mxu0 0.0
        %1490 = vmatprep.subr.mxu0 0.0
        %1491 = vmatpush1.msra.mxu0 0.0
        %1492 = vmatprep.subr.mxu0 0.0
        %1493 = vmatpush1.msra.mxu0 0.0
        %1494 = vmatprep.subr.mxu0 0.0
        %1495 = vmatpush1.msra.mxu0 0.0
        %1496 = vmatprep.subr.mxu0 0.0
        %1497 = vmatpush1.msra.mxu0 0.0
        %1498 = vmatprep.subr.mxu0 0.0
        %1499 = vmatpush1.msra.mxu0 0.0
        %1500 = vmatprep.subr.mxu0 0.0
        %1501 = vmatpush1.msra.mxu0 0.0
        %1502 = vmatprep.subr.mxu0 0.0
        %1503 = vmatpush1.msra.mxu0 0.0
        %1504 = vmatprep.subr.mxu0 0.0
        %1505 = vmatpush1.msra.mxu0 0.0
        %1506 = vmatprep.subr.mxu0 0.0
        %1507 = vmatpush1.msra.mxu0 0.0
        %1508 = vmatprep.subr.mxu0 0.0
        %1509 = vmatpush1.msra.mxu0 0.0
        %1510 = vmatprep.subr.mxu0 %v1481
        %1511 = vmatpush1.msra.mxu0 %v1480
        %1512 = vmatprep.subr.mxu0 %v1479
        %1513 = vmatpush1.msra.mxu0 %v1478
        %1514 = vmatprep.subr.mxu0 0.0
        %1515 = vmatpush2.msra.mxu0 0.0
        %1516 = vmatprep.subr.mxu0 0.0
        %1517 = vmatpush2.msra.mxu0 0.0
        %1518 = vmatprep.subr.mxu0 0.0
        %1519 = vmatpush2.msra.mxu0 0.0
        %1520 = vmatprep.subr.mxu0 0.0
        %1521 = vmatpush2.msra.mxu0 0.0
        %1522 = vmatprep.subr.mxu0 0.0
        %1523 = vmatpush2.msra.mxu0 0.0
        %1524 = vmatprep.subr.mxu0 0.0
        %1525 = vmatpush2.msra.mxu0 0.0
        %1526 = vmatprep.subr.mxu0 0.0
        %1527 = vmatpush2.msra.mxu0 0.0
        %1528 = vmatprep.subr.mxu0 0.0
        %1529 = vmatpush2.msra.mxu0 0.0
        %1530 = vmatprep.subr.mxu0 0.0
        %1531 = vmatpush2.msra.mxu0 0.0
        %1532 = vmatprep.subr.mxu0 0.0
        %1533 = vmatpush2.msra.mxu0 0.0
        %1534 = vmatprep.subr.mxu0 0.0
        %1535 = vmatpush2.msra.mxu0 0.0
        %1536 = vmatprep.subr.mxu0 0.0
        %1537 = vmatpush2.msra.mxu0 0.0
        %1538 = vmatprep.subr.mxu0 0.0
        %1539 = vmatpush2.msra.mxu0 0.0
        %1540 = vmatprep.subr.mxu0 0.0
        %1541 = vmatpush2.msra.mxu0 0.0
        %1542 = vmatprep.subr.mxu0 0.0
        %1543 = vmatpush2.msra.mxu0 0.0
        %1544 = vmatprep.subr.mxu0 0.0
        %1545 = vmatpush2.msra.mxu0 0.0
        %1546 = vmatprep.mubr.f32.mxu0 0.0
        %1547 = vmatmul.mubr.f32.gmra.mxu0 %v1220
        %v1548 = vpop.f32.mrf.mxu0
        %v1549 = vadd.f32 0.0, %v1548
        %v1550 = vpop.f32.mrf.mxu0
        %v1551 = vadd.f32 0.0, %v1550
        %1552 = vdwg.mxu0
        %1553 = vmatprep.subr.mxu0 0.0
        %1554 = vmatpush1.msra.mxu0 0.0
        %1555 = vmatprep.subr.mxu0 0.0
        %1556 = vmatpush1.msra.mxu0 0.0
        %1557 = vmatprep.subr.mxu0 0.0
        %1558 = vmatpush1.msra.mxu0 0.0
        %1559 = vmatprep.subr.mxu0 0.0
        %1560 = vmatpush1.msra.mxu0 0.0
        %1561 = vmatprep.subr.mxu0 0.0
        %1562 = vmatpush1.msra.mxu0 0.0
        %1563 = vmatprep.subr.mxu0 0.0
        %1564 = vmatpush1.msra.mxu0 0.0
        %1565 = vmatprep.subr.mxu0 0.0
        %1566 = vmatpush1.msra.mxu0 0.0
        %1567 = vmatprep.subr.mxu0 0.0
        %1568 = vmatpush1.msra.mxu0 0.0
        %1569 = vmatprep.subr.mxu0 0.0
        %1570 = vmatpush1.msra.mxu0 0.0
        %1571 = vmatprep.subr.mxu0 0.0
        %1572 = vmatpush1.msra.mxu0 0.0
        %1573 = vmatprep.subr.mxu0 0.0
        %1574 = vmatpush1.msra.mxu0 0.0
        %1575 = vmatprep.subr.mxu0 0.0
        %1576 = vmatpush1.msra.mxu0 0.0
        %1577 = vmatprep.subr.mxu0 0.0
        %1578 = vmatpush1.msra.mxu0 0.0
        %1579 = vmatprep.subr.mxu0 0.0
        %1580 = vmatpush1.msra.mxu0 0.0
        %1581 = vmatprep.subr.mxu0 %v1481
        %1582 = vmatpush1.msra.mxu0 %v1480
        %1583 = vmatprep.subr.mxu0 %v1479
        %1584 = vmatpush1.msra.mxu0 %v1478
        %1585 = vmatprep.subr.mxu0 0.0
        %1586 = vmatpush2.msra.mxu0 0.0
        %1587 = vmatprep.subr.mxu0 0.0
        %1588 = vmatpush2.msra.mxu0 0.0
        %1589 = vmatprep.subr.mxu0 0.0
        %1590 = vmatpush2.msra.mxu0 0.0
        %1591 = vmatprep.subr.mxu0 0.0
        %1592 = vmatpush2.msra.mxu0 0.0
        %1593 = vmatprep.subr.mxu0 0.0
        %1594 = vmatpush2.msra.mxu0 0.0
        %1595 = vmatprep.subr.mxu0 0.0
        %1596 = vmatpush2.msra.mxu0 0.0
        %1597 = vmatprep.subr.mxu0 0.0
        %1598 = vmatpush2.msra.mxu0 0.0
        %1599 = vmatprep.subr.mxu0 0.0
        %1600 = vmatpush2.msra.mxu0 0.0
        %1601 = vmatprep.subr.mxu0 0.0
        %1602 = vmatpush2.msra.mxu0 0.0
        %1603 = vmatprep.subr.mxu0 0.0
        %1604 = vmatpush2.msra.mxu0 0.0
        %1605 = vmatprep.subr.mxu0 0.0
        %1606 = vmatpush2.msra.mxu0 0.0
        %1607 = vmatprep.subr.mxu0 0.0
        %1608 = vmatpush2.msra.mxu0 0.0
        %1609 = vmatprep.subr.mxu0 0.0
        %1610 = vmatpush2.msra.mxu0 0.0
        %1611 = vmatprep.subr.mxu0 0.0
        %1612 = vmatpush2.msra.mxu0 0.0
        %1613 = vmatprep.subr.mxu0 0.0
        %1614 = vmatpush2.msra.mxu0 0.0
        %1615 = vmatprep.subr.mxu0 0.0
        %1616 = vmatpush2.msra.mxu0 0.0
        %1617 = vmatprep.mubr.f32.mxu0 0.0
        %1618 = vmatmul.mubr.f32.gmra.mxu0 %v1294
        %v1619 = vpop.f32.mrf.mxu0
        %v1620 = vadd.f32 0.0, %v1619
        %v1621 = vpop.f32.mrf.mxu0
        %v1622 = vadd.f32 0.0, %v1621
        %1623 = vdwg.mxu0
        %v1624 = vmax.f32 %v1549, %v1620
        %v1625 = vmax.f32 %v1551, %v1622
        %1626 = vmatprep.subr.mxu0 0.0
        %1627 = vmatpush1.msra.mxu0 %v1155
        %1628 = vmatprep.subr.mxu0 0.0
        %1629 = vmatpush1.msra.mxu0 %v1154
        %1630 = vmatprep.subr.mxu0 0.0
        %1631 = vmatpush1.msra.mxu0 %v1153
        %1632 = vmatprep.subr.mxu0 0.0
        %1633 = vmatpush1.msra.mxu0 %v1152
        %1634 = vmatprep.subr.mxu0 0.0
        %1635 = vmatpush1.msra.mxu0 %v1151
        %1636 = vmatprep.subr.mxu0 0.0
        %1637 = vmatpush1.msra.mxu0 %v1150
        %1638 = vmatprep.subr.mxu0 0.0
        %1639 = vmatpush1.msra.mxu0 %v1149
        %1640 = vmatprep.subr.mxu0 0.0
        %1641 = vmatpush1.msra.mxu0 %v1148
        %1642 = vmatprep.subr.mxu0 0.0
        %1643 = vmatpush1.msra.mxu0 %v1147
        %1644 = vmatprep.subr.mxu0 0.0
        %1645 = vmatpush1.msra.mxu0 %v1146
        %1646 = vmatprep.subr.mxu0 0.0
        %1647 = vmatpush1.msra.mxu0 %v1145
        %1648 = vmatprep.subr.mxu0 0.0
        %1649 = vmatpush1.msra.mxu0 %v1144
        %1650 = vmatprep.subr.mxu0 0.0
        %1651 = vmatpush1.msra.mxu0 %v1143
        %1652 = vmatprep.subr.mxu0 0.0
        %1653 = vmatpush1.msra.mxu0 %v1142
        %1654 = vmatprep.subr.mxu0 0.0
        %1655 = vmatpush1.msra.mxu0 %v1141
        %1656 = vmatprep.subr.mxu0 0.0
        %1657 = vmatpush1.msra.mxu0 %v1140
        %1658 = vmatprep.subr.mxu0 0.0
        %1659 = vmatpush2.msra.mxu0 %v1171
        %1660 = vmatprep.subr.mxu0 0.0
        %1661 = vmatpush2.msra.mxu0 %v1170
        %1662 = vmatprep.subr.mxu0 0.0
        %1663 = vmatpush2.msra.mxu0 %v1169
        %1664 = vmatprep.subr.mxu0 0.0
        %1665 = vmatpush2.msra.mxu0 %v1168
        %1666 = vmatprep.subr.mxu0 0.0
        %1667 = vmatpush2.msra.mxu0 %v1167
        %1668 = vmatprep.subr.mxu0 0.0
        %1669 = vmatpush2.msra.mxu0 %v1166
        %1670 = vmatprep.subr.mxu0 0.0
        %1671 = vmatpush2.msra.mxu0 %v1165
        %1672 = vmatprep.subr.mxu0 0.0
        %1673 = vmatpush2.msra.mxu0 %v1164
        %1674 = vmatprep.subr.mxu0 0.0
        %1675 = vmatpush2.msra.mxu0 %v1163
        %1676 = vmatprep.subr.mxu0 0.0
        %1677 = vmatpush2.msra.mxu0 %v1162
        %1678 = vmatprep.subr.mxu0 0.0
        %1679 = vmatpush2.msra.mxu0 %v1161
        %1680 = vmatprep.subr.mxu0 0.0
        %1681 = vmatpush2.msra.mxu0 %v1160
        %1682 = vmatprep.subr.mxu0 0.0
        %1683 = vmatpush2.msra.mxu0 %v1159
        %1684 = vmatprep.subr.mxu0 0.0
        %1685 = vmatpush2.msra.mxu0 %v1158
        %1686 = vmatprep.subr.mxu0 0.0
        %1687 = vmatpush2.msra.mxu0 %v1157
        %1688 = vmatprep.subr.mxu0 0.0
        %1689 = vmatpush2.msra.mxu0 %v1156
        %1690 = vmatprep.mubr.f32.mxu0 %v1625
        %1691 = vmatmul.mubr.f32.gmra.mxu0 %v1624
        %v1692 = vpop.f32.mrf.mxu0
        %v1693 = vadd.f32 0.0, %v1692
        %v1694 = vpop.f32.mrf.mxu0
        %1695 = vdwg.mxu0
        %s1696 = scalar_lea.vmem %s439, 8 [#allocation12]
        %1697 = vst.msk [vmem:[%s1696] sm:$0xff] %vm1439, %v1693
        %v1698 = vld [vmem:[%s531] sm:$0xff]
        %v1699 = vld [vmem:[%s531 + $0x8] sm:$0xff]
        %v1700 = vld [vmem:[%s531 + $0x10] sm:$0xff]
        %v1701 = vld [vmem:[%s531 + $0x18] sm:$0xff]
        %s1702 = scalar_lea.vmem %s432, 64 [#allocation11]
        %1703 = vst [vmem:[%s1702] sm:$0xff] %v1698
        %1704 = vst [vmem:[%s1702 + $0x8] sm:$0xff] %v1699
        %1705 = vst [vmem:[%s1702 + $0x10] sm:$0xff] %v1700
        %1706 = vst [vmem:[%s1702 + $0x18] sm:$0xff] %v1701
        %1707 = vrot.lane.b32.xlu0 %v1698, 127
        %v1708 = vpop.permute.xlu0 %1707
        %1709 = vrot.lane.b32.xlu0 %v1700, 127
        %v1710 = vpop.permute.xlu0 %1709
        %1711 = vrot.lane.b32.xlu0 %v1699, 127
        %v1712 = vpop.permute.xlu0 %1711
        %1713 = vrot.lane.b32.xlu0 %v1701, 127
        %v1714 = vpop.permute.xlu0 %1713
        %v1715 = vsel %vm1192, %v1708, %v1712
        %v1716 = vsel %vm1192, %v1710, %v1714
        %v1717 = vsel %vm1192, %v1712, %v1708
        %v1718 = vsel %vm1192, %v1714, %v1710
        %v1719 = vmax.f32 %v1698, %v1715
        %v1720 = vmax.f32 %v1699, %v1717
        %v1721 = vmax.f32 %v1700, %v1716
        %v1722 = vmax.f32 %v1701, %v1718
        %1723 = vrot.lane.b32.xlu0 %v1719, 112
        %v1724 = vpop.permute.xlu0 %1723
        %1725 = vrot.lane.b32.xlu0 %v1721, 112
        %v1726 = vpop.permute.xlu0 %1725
        %1727 = vrot.lane.b32.xlu0 %v1720, 112
        %v1728 = vpop.permute.xlu0 %1727
        %1729 = vrot.lane.b32.xlu0 %v1722, 112
        %v1730 = vpop.permute.xlu0 %1729
        %v1731 = vsel %vm1209, %v1724, %v1728
        %v1732 = vsel %vm1209, %v1726, %v1730
        %v1733 = vsel %vm1209, %v1728, %v1724
        %v1734 = vsel %vm1209, %v1730, %v1726
        %v1735 = vmax.f32 %v1719, %v1731
        %v1736 = vmax.f32 %v1720, %v1733
        %v1737 = vmax.f32 %v1721, %v1732
        %v1738 = vmax.f32 %v1722, %v1734
        %1739 = vmatprep.subr.mxu0 0.0
        %1740 = vmatpush1.msra.mxu0 0.0
        %1741 = vmatprep.subr.mxu0 0.0
        %1742 = vmatpush1.msra.mxu0 0.0
        %1743 = vmatprep.subr.mxu0 0.0
        %1744 = vmatpush1.msra.mxu0 0.0
        %1745 = vmatprep.subr.mxu0 0.0
        %1746 = vmatpush1.msra.mxu0 0.0
        %1747 = vmatprep.subr.mxu0 0.0
        %1748 = vmatpush1.msra.mxu0 0.0
        %1749 = vmatprep.subr.mxu0 0.0
        %1750 = vmatpush1.msra.mxu0 0.0
        %1751 = vmatprep.subr.mxu0 0.0
        %1752 = vmatpush1.msra.mxu0 0.0
        %1753 = vmatprep.subr.mxu0 0.0
        %1754 = vmatpush1.msra.mxu0 0.0
        %1755 = vmatprep.subr.mxu0 0.0
        %1756 = vmatpush1.msra.mxu0 0.0
        %1757 = vmatprep.subr.mxu0 0.0
        %1758 = vmatpush1.msra.mxu0 0.0
        %1759 = vmatprep.subr.mxu0 0.0
        %1760 = vmatpush1.msra.mxu0 0.0
        %1761 = vmatprep.subr.mxu0 0.0
        %1762 = vmatpush1.msra.mxu0 0.0
        %1763 = vmatprep.subr.mxu0 0.0
        %1764 = vmatpush1.msra.mxu0 0.0
        %1765 = vmatprep.subr.mxu0 0.0
        %1766 = vmatpush1.msra.mxu0 0.0
        %1767 = vmatprep.subr.mxu0 %v1738
        %1768 = vmatpush1.msra.mxu0 %v1737
        %1769 = vmatprep.subr.mxu0 %v1736
        %1770 = vmatpush1.msra.mxu0 %v1735
        %1771 = vmatprep.subr.mxu0 0.0
        %1772 = vmatpush2.msra.mxu0 0.0
        %1773 = vmatprep.subr.mxu0 0.0
        %1774 = vmatpush2.msra.mxu0 0.0
        %1775 = vmatprep.subr.mxu0 0.0
        %1776 = vmatpush2.msra.mxu0 0.0
        %1777 = vmatprep.subr.mxu0 0.0
        %1778 = vmatpush2.msra.mxu0 0.0
        %1779 = vmatprep.subr.mxu0 0.0
        %1780 = vmatpush2.msra.mxu0 0.0
        %1781 = vmatprep.subr.mxu0 0.0
        %1782 = vmatpush2.msra.mxu0 0.0
        %1783 = vmatprep.subr.mxu0 0.0
        %1784 = vmatpush2.msra.mxu0 0.0
        %1785 = vmatprep.subr.mxu0 0.0
        %1786 = vmatpush2.msra.mxu0 0.0
        %1787 = vmatprep.subr.mxu0 0.0
        %1788 = vmatpush2.msra.mxu0 0.0
        %1789 = vmatprep.subr.mxu0 0.0
        %1790 = vmatpush2.msra.mxu0 0.0
        %1791 = vmatprep.subr.mxu0 0.0
        %1792 = vmatpush2.msra.mxu0 0.0
        %1793 = vmatprep.subr.mxu0 0.0
        %1794 = vmatpush2.msra.mxu0 0.0
        %1795 = vmatprep.subr.mxu0 0.0
        %1796 = vmatpush2.msra.mxu0 0.0
        %1797 = vmatprep.subr.mxu0 0.0
        %1798 = vmatpush2.msra.mxu0 0.0
        %1799 = vmatprep.subr.mxu0 0.0
        %1800 = vmatpush2.msra.mxu0 0.0
        %1801 = vmatprep.subr.mxu0 0.0
        %1802 = vmatpush2.msra.mxu0 0.0
        %1803 = vmatprep.mubr.f32.mxu0 0.0
        %1804 = vmatmul.mubr.f32.gmra.mxu0 %v1220
        %v1805 = vpop.f32.mrf.mxu0
        %v1806 = vadd.f32 0.0, %v1805
        %v1807 = vpop.f32.mrf.mxu0
        %v1808 = vadd.f32 0.0, %v1807
        %1809 = vdwg.mxu0
        %1810 = vmatprep.subr.mxu0 0.0
        %1811 = vmatpush1.msra.mxu0 0.0
        %1812 = vmatprep.subr.mxu0 0.0
        %1813 = vmatpush1.msra.mxu0 0.0
        %1814 = vmatprep.subr.mxu0 0.0
        %1815 = vmatpush1.msra.mxu0 0.0
        %1816 = vmatprep.subr.mxu0 0.0
        %1817 = vmatpush1.msra.mxu0 0.0
        %1818 = vmatprep.subr.mxu0 0.0
        %1819 = vmatpush1.msra.mxu0 0.0
        %1820 = vmatprep.subr.mxu0 0.0
        %1821 = vmatpush1.msra.mxu0 0.0
        %1822 = vmatprep.subr.mxu0 0.0
        %1823 = vmatpush1.msra.mxu0 0.0
        %1824 = vmatprep.subr.mxu0 0.0
        %1825 = vmatpush1.msra.mxu0 0.0
        %1826 = vmatprep.subr.mxu0 0.0
        %1827 = vmatpush1.msra.mxu0 0.0
        %1828 = vmatprep.subr.mxu0 0.0
        %1829 = vmatpush1.msra.mxu0 0.0
        %1830 = vmatprep.subr.mxu0 0.0
        %1831 = vmatpush1.msra.mxu0 0.0
        %1832 = vmatprep.subr.mxu0 0.0
        %1833 = vmatpush1.msra.mxu0 0.0
        %1834 = vmatprep.subr.mxu0 0.0
        %1835 = vmatpush1.msra.mxu0 0.0
        %1836 = vmatprep.subr.mxu0 0.0
        %1837 = vmatpush1.msra.mxu0 0.0
        %1838 = vmatprep.subr.mxu0 %v1738
        %1839 = vmatpush1.msra.mxu0 %v1737
        %1840 = vmatprep.subr.mxu0 %v1736
        %1841 = vmatpush1.msra.mxu0 %v1735
        %1842 = vmatprep.subr.mxu0 0.0
        %1843 = vmatpush2.msra.mxu0 0.0
        %1844 = vmatprep.subr.mxu0 0.0
        %1845 = vmatpush2.msra.mxu0 0.0
        %1846 = vmatprep.subr.mxu0 0.0
        %1847 = vmatpush2.msra.mxu0 0.0
        %1848 = vmatprep.subr.mxu0 0.0
        %1849 = vmatpush2.msra.mxu0 0.0
        %1850 = vmatprep.subr.mxu0 0.0
        %1851 = vmatpush2.msra.mxu0 0.0
        %1852 = vmatprep.subr.mxu0 0.0
        %1853 = vmatpush2.msra.mxu0 0.0
        %1854 = vmatprep.subr.mxu0 0.0
        %1855 = vmatpush2.msra.mxu0 0.0
        %1856 = vmatprep.subr.mxu0 0.0
        %1857 = vmatpush2.msra.mxu0 0.0
        %1858 = vmatprep.subr.mxu0 0.0
        %1859 = vmatpush2.msra.mxu0 0.0
        %1860 = vmatprep.subr.mxu0 0.0
        %1861 = vmatpush2.msra.mxu0 0.0
        %1862 = vmatprep.subr.mxu0 0.0
        %1863 = vmatpush2.msra.mxu0 0.0
        %1864 = vmatprep.subr.mxu0 0.0
        %1865 = vmatpush2.msra.mxu0 0.0
        %1866 = vmatprep.subr.mxu0 0.0
        %1867 = vmatpush2.msra.mxu0 0.0
        %1868 = vmatprep.subr.mxu0 0.0
        %1869 = vmatpush2.msra.mxu0 0.0
        %1870 = vmatprep.subr.mxu0 0.0
        %1871 = vmatpush2.msra.mxu0 0.0
        %1872 = vmatprep.subr.mxu0 0.0
        %1873 = vmatpush2.msra.mxu0 0.0
        %1874 = vmatprep.mubr.f32.mxu0 0.0
        %1875 = vmatmul.mubr.f32.gmra.mxu0 %v1294
        %v1876 = vpop.f32.mrf.mxu0
        %v1877 = vadd.f32 0.0, %v1876
        %v1878 = vpop.f32.mrf.mxu0
        %v1879 = vadd.f32 0.0, %v1878
        %1880 = vdwg.mxu0
        %v1881 = vmax.f32 %v1806, %v1877
        %v1882 = vmax.f32 %v1808, %v1879
        %1883 = vmatprep.subr.mxu0 0.0
        %1884 = vmatpush1.msra.mxu0 %v1155
        %1885 = vmatprep.subr.mxu0 0.0
        %1886 = vmatpush1.msra.mxu0 %v1154
        %1887 = vmatprep.subr.mxu0 0.0
        %1888 = vmatpush1.msra.mxu0 %v1153
        %1889 = vmatprep.subr.mxu0 0.0
        %1890 = vmatpush1.msra.mxu0 %v1152
        %1891 = vmatprep.subr.mxu0 0.0
        %1892 = vmatpush1.msra.mxu0 %v1151
        %1893 = vmatprep.subr.mxu0 0.0
        %1894 = vmatpush1.msra.mxu0 %v1150
        %1895 = vmatprep.subr.mxu0 0.0
        %1896 = vmatpush1.msra.mxu0 %v1149
        %1897 = vmatprep.subr.mxu0 0.0
        %1898 = vmatpush1.msra.mxu0 %v1148
        %1899 = vmatprep.subr.mxu0 0.0
        %1900 = vmatpush1.msra.mxu0 %v1147
        %1901 = vmatprep.subr.mxu0 0.0
        %1902 = vmatpush1.msra.mxu0 %v1146
        %1903 = vmatprep.subr.mxu0 0.0
        %1904 = vmatpush1.msra.mxu0 %v1145
        %1905 = vmatprep.subr.mxu0 0.0
        %1906 = vmatpush1.msra.mxu0 %v1144
        %1907 = vmatprep.subr.mxu0 0.0
        %1908 = vmatpush1.msra.mxu0 %v1143
        %1909 = vmatprep.subr.mxu0 0.0
        %1910 = vmatpush1.msra.mxu0 %v1142
        %1911 = vmatprep.subr.mxu0 0.0
        %1912 = vmatpush1.msra.mxu0 %v1141
        %1913 = vmatprep.subr.mxu0 0.0
        %1914 = vmatpush1.msra.mxu0 %v1140
        %1915 = vmatprep.subr.mxu0 0.0
        %1916 = vmatpush2.msra.mxu0 %v1171
        %1917 = vmatprep.subr.mxu0 0.0
        %1918 = vmatpush2.msra.mxu0 %v1170
        %1919 = vmatprep.subr.mxu0 0.0
        %1920 = vmatpush2.msra.mxu0 %v1169
        %1921 = vmatprep.subr.mxu0 0.0
        %1922 = vmatpush2.msra.mxu0 %v1168
        %1923 = vmatprep.subr.mxu0 0.0
        %1924 = vmatpush2.msra.mxu0 %v1167
        %1925 = vmatprep.subr.mxu0 0.0
        %1926 = vmatpush2.msra.mxu0 %v1166
        %1927 = vmatprep.subr.mxu0 0.0
        %1928 = vmatpush2.msra.mxu0 %v1165
        %1929 = vmatprep.subr.mxu0 0.0
        %1930 = vmatpush2.msra.mxu0 %v1164
        %1931 = vmatprep.subr.mxu0 0.0
        %1932 = vmatpush2.msra.mxu0 %v1163
        %1933 = vmatprep.subr.mxu0 0.0
        %1934 = vmatpush2.msra.mxu0 %v1162
        %1935 = vmatprep.subr.mxu0 0.0
        %1936 = vmatpush2.msra.mxu0 %v1161
        %1937 = vmatprep.subr.mxu0 0.0
        %1938 = vmatpush2.msra.mxu0 %v1160
        %1939 = vmatprep.subr.mxu0 0.0
        %1940 = vmatpush2.msra.mxu0 %v1159
        %1941 = vmatprep.subr.mxu0 0.0
        %1942 = vmatpush2.msra.mxu0 %v1158
        %1943 = vmatprep.subr.mxu0 0.0
        %1944 = vmatpush2.msra.mxu0 %v1157
        %1945 = vmatprep.subr.mxu0 0.0
        %1946 = vmatpush2.msra.mxu0 %v1156
        %1947 = vmatprep.mubr.f32.mxu0 %v1882
        %1948 = vmatmul.mubr.f32.gmra.mxu0 %v1881
        %v1949 = vpop.f32.mrf.mxu0
        %v1950 = vadd.f32 0.0, %v1949
        %v1951 = vpop.f32.mrf.mxu0
        %1952 = vdwg.mxu0
        %s1953 = scalar_lea.vmem %s439, 16 [#allocation12]
        %1954 = vst.msk [vmem:[%s1953] sm:$0xff] %vm1439, %v1950
        %v1955 = vld [vmem:[%s548] sm:$0xff]
        %v1956 = vld [vmem:[%s548 + $0x8] sm:$0xff]
        %v1957 = vld [vmem:[%s548 + $0x10] sm:$0xff]
        %v1958 = vld [vmem:[%s548 + $0x18] sm:$0xff]
        %s1959 = scalar_lea.vmem %s432, 96 [#allocation11]
        %1960 = vst [vmem:[%s1959] sm:$0xff] %v1955
        %1961 = vst [vmem:[%s1959 + $0x8] sm:$0xff] %v1956
        %1962 = vst [vmem:[%s1959 + $0x10] sm:$0xff] %v1957
        %1963 = vst [vmem:[%s1959 + $0x18] sm:$0xff] %v1958
        %1964 = vrot.lane.b32.xlu0 %v1955, 127
        %v1965 = vpop.permute.xlu0 %1964
        %1966 = vrot.lane.b32.xlu0 %v1957, 127
        %v1967 = vpop.permute.xlu0 %1966
        %1968 = vrot.lane.b32.xlu0 %v1956, 127
        %v1969 = vpop.permute.xlu0 %1968
        %1970 = vrot.lane.b32.xlu0 %v1958, 127
        %v1971 = vpop.permute.xlu0 %1970
        %v1972 = vsel %vm1192, %v1965, %v1969
        %v1973 = vsel %vm1192, %v1967, %v1971
        %v1974 = vsel %vm1192, %v1969, %v1965
        %v1975 = vsel %vm1192, %v1971, %v1967
        %v1976 = vmax.f32 %v1955, %v1972
        %v1977 = vmax.f32 %v1956, %v1974
        %v1978 = vmax.f32 %v1957, %v1973
        %v1979 = vmax.f32 %v1958, %v1975
        %1980 = vrot.lane.b32.xlu0 %v1976, 112
        %v1981 = vpop.permute.xlu0 %1980
        %1982 = vrot.lane.b32.xlu0 %v1978, 112
        %v1983 = vpop.permute.xlu0 %1982
        %1984 = vrot.lane.b32.xlu0 %v1977, 112
        %v1985 = vpop.permute.xlu0 %1984
        %1986 = vrot.lane.b32.xlu0 %v1979, 112
        %v1987 = vpop.permute.xlu0 %1986
        %v1988 = vsel %vm1209, %v1981, %v1985
        %v1989 = vsel %vm1209, %v1983, %v1987
        %v1990 = vsel %vm1209, %v1985, %v1981
        %v1991 = vsel %vm1209, %v1987, %v1983
        %v1992 = vmax.f32 %v1976, %v1988
        %v1993 = vmax.f32 %v1977, %v1990
        %v1994 = vmax.f32 %v1978, %v1989
        %v1995 = vmax.f32 %v1979, %v1991
        %1996 = vmatprep.subr.mxu0 0.0
        %1997 = vmatpush1.msra.mxu0 0.0
        %1998 = vmatprep.subr.mxu0 0.0
        %1999 = vmatpush1.msra.mxu0 0.0
        %2000 = vmatprep.subr.mxu0 0.0
        %2001 = vmatpush1.msra.mxu0 0.0
        %2002 = vmatprep.subr.mxu0 0.0
        %2003 = vmatpush1.msra.mxu0 0.0
        %2004 = vmatprep.subr.mxu0 0.0
        %2005 = vmatpush1.msra.mxu0 0.0
        %2006 = vmatprep.subr.mxu0 0.0
        %2007 = vmatpush1.msra.mxu0 0.0
        %2008 = vmatprep.subr.mxu0 0.0
        %2009 = vmatpush1.msra.mxu0 0.0
        %2010 = vmatprep.subr.mxu0 0.0
        %2011 = vmatpush1.msra.mxu0 0.0
        %2012 = vmatprep.subr.mxu0 0.0
        %2013 = vmatpush1.msra.mxu0 0.0
        %2014 = vmatprep.subr.mxu0 0.0
        %2015 = vmatpush1.msra.mxu0 0.0
        %2016 = vmatprep.subr.mxu0 0.0
        %2017 = vmatpush1.msra.mxu0 0.0
        %2018 = vmatprep.subr.mxu0 0.0
        %2019 = vmatpush1.msra.mxu0 0.0
        %2020 = vmatprep.subr.mxu0 0.0
        %2021 = vmatpush1.msra.mxu0 0.0
        %2022 = vmatprep.subr.mxu0 0.0
        %2023 = vmatpush1.msra.mxu0 0.0
        %2024 = vmatprep.subr.mxu0 %v1995
        %2025 = vmatpush1.msra.mxu0 %v1994
        %2026 = vmatprep.subr.mxu0 %v1993
        %2027 = vmatpush1.msra.mxu0 %v1992
        %2028 = vmatprep.subr.mxu0 0.0
        %2029 = vmatpush2.msra.mxu0 0.0
        %2030 = vmatprep.subr.mxu0 0.0
        %2031 = vmatpush2.msra.mxu0 0.0
        %2032 = vmatprep.subr.mxu0 0.0
        %2033 = vmatpush2.msra.mxu0 0.0
        %2034 = vmatprep.subr.mxu0 0.0
        %2035 = vmatpush2.msra.mxu0 0.0
        %2036 = vmatprep.subr.mxu0 0.0
        %2037 = vmatpush2.msra.mxu0 0.0
        %2038 = vmatprep.subr.mxu0 0.0
        %2039 = vmatpush2.msra.mxu0 0.0
        %2040 = vmatprep.subr.mxu0 0.0
        %2041 = vmatpush2.msra.mxu0 0.0
        %2042 = vmatprep.subr.mxu0 0.0
        %2043 = vmatpush2.msra.mxu0 0.0
        %2044 = vmatprep.subr.mxu0 0.0
        %2045 = vmatpush2.msra.mxu0 0.0
        %2046 = vmatprep.subr.mxu0 0.0
        %2047 = vmatpush2.msra.mxu0 0.0
        %2048 = vmatprep.subr.mxu0 0.0
        %2049 = vmatpush2.msra.mxu0 0.0
        %2050 = vmatprep.subr.mxu0 0.0
        %2051 = vmatpush2.msra.mxu0 0.0
        %2052 = vmatprep.subr.mxu0 0.0
        %2053 = vmatpush2.msra.mxu0 0.0
        %2054 = vmatprep.subr.mxu0 0.0
        %2055 = vmatpush2.msra.mxu0 0.0
        %2056 = vmatprep.subr.mxu0 0.0
        %2057 = vmatpush2.msra.mxu0 0.0
        %2058 = vmatprep.subr.mxu0 0.0
        %2059 = vmatpush2.msra.mxu0 0.0
        %2060 = vmatprep.mubr.f32.mxu0 0.0
        %2061 = vmatmul.mubr.f32.gmra.mxu0 %v1220
        %v2062 = vpop.f32.mrf.mxu0
        %v2063 = vadd.f32 0.0, %v2062
        %v2064 = vpop.f32.mrf.mxu0
        %v2065 = vadd.f32 0.0, %v2064
        %2066 = vdwg.mxu0
        %2067 = vmatprep.subr.mxu0 0.0
        %2068 = vmatpush1.msra.mxu0 0.0
        %2069 = vmatprep.subr.mxu0 0.0
        %2070 = vmatpush1.msra.mxu0 0.0
        %2071 = vmatprep.subr.mxu0 0.0
        %2072 = vmatpush1.msra.mxu0 0.0
        %2073 = vmatprep.subr.mxu0 0.0
        %2074 = vmatpush1.msra.mxu0 0.0
        %2075 = vmatprep.subr.mxu0 0.0
        %2076 = vmatpush1.msra.mxu0 0.0
        %2077 = vmatprep.subr.mxu0 0.0
        %2078 = vmatpush1.msra.mxu0 0.0
        %2079 = vmatprep.subr.mxu0 0.0
        %2080 = vmatpush1.msra.mxu0 0.0
        %2081 = vmatprep.subr.mxu0 0.0
        %2082 = vmatpush1.msra.mxu0 0.0
        %2083 = vmatprep.subr.mxu0 0.0
        %2084 = vmatpush1.msra.mxu0 0.0
        %2085 = vmatprep.subr.mxu0 0.0
        %2086 = vmatpush1.msra.mxu0 0.0
        %2087 = vmatprep.subr.mxu0 0.0
        %2088 = vmatpush1.msra.mxu0 0.0
        %2089 = vmatprep.subr.mxu0 0.0
        %2090 = vmatpush1.msra.mxu0 0.0
        %2091 = vmatprep.subr.mxu0 0.0
        %2092 = vmatpush1.msra.mxu0 0.0
        %2093 = vmatprep.subr.mxu0 0.0
        %2094 = vmatpush1.msra.mxu0 0.0
        %2095 = vmatprep.subr.mxu0 %v1995
        %2096 = vmatpush1.msra.mxu0 %v1994
        %2097 = vmatprep.subr.mxu0 %v1993
        %2098 = vmatpush1.msra.mxu0 %v1992
        %2099 = vmatprep.subr.mxu0 0.0
        %2100 = vmatpush2.msra.mxu0 0.0
        %2101 = vmatprep.subr.mxu0 0.0
        %2102 = vmatpush2.msra.mxu0 0.0
        %2103 = vmatprep.subr.mxu0 0.0
        %2104 = vmatpush2.msra.mxu0 0.0
        %2105 = vmatprep.subr.mxu0 0.0
        %2106 = vmatpush2.msra.mxu0 0.0
        %2107 = vmatprep.subr.mxu0 0.0
        %2108 = vmatpush2.msra.mxu0 0.0
        %2109 = vmatprep.subr.mxu0 0.0
        %2110 = vmatpush2.msra.mxu0 0.0
        %2111 = vmatprep.subr.mxu0 0.0
        %2112 = vmatpush2.msra.mxu0 0.0
        %2113 = vmatprep.subr.mxu0 0.0
        %2114 = vmatpush2.msra.mxu0 0.0
        %2115 = vmatprep.subr.mxu0 0.0
        %2116 = vmatpush2.msra.mxu0 0.0
        %2117 = vmatprep.subr.mxu0 0.0
        %2118 = vmatpush2.msra.mxu0 0.0
        %2119 = vmatprep.subr.mxu0 0.0
        %2120 = vmatpush2.msra.mxu0 0.0
        %2121 = vmatprep.subr.mxu0 0.0
        %2122 = vmatpush2.msra.mxu0 0.0
        %2123 = vmatprep.subr.mxu0 0.0
        %2124 = vmatpush2.msra.mxu0 0.0
        %2125 = vmatprep.subr.mxu0 0.0
        %2126 = vmatpush2.msra.mxu0 0.0
        %2127 = vmatprep.subr.mxu0 0.0
        %2128 = vmatpush2.msra.mxu0 0.0
        %2129 = vmatprep.subr.mxu0 0.0
        %2130 = vmatpush2.msra.mxu0 0.0
        %2131 = vmatprep.mubr.f32.mxu0 0.0
        %2132 = vmatmul.mubr.f32.gmra.mxu0 %v1294
        %v2133 = vpop.f32.mrf.mxu0
        %v2134 = vadd.f32 0.0, %v2133
        %v2135 = vpop.f32.mrf.mxu0
        %v2136 = vadd.f32 0.0, %v2135
        %2137 = vdwg.mxu0
        %v2138 = vmax.f32 %v2063, %v2134
        %v2139 = vmax.f32 %v2065, %v2136
        %2140 = vmatprep.subr.mxu0 0.0
        %2141 = vmatpush1.msra.mxu0 %v1155
        %2142 = vmatprep.subr.mxu0 0.0
        %2143 = vmatpush1.msra.mxu0 %v1154
        %2144 = vmatprep.subr.mxu0 0.0
        %2145 = vmatpush1.msra.mxu0 %v1153
        %2146 = vmatprep.subr.mxu0 0.0
        %2147 = vmatpush1.msra.mxu0 %v1152
        %2148 = vmatprep.subr.mxu0 0.0
        %2149 = vmatpush1.msra.mxu0 %v1151
        %2150 = vmatprep.subr.mxu0 0.0
        %2151 = vmatpush1.msra.mxu0 %v1150
        %2152 = vmatprep.subr.mxu0 0.0
        %2153 = vmatpush1.msra.mxu0 %v1149
        %2154 = vmatprep.subr.mxu0 0.0
        %2155 = vmatpush1.msra.mxu0 %v1148
        %2156 = vmatprep.subr.mxu0 0.0
        %2157 = vmatpush1.msra.mxu0 %v1147
        %2158 = vmatprep.subr.mxu0 0.0
        %2159 = vmatpush1.msra.mxu0 %v1146
        %2160 = vmatprep.subr.mxu0 0.0
        %2161 = vmatpush1.msra.mxu0 %v1145
        %2162 = vmatprep.subr.mxu0 0.0
        %2163 = vmatpush1.msra.mxu0 %v1144
        %2164 = vmatprep.subr.mxu0 0.0
        %2165 = vmatpush1.msra.mxu0 %v1143
        %2166 = vmatprep.subr.mxu0 0.0
        %2167 = vmatpush1.msra.mxu0 %v1142
        %2168 = vmatprep.subr.mxu0 0.0
        %2169 = vmatpush1.msra.mxu0 %v1141
        %2170 = vmatprep.subr.mxu0 0.0
        %2171 = vmatpush1.msra.mxu0 %v1140
        %2172 = vmatprep.subr.mxu0 0.0
        %2173 = vmatpush2.msra.mxu0 %v1171
        %2174 = vmatprep.subr.mxu0 0.0
        %2175 = vmatpush2.msra.mxu0 %v1170
        %2176 = vmatprep.subr.mxu0 0.0
        %2177 = vmatpush2.msra.mxu0 %v1169
        %2178 = vmatprep.subr.mxu0 0.0
        %2179 = vmatpush2.msra.mxu0 %v1168
        %2180 = vmatprep.subr.mxu0 0.0
        %2181 = vmatpush2.msra.mxu0 %v1167
        %2182 = vmatprep.subr.mxu0 0.0
        %2183 = vmatpush2.msra.mxu0 %v1166
        %2184 = vmatprep.subr.mxu0 0.0
        %2185 = vmatpush2.msra.mxu0 %v1165
        %2186 = vmatprep.subr.mxu0 0.0
        %2187 = vmatpush2.msra.mxu0 %v1164
        %2188 = vmatprep.subr.mxu0 0.0
        %2189 = vmatpush2.msra.mxu0 %v1163
        %2190 = vmatprep.subr.mxu0 0.0
        %2191 = vmatpush2.msra.mxu0 %v1162
        %2192 = vmatprep.subr.mxu0 0.0
        %2193 = vmatpush2.msra.mxu0 %v1161
        %2194 = vmatprep.subr.mxu0 0.0
        %2195 = vmatpush2.msra.mxu0 %v1160
        %2196 = vmatprep.subr.mxu0 0.0
        %2197 = vmatpush2.msra.mxu0 %v1159
        %2198 = vmatprep.subr.mxu0 0.0
        %2199 = vmatpush2.msra.mxu0 %v1158
        %2200 = vmatprep.subr.mxu0 0.0
        %2201 = vmatpush2.msra.mxu0 %v1157
        %2202 = vmatprep.subr.mxu0 0.0
        %2203 = vmatpush2.msra.mxu0 %v1156
        %2204 = vmatprep.mubr.f32.mxu0 %v2139
        %2205 = vmatmul.mubr.f32.gmra.mxu0 %v2138
        %v2206 = vpop.f32.mrf.mxu0
        %v2207 = vadd.f32 0.0, %v2206
        %v2208 = vpop.f32.mrf.mxu0
        %2209 = vdwg.mxu0
        %s2210 = scalar_lea.vmem %s439, 24 [#allocation12]
        %2211 = vst.msk [vmem:[%s2210] sm:$0xff] %vm1439, %v2207
        %v2212 = vld [vmem:[%s565] sm:$0xff]
        %v2213 = vld [vmem:[%s565 + $0x8] sm:$0xff]
        %v2214 = vld [vmem:[%s565 + $0x10] sm:$0xff]
        %v2215 = vld [vmem:[%s565 + $0x18] sm:$0xff]
        %s2216 = scalar_lea.vmem %s432, 128 [#allocation11]
        %2217 = vst [vmem:[%s2216] sm:$0xff] %v2212
        %2218 = vst [vmem:[%s2216 + $0x8] sm:$0xff] %v2213
        %2219 = vst [vmem:[%s2216 + $0x10] sm:$0xff] %v2214
        %2220 = vst [vmem:[%s2216 + $0x18] sm:$0xff] %v2215
        %2221 = vrot.lane.b32.xlu0 %v2212, 127
        %v2222 = vpop.permute.xlu0 %2221
        %2223 = vrot.lane.b32.xlu0 %v2214, 127
        %v2224 = vpop.permute.xlu0 %2223
        %2225 = vrot.lane.b32.xlu0 %v2213, 127
        %v2226 = vpop.permute.xlu0 %2225
        %2227 = vrot.lane.b32.xlu0 %v2215, 127
        %v2228 = vpop.permute.xlu0 %2227
        %v2229 = vsel %vm1192, %v2222, %v2226
        %v2230 = vsel %vm1192, %v2224, %v2228
        %v2231 = vsel %vm1192, %v2226, %v2222
        %v2232 = vsel %vm1192, %v2228, %v2224
        %v2233 = vmax.f32 %v2212, %v2229
        %v2234 = vmax.f32 %v2213, %v2231
        %v2235 = vmax.f32 %v2214, %v2230
        %v2236 = vmax.f32 %v2215, %v2232
        %2237 = vrot.lane.b32.xlu0 %v2233, 112
        %v2238 = vpop.permute.xlu0 %2237
        %2239 = vrot.lane.b32.xlu0 %v2235, 112
        %v2240 = vpop.permute.xlu0 %2239
        %2241 = vrot.lane.b32.xlu0 %v2234, 112
        %v2242 = vpop.permute.xlu0 %2241
        %2243 = vrot.lane.b32.xlu0 %v2236, 112
        %v2244 = vpop.permute.xlu0 %2243
        %v2245 = vsel %vm1209, %v2238, %v2242
        %v2246 = vsel %vm1209, %v2240, %v2244
        %v2247 = vsel %vm1209, %v2242, %v2238
        %v2248 = vsel %vm1209, %v2244, %v2240
        %v2249 = vmax.f32 %v2233, %v2245
        %v2250 = vmax.f32 %v2234, %v2247
        %v2251 = vmax.f32 %v2235, %v2246
        %v2252 = vmax.f32 %v2236, %v2248
        %2253 = vmatprep.subr.mxu0 0.0
        %2254 = vmatpush1.msra.mxu0 0.0
        %2255 = vmatprep.subr.mxu0 0.0
        %2256 = vmatpush1.msra.mxu0 0.0
        %2257 = vmatprep.subr.mxu0 0.0
        %2258 = vmatpush1.msra.mxu0 0.0
        %2259 = vmatprep.subr.mxu0 0.0
        %2260 = vmatpush1.msra.mxu0 0.0
        %2261 = vmatprep.subr.mxu0 0.0
        %2262 = vmatpush1.msra.mxu0 0.0
        %2263 = vmatprep.subr.mxu0 0.0
        %2264 = vmatpush1.msra.mxu0 0.0
        %2265 = vmatprep.subr.mxu0 0.0
        %2266 = vmatpush1.msra.mxu0 0.0
        %2267 = vmatprep.subr.mxu0 0.0
        %2268 = vmatpush1.msra.mxu0 0.0
        %2269 = vmatprep.subr.mxu0 0.0
        %2270 = vmatpush1.msra.mxu0 0.0
        %2271 = vmatprep.subr.mxu0 0.0
        %2272 = vmatpush1.msra.mxu0 0.0
        %2273 = vmatprep.subr.mxu0 0.0
        %2274 = vmatpush1.msra.mxu0 0.0
        %2275 = vmatprep.subr.mxu0 0.0
        %2276 = vmatpush1.msra.mxu0 0.0
        %2277 = vmatprep.subr.mxu0 0.0
        %2278 = vmatpush1.msra.mxu0 0.0
        %2279 = vmatprep.subr.mxu0 0.0
        %2280 = vmatpush1.msra.mxu0 0.0
        %2281 = vmatprep.subr.mxu0 %v2252
        %2282 = vmatpush1.msra.mxu0 %v2251
        %2283 = vmatprep.subr.mxu0 %v2250
        %2284 = vmatpush1.msra.mxu0 %v2249
        %2285 = vmatprep.subr.mxu0 0.0
        %2286 = vmatpush2.msra.mxu0 0.0
        %2287 = vmatprep.subr.mxu0 0.0
        %2288 = vmatpush2.msra.mxu0 0.0
        %2289 = vmatprep.subr.mxu0 0.0
        %2290 = vmatpush2.msra.mxu0 0.0
        %2291 = vmatprep.subr.mxu0 0.0
        %2292 = vmatpush2.msra.mxu0 0.0
        %2293 = vmatprep.subr.mxu0 0.0
        %2294 = vmatpush2.msra.mxu0 0.0
        %2295 = vmatprep.subr.mxu0 0.0
        %2296 = vmatpush2.msra.mxu0 0.0
        %2297 = vmatprep.subr.mxu0 0.0
        %2298 = vmatpush2.msra.mxu0 0.0
        %2299 = vmatprep.subr.mxu0 0.0
        %2300 = vmatpush2.msra.mxu0 0.0
        %2301 = vmatprep.subr.mxu0 0.0
        %2302 = vmatpush2.msra.mxu0 0.0
        %2303 = vmatprep.subr.mxu0 0.0
        %2304 = vmatpush2.msra.mxu0 0.0
        %2305 = vmatprep.subr.mxu0 0.0
        %2306 = vmatpush2.msra.mxu0 0.0
        %2307 = vmatprep.subr.mxu0 0.0
        %2308 = vmatpush2.msra.mxu0 0.0
        %2309 = vmatprep.subr.mxu0 0.0
        %2310 = vmatpush2.msra.mxu0 0.0
        %2311 = vmatprep.subr.mxu0 0.0
        %2312 = vmatpush2.msra.mxu0 0.0
        %2313 = vmatprep.subr.mxu0 0.0
        %2314 = vmatpush2.msra.mxu0 0.0
        %2315 = vmatprep.subr.mxu0 0.0
        %2316 = vmatpush2.msra.mxu0 0.0
        %2317 = vmatprep.mubr.f32.mxu0 0.0
        %2318 = vmatmul.mubr.f32.gmra.mxu0 %v1220
        %v2319 = vpop.f32.mrf.mxu0
        %v2320 = vadd.f32 0.0, %v2319
        %v2321 = vpop.f32.mrf.mxu0
        %v2322 = vadd.f32 0.0, %v2321
        %2323 = vdwg.mxu0
        %2324 = vmatprep.subr.mxu0 0.0
        %2325 = vmatpush1.msra.mxu0 0.0
        %2326 = vmatprep.subr.mxu0 0.0
        %2327 = vmatpush1.msra.mxu0 0.0
        %2328 = vmatprep.subr.mxu0 0.0
        %2329 = vmatpush1.msra.mxu0 0.0
        %2330 = vmatprep.subr.mxu0 0.0
        %2331 = vmatpush1.msra.mxu0 0.0
        %2332 = vmatprep.subr.mxu0 0.0
        %2333 = vmatpush1.msra.mxu0 0.0
        %2334 = vmatprep.subr.mxu0 0.0
        %2335 = vmatpush1.msra.mxu0 0.0
        %2336 = vmatprep.subr.mxu0 0.0
        %2337 = vmatpush1.msra.mxu0 0.0
        %2338 = vmatprep.subr.mxu0 0.0
        %2339 = vmatpush1.msra.mxu0 0.0
        %2340 = vmatprep.subr.mxu0 0.0
        %2341 = vmatpush1.msra.mxu0 0.0
        %2342 = vmatprep.subr.mxu0 0.0
        %2343 = vmatpush1.msra.mxu0 0.0
        %2344 = vmatprep.subr.mxu0 0.0
        %2345 = vmatpush1.msra.mxu0 0.0
        %2346 = vmatprep.subr.mxu0 0.0
        %2347 = vmatpush1.msra.mxu0 0.0
        %2348 = vmatprep.subr.mxu0 0.0
        %2349 = vmatpush1.msra.mxu0 0.0
        %2350 = vmatprep.subr.mxu0 0.0
        %2351 = vmatpush1.msra.mxu0 0.0
        %2352 = vmatprep.subr.mxu0 %v2252
        %2353 = vmatpush1.msra.mxu0 %v2251
        %2354 = vmatprep.subr.mxu0 %v2250
        %2355 = vmatpush1.msra.mxu0 %v2249
        %2356 = vmatprep.subr.mxu0 0.0
        %2357 = vmatpush2.msra.mxu0 0.0
        %2358 = vmatprep.subr.mxu0 0.0
        %2359 = vmatpush2.msra.mxu0 0.0
        %2360 = vmatprep.subr.mxu0 0.0
        %2361 = vmatpush2.msra.mxu0 0.0
        %2362 = vmatprep.subr.mxu0 0.0
        %2363 = vmatpush2.msra.mxu0 0.0
        %2364 = vmatprep.subr.mxu0 0.0
        %2365 = vmatpush2.msra.mxu0 0.0
        %2366 = vmatprep.subr.mxu0 0.0
        %2367 = vmatpush2.msra.mxu0 0.0
        %2368 = vmatprep.subr.mxu0 0.0
        %2369 = vmatpush2.msra.mxu0 0.0
        %2370 = vmatprep.subr.mxu0 0.0
        %2371 = vmatpush2.msra.mxu0 0.0
        %2372 = vmatprep.subr.mxu0 0.0
        %2373 = vmatpush2.msra.mxu0 0.0
        %2374 = vmatprep.subr.mxu0 0.0
        %2375 = vmatpush2.msra.mxu0 0.0
        %2376 = vmatprep.subr.mxu0 0.0
        %2377 = vmatpush2.msra.mxu0 0.0
        %2378 = vmatprep.subr.mxu0 0.0
        %2379 = vmatpush2.msra.mxu0 0.0
        %2380 = vmatprep.subr.mxu0 0.0
        %2381 = vmatpush2.msra.mxu0 0.0
        %2382 = vmatprep.subr.mxu0 0.0
        %2383 = vmatpush2.msra.mxu0 0.0
        %2384 = vmatprep.subr.mxu0 0.0
        %2385 = vmatpush2.msra.mxu0 0.0
        %2386 = vmatprep.subr.mxu0 0.0
        %2387 = vmatpush2.msra.mxu0 0.0
        %2388 = vmatprep.mubr.f32.mxu0 0.0
        %2389 = vmatmul.mubr.f32.gmra.mxu0 %v1294
        %v2390 = vpop.f32.mrf.mxu0
        %v2391 = vadd.f32 0.0, %v2390
        %v2392 = vpop.f32.mrf.mxu0
        %v2393 = vadd.f32 0.0, %v2392
        %2394 = vdwg.mxu0
        %v2395 = vmax.f32 %v2320, %v2391
        %v2396 = vmax.f32 %v2322, %v2393
        %2397 = vmatprep.subr.mxu0 0.0
        %2398 = vmatpush1.msra.mxu0 %v1155
        %2399 = vmatprep.subr.mxu0 0.0
        %2400 = vmatpush1.msra.mxu0 %v1154
        %2401 = vmatprep.subr.mxu0 0.0
        %2402 = vmatpush1.msra.mxu0 %v1153
        %2403 = vmatprep.subr.mxu0 0.0
        %2404 = vmatpush1.msra.mxu0 %v1152
        %2405 = vmatprep.subr.mxu0 0.0
        %2406 = vmatpush1.msra.mxu0 %v1151
        %2407 = vmatprep.subr.mxu0 0.0
        %2408 = vmatpush1.msra.mxu0 %v1150
        %2409 = vmatprep.subr.mxu0 0.0
        %2410 = vmatpush1.msra.mxu0 %v1149
        %2411 = vmatprep.subr.mxu0 0.0
        %2412 = vmatpush1.msra.mxu0 %v1148
        %2413 = vmatprep.subr.mxu0 0.0
        %2414 = vmatpush1.msra.mxu0 %v1147
        %2415 = vmatprep.subr.mxu0 0.0
        %2416 = vmatpush1.msra.mxu0 %v1146
        %2417 = vmatprep.subr.mxu0 0.0
        %2418 = vmatpush1.msra.mxu0 %v1145
        %2419 = vmatprep.subr.mxu0 0.0
        %2420 = vmatpush1.msra.mxu0 %v1144
        %2421 = vmatprep.subr.mxu0 0.0
        %2422 = vmatpush1.msra.mxu0 %v1143
        %2423 = vmatprep.subr.mxu0 0.0
        %2424 = vmatpush1.msra.mxu0 %v1142
        %2425 = vmatprep.subr.mxu0 0.0
        %2426 = vmatpush1.msra.mxu0 %v1141
        %2427 = vmatprep.subr.mxu0 0.0
        %2428 = vmatpush1.msra.mxu0 %v1140
        %2429 = vmatprep.subr.mxu0 0.0
        %2430 = vmatpush2.msra.mxu0 %v1171
        %2431 = vmatprep.subr.mxu0 0.0
        %2432 = vmatpush2.msra.mxu0 %v1170
        %2433 = vmatprep.subr.mxu0 0.0
        %2434 = vmatpush2.msra.mxu0 %v1169
        %2435 = vmatprep.subr.mxu0 0.0
        %2436 = vmatpush2.msra.mxu0 %v1168
        %2437 = vmatprep.subr.mxu0 0.0
        %2438 = vmatpush2.msra.mxu0 %v1167
        %2439 = vmatprep.subr.mxu0 0.0
        %2440 = vmatpush2.msra.mxu0 %v1166
        %2441 = vmatprep.subr.mxu0 0.0
        %2442 = vmatpush2.msra.mxu0 %v1165
        %2443 = vmatprep.subr.mxu0 0.0
        %2444 = vmatpush2.msra.mxu0 %v1164
        %2445 = vmatprep.subr.mxu0 0.0
        %2446 = vmatpush2.msra.mxu0 %v1163
        %2447 = vmatprep.subr.mxu0 0.0
        %2448 = vmatpush2.msra.mxu0 %v1162
        %2449 = vmatprep.subr.mxu0 0.0
        %2450 = vmatpush2.msra.mxu0 %v1161
        %2451 = vmatprep.subr.mxu0 0.0
        %2452 = vmatpush2.msra.mxu0 %v1160
        %2453 = vmatprep.subr.mxu0 0.0
        %2454 = vmatpush2.msra.mxu0 %v1159
        %2455 = vmatprep.subr.mxu0 0.0
        %2456 = vmatpush2.msra.mxu0 %v1158
        %2457 = vmatprep.subr.mxu0 0.0
        %2458 = vmatpush2.msra.mxu0 %v1157
        %2459 = vmatprep.subr.mxu0 0.0
        %2460 = vmatpush2.msra.mxu0 %v1156
        %2461 = vmatprep.mubr.f32.mxu0 %v2396
        %2462 = vmatmul.mubr.f32.gmra.mxu0 %v2395
        %v2463 = vpop.f32.mrf.mxu0
        %v2464 = vadd.f32 0.0, %v2463
        %v2465 = vpop.f32.mrf.mxu0
        %2466 = vdwg.mxu0
        %s2467 = scalar_lea.vmem %s439, 32 [#allocation12]
        %2468 = vst.msk [vmem:[%s2467] sm:$0xff] %vm1439, %v2464
        %v2469 = vld [vmem:[%s582] sm:$0xff]
        %v2470 = vld [vmem:[%s582 + $0x8] sm:$0xff]
        %v2471 = vld [vmem:[%s582 + $0x10] sm:$0xff]
        %v2472 = vld [vmem:[%s582 + $0x18] sm:$0xff]
        %s2473 = scalar_lea.vmem %s432, 160 [#allocation11]
        %2474 = vst [vmem:[%s2473] sm:$0xff] %v2469
        %2475 = vst [vmem:[%s2473 + $0x8] sm:$0xff] %v2470
        %2476 = vst [vmem:[%s2473 + $0x10] sm:$0xff] %v2471
        %2477 = vst [vmem:[%s2473 + $0x18] sm:$0xff] %v2472
        %2478 = vrot.lane.b32.xlu0 %v2469, 127
        %v2479 = vpop.permute.xlu0 %2478
        %2480 = vrot.lane.b32.xlu0 %v2471, 127
        %v2481 = vpop.permute.xlu0 %2480
        %2482 = vrot.lane.b32.xlu0 %v2470, 127
        %v2483 = vpop.permute.xlu0 %2482
        %2484 = vrot.lane.b32.xlu0 %v2472, 127
        %v2485 = vpop.permute.xlu0 %2484
        %v2486 = vsel %vm1192, %v2479, %v2483
        %v2487 = vsel %vm1192, %v2481, %v2485
        %v2488 = vsel %vm1192, %v2483, %v2479
        %v2489 = vsel %vm1192, %v2485, %v2481
        %v2490 = vmax.f32 %v2469, %v2486
        %v2491 = vmax.f32 %v2470, %v2488
        %v2492 = vmax.f32 %v2471, %v2487
        %v2493 = vmax.f32 %v2472, %v2489
        %2494 = vrot.lane.b32.xlu0 %v2490, 112
        %v2495 = vpop.permute.xlu0 %2494
        %2496 = vrot.lane.b32.xlu0 %v2492, 112
        %v2497 = vpop.permute.xlu0 %2496
        %2498 = vrot.lane.b32.xlu0 %v2491, 112
        %v2499 = vpop.permute.xlu0 %2498
        %2500 = vrot.lane.b32.xlu0 %v2493, 112
        %v2501 = vpop.permute.xlu0 %2500
        %v2502 = vsel %vm1209, %v2495, %v2499
        %v2503 = vsel %vm1209, %v2497, %v2501
        %v2504 = vsel %vm1209, %v2499, %v2495
        %v2505 = vsel %vm1209, %v2501, %v2497
        %v2506 = vmax.f32 %v2490, %v2502
        %v2507 = vmax.f32 %v2491, %v2504
        %v2508 = vmax.f32 %v2492, %v2503
        %v2509 = vmax.f32 %v2493, %v2505
        %2510 = vmatprep.subr.mxu0 0.0
        %2511 = vmatpush1.msra.mxu0 0.0
        %2512 = vmatprep.subr.mxu0 0.0
        %2513 = vmatpush1.msra.mxu0 0.0
        %2514 = vmatprep.subr.mxu0 0.0
        %2515 = vmatpush1.msra.mxu0 0.0
        %2516 = vmatprep.subr.mxu0 0.0
        %2517 = vmatpush1.msra.mxu0 0.0
        %2518 = vmatprep.subr.mxu0 0.0
        %2519 = vmatpush1.msra.mxu0 0.0
        %2520 = vmatprep.subr.mxu0 0.0
        %2521 = vmatpush1.msra.mxu0 0.0
        %2522 = vmatprep.subr.mxu0 0.0
        %2523 = vmatpush1.msra.mxu0 0.0
        %2524 = vmatprep.subr.mxu0 0.0
        %2525 = vmatpush1.msra.mxu0 0.0
        %2526 = vmatprep.subr.mxu0 0.0
        %2527 = vmatpush1.msra.mxu0 0.0
        %2528 = vmatprep.subr.mxu0 0.0
        %2529 = vmatpush1.msra.mxu0 0.0
        %2530 = vmatprep.subr.mxu0 0.0
        %2531 = vmatpush1.msra.mxu0 0.0
        %2532 = vmatprep.subr.mxu0 0.0
        %2533 = vmatpush1.msra.mxu0 0.0
        %2534 = vmatprep.subr.mxu0 0.0
        %2535 = vmatpush1.msra.mxu0 0.0
        %2536 = vmatprep.subr.mxu0 0.0
        %2537 = vmatpush1.msra.mxu0 0.0
        %2538 = vmatprep.subr.mxu0 %v2509
        %2539 = vmatpush1.msra.mxu0 %v2508
        %2540 = vmatprep.subr.mxu0 %v2507
        %2541 = vmatpush1.msra.mxu0 %v2506
        %2542 = vmatprep.subr.mxu0 0.0
        %2543 = vmatpush2.msra.mxu0 0.0
        %2544 = vmatprep.subr.mxu0 0.0
        %2545 = vmatpush2.msra.mxu0 0.0
        %2546 = vmatprep.subr.mxu0 0.0
        %2547 = vmatpush2.msra.mxu0 0.0
        %2548 = vmatprep.subr.mxu0 0.0
        %2549 = vmatpush2.msra.mxu0 0.0
        %2550 = vmatprep.subr.mxu0 0.0
        %2551 = vmatpush2.msra.mxu0 0.0
        %2552 = vmatprep.subr.mxu0 0.0
        %2553 = vmatpush2.msra.mxu0 0.0
        %2554 = vmatprep.subr.mxu0 0.0
        %2555 = vmatpush2.msra.mxu0 0.0
        %2556 = vmatprep.subr.mxu0 0.0
        %2557 = vmatpush2.msra.mxu0 0.0
        %2558 = vmatprep.subr.mxu0 0.0
        %2559 = vmatpush2.msra.mxu0 0.0
        %2560 = vmatprep.subr.mxu0 0.0
        %2561 = vmatpush2.msra.mxu0 0.0
        %2562 = vmatprep.subr.mxu0 0.0
        %2563 = vmatpush2.msra.mxu0 0.0
        %2564 = vmatprep.subr.mxu0 0.0
        %2565 = vmatpush2.msra.mxu0 0.0
        %2566 = vmatprep.subr.mxu0 0.0
        %2567 = vmatpush2.msra.mxu0 0.0
        %2568 = vmatprep.subr.mxu0 0.0
        %2569 = vmatpush2.msra.mxu0 0.0
        %2570 = vmatprep.subr.mxu0 0.0
        %2571 = vmatpush2.msra.mxu0 0.0
        %2572 = vmatprep.subr.mxu0 0.0
        %2573 = vmatpush2.msra.mxu0 0.0
        %2574 = vmatprep.mubr.f32.mxu0 0.0
        %2575 = vmatmul.mubr.f32.gmra.mxu0 %v1220
        %v2576 = vpop.f32.mrf.mxu0
        %v2577 = vadd.f32 0.0, %v2576
        %v2578 = vpop.f32.mrf.mxu0
        %v2579 = vadd.f32 0.0, %v2578
        %2580 = vdwg.mxu0
        %2581 = vmatprep.subr.mxu0 0.0
        %2582 = vmatpush1.msra.mxu0 0.0
        %2583 = vmatprep.subr.mxu0 0.0
        %2584 = vmatpush1.msra.mxu0 0.0
        %2585 = vmatprep.subr.mxu0 0.0
        %2586 = vmatpush1.msra.mxu0 0.0
        %2587 = vmatprep.subr.mxu0 0.0
        %2588 = vmatpush1.msra.mxu0 0.0
        %2589 = vmatprep.subr.mxu0 0.0
        %2590 = vmatpush1.msra.mxu0 0.0
        %2591 = vmatprep.subr.mxu0 0.0
        %2592 = vmatpush1.msra.mxu0 0.0
        %2593 = vmatprep.subr.mxu0 0.0
        %2594 = vmatpush1.msra.mxu0 0.0
        %2595 = vmatprep.subr.mxu0 0.0
        %2596 = vmatpush1.msra.mxu0 0.0
        %2597 = vmatprep.subr.mxu0 0.0
        %2598 = vmatpush1.msra.mxu0 0.0
        %2599 = vmatprep.subr.mxu0 0.0
        %2600 = vmatpush1.msra.mxu0 0.0
        %2601 = vmatprep.subr.mxu0 0.0
        %2602 = vmatpush1.msra.mxu0 0.0
        %2603 = vmatprep.subr.mxu0 0.0
        %2604 = vmatpush1.msra.mxu0 0.0
        %2605 = vmatprep.subr.mxu0 0.0
        %2606 = vmatpush1.msra.mxu0 0.0
        %2607 = vmatprep.subr.mxu0 0.0
        %2608 = vmatpush1.msra.mxu0 0.0
        %2609 = vmatprep.subr.mxu0 %v2509
        %2610 = vmatpush1.msra.mxu0 %v2508
        %2611 = vmatprep.subr.mxu0 %v2507
        %2612 = vmatpush1.msra.mxu0 %v2506
        %2613 = vmatprep.subr.mxu0 0.0
        %2614 = vmatpush2.msra.mxu0 0.0
        %2615 = vmatprep.subr.mxu0 0.0
        %2616 = vmatpush2.msra.mxu0 0.0
        %2617 = vmatprep.subr.mxu0 0.0
        %2618 = vmatpush2.msra.mxu0 0.0
        %2619 = vmatprep.subr.mxu0 0.0
        %2620 = vmatpush2.msra.mxu0 0.0
        %2621 = vmatprep.subr.mxu0 0.0
        %2622 = vmatpush2.msra.mxu0 0.0
        %2623 = vmatprep.subr.mxu0 0.0
        %2624 = vmatpush2.msra.mxu0 0.0
        %2625 = vmatprep.subr.mxu0 0.0
        %2626 = vmatpush2.msra.mxu0 0.0
        %2627 = vmatprep.subr.mxu0 0.0
        %2628 = vmatpush2.msra.mxu0 0.0
        %2629 = vmatprep.subr.mxu0 0.0
        %2630 = vmatpush2.msra.mxu0 0.0
        %2631 = vmatprep.subr.mxu0 0.0
        %2632 = vmatpush2.msra.mxu0 0.0
        %2633 = vmatprep.subr.mxu0 0.0
        %2634 = vmatpush2.msra.mxu0 0.0
        %2635 = vmatprep.subr.mxu0 0.0
        %2636 = vmatpush2.msra.mxu0 0.0
        %2637 = vmatprep.subr.mxu0 0.0
        %2638 = vmatpush2.msra.mxu0 0.0
        %2639 = vmatprep.subr.mxu0 0.0
        %2640 = vmatpush2.msra.mxu0 0.0
        %2641 = vmatprep.subr.mxu0 0.0
        %2642 = vmatpush2.msra.mxu0 0.0
        %2643 = vmatprep.subr.mxu0 0.0
        %2644 = vmatpush2.msra.mxu0 0.0
        %2645 = vmatprep.mubr.f32.mxu0 0.0
        %2646 = vmatmul.mubr.f32.gmra.mxu0 %v1294
        %v2647 = vpop.f32.mrf.mxu0
        %v2648 = vadd.f32 0.0, %v2647
        %v2649 = vpop.f32.mrf.mxu0
        %v2650 = vadd.f32 0.0, %v2649
        %2651 = vdwg.mxu0
        %v2652 = vmax.f32 %v2577, %v2648
        %v2653 = vmax.f32 %v2579, %v2650
        %2654 = vmatprep.subr.mxu0 0.0
        %2655 = vmatpush1.msra.mxu0 %v1155
        %2656 = vmatprep.subr.mxu0 0.0
        %2657 = vmatpush1.msra.mxu0 %v1154
        %2658 = vmatprep.subr.mxu0 0.0
        %2659 = vmatpush1.msra.mxu0 %v1153
        %2660 = vmatprep.subr.mxu0 0.0
        %2661 = vmatpush1.msra.mxu0 %v1152
        %2662 = vmatprep.subr.mxu0 0.0
        %2663 = vmatpush1.msra.mxu0 %v1151
        %2664 = vmatprep.subr.mxu0 0.0
        %2665 = vmatpush1.msra.mxu0 %v1150
        %2666 = vmatprep.subr.mxu0 0.0
        %2667 = vmatpush1.msra.mxu0 %v1149
        %2668 = vmatprep.subr.mxu0 0.0
        %2669 = vmatpush1.msra.mxu0 %v1148
        %2670 = vmatprep.subr.mxu0 0.0
        %2671 = vmatpush1.msra.mxu0 %v1147
        %2672 = vmatprep.subr.mxu0 0.0
        %2673 = vmatpush1.msra.mxu0 %v1146
        %2674 = vmatprep.subr.mxu0 0.0
        %2675 = vmatpush1.msra.mxu0 %v1145
        %2676 = vmatprep.subr.mxu0 0.0
        %2677 = vmatpush1.msra.mxu0 %v1144
        %2678 = vmatprep.subr.mxu0 0.0
        %2679 = vmatpush1.msra.mxu0 %v1143
        %2680 = vmatprep.subr.mxu0 0.0
        %2681 = vmatpush1.msra.mxu0 %v1142
        %2682 = vmatprep.subr.mxu0 0.0
        %2683 = vmatpush1.msra.mxu0 %v1141
        %2684 = vmatprep.subr.mxu0 0.0
        %2685 = vmatpush1.msra.mxu0 %v1140
        %2686 = vmatprep.subr.mxu0 0.0
        %2687 = vmatpush2.msra.mxu0 %v1171
        %2688 = vmatprep.subr.mxu0 0.0
        %2689 = vmatpush2.msra.mxu0 %v1170
        %2690 = vmatprep.subr.mxu0 0.0
        %2691 = vmatpush2.msra.mxu0 %v1169
        %2692 = vmatprep.subr.mxu0 0.0
        %2693 = vmatpush2.msra.mxu0 %v1168
        %2694 = vmatprep.subr.mxu0 0.0
        %2695 = vmatpush2.msra.mxu0 %v1167
        %2696 = vmatprep.subr.mxu0 0.0
        %2697 = vmatpush2.msra.mxu0 %v1166
        %2698 = vmatprep.subr.mxu0 0.0
        %2699 = vmatpush2.msra.mxu0 %v1165
        %2700 = vmatprep.subr.mxu0 0.0
        %2701 = vmatpush2.msra.mxu0 %v1164
        %2702 = vmatprep.subr.mxu0 0.0
        %2703 = vmatpush2.msra.mxu0 %v1163
        %2704 = vmatprep.subr.mxu0 0.0
        %2705 = vmatpush2.msra.mxu0 %v1162
        %2706 = vmatprep.subr.mxu0 0.0
        %2707 = vmatpush2.msra.mxu0 %v1161
        %2708 = vmatprep.subr.mxu0 0.0
        %2709 = vmatpush2.msra.mxu0 %v1160
        %2710 = vmatprep.subr.mxu0 0.0
        %2711 = vmatpush2.msra.mxu0 %v1159
        %2712 = vmatprep.subr.mxu0 0.0
        %2713 = vmatpush2.msra.mxu0 %v1158
        %2714 = vmatprep.subr.mxu0 0.0
        %2715 = vmatpush2.msra.mxu0 %v1157
        %2716 = vmatprep.subr.mxu0 0.0
        %2717 = vmatpush2.msra.mxu0 %v1156
        %2718 = vmatprep.mubr.f32.mxu0 %v2653
        %2719 = vmatmul.mubr.f32.gmra.mxu0 %v2652
        %v2720 = vpop.f32.mrf.mxu0
        %v2721 = vadd.f32 0.0, %v2720
        %v2722 = vpop.f32.mrf.mxu0
        %2723 = vdwg.mxu0
        %s2724 = scalar_lea.vmem %s439, 40 [#allocation12]
        %2725 = vst.msk [vmem:[%s2724] sm:$0xff] %vm1439, %v2721
        %v2726 = vld [vmem:[%s599] sm:$0xff]
        %v2727 = vld [vmem:[%s599 + $0x8] sm:$0xff]
        %v2728 = vld [vmem:[%s599 + $0x10] sm:$0xff]
        %v2729 = vld [vmem:[%s599 + $0x18] sm:$0xff]
        %s2730 = scalar_lea.vmem %s432, 192 [#allocation11]
        %2731 = vst [vmem:[%s2730] sm:$0xff] %v2726
        %2732 = vst [vmem:[%s2730 + $0x8] sm:$0xff] %v2727
        %2733 = vst [vmem:[%s2730 + $0x10] sm:$0xff] %v2728
        %2734 = vst [vmem:[%s2730 + $0x18] sm:$0xff] %v2729
        %2735 = vrot.lane.b32.xlu0 %v2726, 127
        %v2736 = vpop.permute.xlu0 %2735
        %2737 = vrot.lane.b32.xlu0 %v2728, 127
        %v2738 = vpop.permute.xlu0 %2737
        %2739 = vrot.lane.b32.xlu0 %v2727, 127
        %v2740 = vpop.permute.xlu0 %2739
        %2741 = vrot.lane.b32.xlu0 %v2729, 127
        %v2742 = vpop.permute.xlu0 %2741
        %v2743 = vsel %vm1192, %v2736, %v2740
        %v2744 = vsel %vm1192, %v2738, %v2742
        %v2745 = vsel %vm1192, %v2740, %v2736
        %v2746 = vsel %vm1192, %v2742, %v2738
        %v2747 = vmax.f32 %v2726, %v2743
        %v2748 = vmax.f32 %v2727, %v2745
        %v2749 = vmax.f32 %v2728, %v2744
        %v2750 = vmax.f32 %v2729, %v2746
        %2751 = vrot.lane.b32.xlu0 %v2747, 112
        %v2752 = vpop.permute.xlu0 %2751
        %2753 = vrot.lane.b32.xlu0 %v2749, 112
        %v2754 = vpop.permute.xlu0 %2753
        %2755 = vrot.lane.b32.xlu0 %v2748, 112
        %v2756 = vpop.permute.xlu0 %2755
        %2757 = vrot.lane.b32.xlu0 %v2750, 112
        %v2758 = vpop.permute.xlu0 %2757
        %v2759 = vsel %vm1209, %v2752, %v2756
        %v2760 = vsel %vm1209, %v2754, %v2758
        %v2761 = vsel %vm1209, %v2756, %v2752
        %v2762 = vsel %vm1209, %v2758, %v2754
        %v2763 = vmax.f32 %v2747, %v2759
        %v2764 = vmax.f32 %v2748, %v2761
        %v2765 = vmax.f32 %v2749, %v2760
        %v2766 = vmax.f32 %v2750, %v2762
        %2767 = vmatprep.subr.mxu0 0.0
        %2768 = vmatpush1.msra.mxu0 0.0
        %2769 = vmatprep.subr.mxu0 0.0
        %2770 = vmatpush1.msra.mxu0 0.0
        %2771 = vmatprep.subr.mxu0 0.0
        %2772 = vmatpush1.msra.mxu0 0.0
        %2773 = vmatprep.subr.mxu0 0.0
        %2774 = vmatpush1.msra.mxu0 0.0
        %2775 = vmatprep.subr.mxu0 0.0
        %2776 = vmatpush1.msra.mxu0 0.0
        %2777 = vmatprep.subr.mxu0 0.0
        %2778 = vmatpush1.msra.mxu0 0.0
        %2779 = vmatprep.subr.mxu0 0.0
        %2780 = vmatpush1.msra.mxu0 0.0
        %2781 = vmatprep.subr.mxu0 0.0
        %2782 = vmatpush1.msra.mxu0 0.0
        %2783 = vmatprep.subr.mxu0 0.0
        %2784 = vmatpush1.msra.mxu0 0.0
        %2785 = vmatprep.subr.mxu0 0.0
        %2786 = vmatpush1.msra.mxu0 0.0
        %2787 = vmatprep.subr.mxu0 0.0
        %2788 = vmatpush1.msra.mxu0 0.0
        %2789 = vmatprep.subr.mxu0 0.0
        %2790 = vmatpush1.msra.mxu0 0.0
        %2791 = vmatprep.subr.mxu0 0.0
        %2792 = vmatpush1.msra.mxu0 0.0
        %2793 = vmatprep.subr.mxu0 0.0
        %2794 = vmatpush1.msra.mxu0 0.0
        %2795 = vmatprep.subr.mxu0 %v2766
        %2796 = vmatpush1.msra.mxu0 %v2765
        %2797 = vmatprep.subr.mxu0 %v2764
        %2798 = vmatpush1.msra.mxu0 %v2763
        %2799 = vmatprep.subr.mxu0 0.0
        %2800 = vmatpush2.msra.mxu0 0.0
        %2801 = vmatprep.subr.mxu0 0.0
        %2802 = vmatpush2.msra.mxu0 0.0
        %2803 = vmatprep.subr.mxu0 0.0
        %2804 = vmatpush2.msra.mxu0 0.0
        %2805 = vmatprep.subr.mxu0 0.0
        %2806 = vmatpush2.msra.mxu0 0.0
        %2807 = vmatprep.subr.mxu0 0.0
        %2808 = vmatpush2.msra.mxu0 0.0
        %2809 = vmatprep.subr.mxu0 0.0
        %2810 = vmatpush2.msra.mxu0 0.0
        %2811 = vmatprep.subr.mxu0 0.0
        %2812 = vmatpush2.msra.mxu0 0.0
        %2813 = vmatprep.subr.mxu0 0.0
        %2814 = vmatpush2.msra.mxu0 0.0
        %2815 = vmatprep.subr.mxu0 0.0
        %2816 = vmatpush2.msra.mxu0 0.0
        %2817 = vmatprep.subr.mxu0 0.0
        %2818 = vmatpush2.msra.mxu0 0.0
        %2819 = vmatprep.subr.mxu0 0.0
        %2820 = vmatpush2.msra.mxu0 0.0
        %2821 = vmatprep.subr.mxu0 0.0
        %2822 = vmatpush2.msra.mxu0 0.0
        %2823 = vmatprep.subr.mxu0 0.0
        %2824 = vmatpush2.msra.mxu0 0.0
        %2825 = vmatprep.subr.mxu0 0.0
        %2826 = vmatpush2.msra.mxu0 0.0
        %2827 = vmatprep.subr.mxu0 0.0
        %2828 = vmatpush2.msra.mxu0 0.0
        %2829 = vmatprep.subr.mxu0 0.0
        %2830 = vmatpush2.msra.mxu0 0.0
        %2831 = vmatprep.mubr.f32.mxu0 0.0
        %2832 = vmatmul.mubr.f32.gmra.mxu0 %v1220
        %v2833 = vpop.f32.mrf.mxu0
        %v2834 = vadd.f32 0.0, %v2833
        %v2835 = vpop.f32.mrf.mxu0
        %v2836 = vadd.f32 0.0, %v2835
        %2837 = vdwg.mxu0
        %2838 = vmatprep.subr.mxu0 0.0
        %2839 = vmatpush1.msra.mxu0 0.0
        %2840 = vmatprep.subr.mxu0 0.0
        %2841 = vmatpush1.msra.mxu0 0.0
        %2842 = vmatprep.subr.mxu0 0.0
        %2843 = vmatpush1.msra.mxu0 0.0
        %2844 = vmatprep.subr.mxu0 0.0
        %2845 = vmatpush1.msra.mxu0 0.0
        %2846 = vmatprep.subr.mxu0 0.0
        %2847 = vmatpush1.msra.mxu0 0.0
        %2848 = vmatprep.subr.mxu0 0.0
        %2849 = vmatpush1.msra.mxu0 0.0
        %2850 = vmatprep.subr.mxu0 0.0
        %2851 = vmatpush1.msra.mxu0 0.0
        %2852 = vmatprep.subr.mxu0 0.0
        %2853 = vmatpush1.msra.mxu0 0.0
        %2854 = vmatprep.subr.mxu0 0.0
        %2855 = vmatpush1.msra.mxu0 0.0
        %2856 = vmatprep.subr.mxu0 0.0
        %2857 = vmatpush1.msra.mxu0 0.0
        %2858 = vmatprep.subr.mxu0 0.0
        %2859 = vmatpush1.msra.mxu0 0.0
        %2860 = vmatprep.subr.mxu0 0.0
        %2861 = vmatpush1.msra.mxu0 0.0
        %2862 = vmatprep.subr.mxu0 0.0
        %2863 = vmatpush1.msra.mxu0 0.0
        %2864 = vmatprep.subr.mxu0 0.0
        %2865 = vmatpush1.msra.mxu0 0.0
        %2866 = vmatprep.subr.mxu0 %v2766
        %2867 = vmatpush1.msra.mxu0 %v2765
        %2868 = vmatprep.subr.mxu0 %v2764
        %2869 = vmatpush1.msra.mxu0 %v2763
        %2870 = vmatprep.subr.mxu0 0.0
        %2871 = vmatpush2.msra.mxu0 0.0
        %2872 = vmatprep.subr.mxu0 0.0
        %2873 = vmatpush2.msra.mxu0 0.0
        %2874 = vmatprep.subr.mxu0 0.0
        %2875 = vmatpush2.msra.mxu0 0.0
        %2876 = vmatprep.subr.mxu0 0.0
        %2877 = vmatpush2.msra.mxu0 0.0
        %2878 = vmatprep.subr.mxu0 0.0
        %2879 = vmatpush2.msra.mxu0 0.0
        %2880 = vmatprep.subr.mxu0 0.0
        %2881 = vmatpush2.msra.mxu0 0.0
        %2882 = vmatprep.subr.mxu0 0.0
        %2883 = vmatpush2.msra.mxu0 0.0
        %2884 = vmatprep.subr.mxu0 0.0
        %2885 = vmatpush2.msra.mxu0 0.0
        %2886 = vmatprep.subr.mxu0 0.0
        %2887 = vmatpush2.msra.mxu0 0.0
        %2888 = vmatprep.subr.mxu0 0.0
        %2889 = vmatpush2.msra.mxu0 0.0
        %2890 = vmatprep.subr.mxu0 0.0
        %2891 = vmatpush2.msra.mxu0 0.0
        %2892 = vmatprep.subr.mxu0 0.0
        %2893 = vmatpush2.msra.mxu0 0.0
        %2894 = vmatprep.subr.mxu0 0.0
        %2895 = vmatpush2.msra.mxu0 0.0
        %2896 = vmatprep.subr.mxu0 0.0
        %2897 = vmatpush2.msra.mxu0 0.0
        %2898 = vmatprep.subr.mxu0 0.0
        %2899 = vmatpush2.msra.mxu0 0.0
        %2900 = vmatprep.subr.mxu0 0.0
        %2901 = vmatpush2.msra.mxu0 0.0
        %2902 = vmatprep.mubr.f32.mxu0 0.0
        %2903 = vmatmul.mubr.f32.gmra.mxu0 %v1294
        %v2904 = vpop.f32.mrf.mxu0
        %v2905 = vadd.f32 0.0, %v2904
        %v2906 = vpop.f32.mrf.mxu0
        %v2907 = vadd.f32 0.0, %v2906
        %2908 = vdwg.mxu0
        %v2909 = vmax.f32 %v2834, %v2905
        %v2910 = vmax.f32 %v2836, %v2907
        %2911 = vmatprep.subr.mxu0 0.0
        %2912 = vmatpush1.msra.mxu0 %v1155
        %2913 = vmatprep.subr.mxu0 0.0
        %2914 = vmatpush1.msra.mxu0 %v1154
        %2915 = vmatprep.subr.mxu0 0.0
        %2916 = vmatpush1.msra.mxu0 %v1153
        %2917 = vmatprep.subr.mxu0 0.0
        %2918 = vmatpush1.msra.mxu0 %v1152
        %2919 = vmatprep.subr.mxu0 0.0
        %2920 = vmatpush1.msra.mxu0 %v1151
        %2921 = vmatprep.subr.mxu0 0.0
        %2922 = vmatpush1.msra.mxu0 %v1150
        %2923 = vmatprep.subr.mxu0 0.0
        %2924 = vmatpush1.msra.mxu0 %v1149
        %2925 = vmatprep.subr.mxu0 0.0
        %2926 = vmatpush1.msra.mxu0 %v1148
        %2927 = vmatprep.subr.mxu0 0.0
        %2928 = vmatpush1.msra.mxu0 %v1147
        %2929 = vmatprep.subr.mxu0 0.0
        %2930 = vmatpush1.msra.mxu0 %v1146
        %2931 = vmatprep.subr.mxu0 0.0
        %2932 = vmatpush1.msra.mxu0 %v1145
        %2933 = vmatprep.subr.mxu0 0.0
        %2934 = vmatpush1.msra.mxu0 %v1144
        %2935 = vmatprep.subr.mxu0 0.0
        %2936 = vmatpush1.msra.mxu0 %v1143
        %2937 = vmatprep.subr.mxu0 0.0
        %2938 = vmatpush1.msra.mxu0 %v1142
        %2939 = vmatprep.subr.mxu0 0.0
        %2940 = vmatpush1.msra.mxu0 %v1141
        %2941 = vmatprep.subr.mxu0 0.0
        %2942 = vmatpush1.msra.mxu0 %v1140
        %2943 = vmatprep.subr.mxu0 0.0
        %2944 = vmatpush2.msra.mxu0 %v1171
        %2945 = vmatprep.subr.mxu0 0.0
        %2946 = vmatpush2.msra.mxu0 %v1170
        %2947 = vmatprep.subr.mxu0 0.0
        %2948 = vmatpush2.msra.mxu0 %v1169
        %2949 = vmatprep.subr.mxu0 0.0
        %2950 = vmatpush2.msra.mxu0 %v1168
        %2951 = vmatprep.subr.mxu0 0.0
        %2952 = vmatpush2.msra.mxu0 %v1167
        %2953 = vmatprep.subr.mxu0 0.0
        %2954 = vmatpush2.msra.mxu0 %v1166
        %2955 = vmatprep.subr.mxu0 0.0
        %2956 = vmatpush2.msra.mxu0 %v1165
        %2957 = vmatprep.subr.mxu0 0.0
        %2958 = vmatpush2.msra.mxu0 %v1164
        %2959 = vmatprep.subr.mxu0 0.0
        %2960 = vmatpush2.msra.mxu0 %v1163
        %2961 = vmatprep.subr.mxu0 0.0
        %2962 = vmatpush2.msra.mxu0 %v1162
        %2963 = vmatprep.subr.mxu0 0.0
        %2964 = vmatpush2.msra.mxu0 %v1161
        %2965 = vmatprep.subr.mxu0 0.0
        %2966 = vmatpush2.msra.mxu0 %v1160
        %2967 = vmatprep.subr.mxu0 0.0
        %2968 = vmatpush2.msra.mxu0 %v1159
        %2969 = vmatprep.subr.mxu0 0.0
        %2970 = vmatpush2.msra.mxu0 %v1158
        %2971 = vmatprep.subr.mxu0 0.0
        %2972 = vmatpush2.msra.mxu0 %v1157
        %2973 = vmatprep.subr.mxu0 0.0
        %2974 = vmatpush2.msra.mxu0 %v1156
        %2975 = vmatprep.mubr.f32.mxu0 %v2910
        %2976 = vmatmul.mubr.f32.gmra.mxu0 %v2909
        %v2977 = vpop.f32.mrf.mxu0
        %v2978 = vadd.f32 0.0, %v2977
        %v2979 = vpop.f32.mrf.mxu0
        %2980 = vdwg.mxu0
        %s2981 = scalar_lea.vmem %s439, 48 [#allocation12]
        %2982 = vst.msk [vmem:[%s2981] sm:$0xff] %vm1439, %v2978
        %v2983 = vld [vmem:[%s616] sm:$0xff]
        %v2984 = vld [vmem:[%s616 + $0x8] sm:$0xff]
        %v2985 = vld [vmem:[%s616 + $0x10] sm:$0xff]
        %v2986 = vld [vmem:[%s616 + $0x18] sm:$0xff]
        %s2987 = scalar_lea.vmem %s432, 224 [#allocation11]
        %2988 = vst [vmem:[%s2987] sm:$0xff] %v2983
        %2989 = vst [vmem:[%s2987 + $0x8] sm:$0xff] %v2984
        %2990 = vst [vmem:[%s2987 + $0x10] sm:$0xff] %v2985
        %2991 = vst [vmem:[%s2987 + $0x18] sm:$0xff] %v2986
        %2992 = vrot.lane.b32.xlu0 %v2983, 127
        %v2993 = vpop.permute.xlu0 %2992
        %2994 = vrot.lane.b32.xlu0 %v2985, 127
        %v2995 = vpop.permute.xlu0 %2994
        %2996 = vrot.lane.b32.xlu0 %v2984, 127
        %v2997 = vpop.permute.xlu0 %2996
        %2998 = vrot.lane.b32.xlu0 %v2986, 127
        %v2999 = vpop.permute.xlu0 %2998
        %v3000 = vsel %vm1192, %v2993, %v2997
        %v3001 = vsel %vm1192, %v2995, %v2999
        %v3002 = vsel %vm1192, %v2997, %v2993
        %v3003 = vsel %vm1192, %v2999, %v2995
        %v3004 = vmax.f32 %v2983, %v3000
        %v3005 = vmax.f32 %v2984, %v3002
        %v3006 = vmax.f32 %v2985, %v3001
        %v3007 = vmax.f32 %v2986, %v3003
        %3008 = vrot.lane.b32.xlu0 %v3004, 112
        %v3009 = vpop.permute.xlu0 %3008
        %3010 = vrot.lane.b32.xlu0 %v3006, 112
        %v3011 = vpop.permute.xlu0 %3010
        %3012 = vrot.lane.b32.xlu0 %v3005, 112
        %v3013 = vpop.permute.xlu0 %3012
        %3014 = vrot.lane.b32.xlu0 %v3007, 112
        %v3015 = vpop.permute.xlu0 %3014
        %v3016 = vsel %vm1209, %v3009, %v3013
        %v3017 = vsel %vm1209, %v3011, %v3015
        %v3018 = vsel %vm1209, %v3013, %v3009
        %v3019 = vsel %vm1209, %v3015, %v3011
        %v3020 = vmax.f32 %v3004, %v3016
        %v3021 = vmax.f32 %v3005, %v3018
        %v3022 = vmax.f32 %v3006, %v3017
        %v3023 = vmax.f32 %v3007, %v3019
        %3024 = vmatprep.subr.mxu0 0.0
        %3025 = vmatpush1.msra.mxu0 0.0
        %3026 = vmatprep.subr.mxu0 0.0
        %3027 = vmatpush1.msra.mxu0 0.0
        %3028 = vmatprep.subr.mxu0 0.0
        %3029 = vmatpush1.msra.mxu0 0.0
        %3030 = vmatprep.subr.mxu0 0.0
        %3031 = vmatpush1.msra.mxu0 0.0
        %3032 = vmatprep.subr.mxu0 0.0
        %3033 = vmatpush1.msra.mxu0 0.0
        %3034 = vmatprep.subr.mxu0 0.0
        %3035 = vmatpush1.msra.mxu0 0.0
        %3036 = vmatprep.subr.mxu0 0.0
        %3037 = vmatpush1.msra.mxu0 0.0
        %3038 = vmatprep.subr.mxu0 0.0
        %3039 = vmatpush1.msra.mxu0 0.0
        %3040 = vmatprep.subr.mxu0 0.0
        %3041 = vmatpush1.msra.mxu0 0.0
        %3042 = vmatprep.subr.mxu0 0.0
        %3043 = vmatpush1.msra.mxu0 0.0
        %3044 = vmatprep.subr.mxu0 0.0
        %3045 = vmatpush1.msra.mxu0 0.0
        %3046 = vmatprep.subr.mxu0 0.0
        %3047 = vmatpush1.msra.mxu0 0.0
        %3048 = vmatprep.subr.mxu0 0.0
        %3049 = vmatpush1.msra.mxu0 0.0
        %3050 = vmatprep.subr.mxu0 0.0
        %3051 = vmatpush1.msra.mxu0 0.0
        %3052 = vmatprep.subr.mxu0 %v3023
        %3053 = vmatpush1.msra.mxu0 %v3022
        %3054 = vmatprep.subr.mxu0 %v3021
        %3055 = vmatpush1.msra.mxu0 %v3020
        %3056 = vmatprep.subr.mxu0 0.0
        %3057 = vmatpush2.msra.mxu0 0.0
        %3058 = vmatprep.subr.mxu0 0.0
        %3059 = vmatpush2.msra.mxu0 0.0
        %3060 = vmatprep.subr.mxu0 0.0
        %3061 = vmatpush2.msra.mxu0 0.0
        %3062 = vmatprep.subr.mxu0 0.0
        %3063 = vmatpush2.msra.mxu0 0.0
        %3064 = vmatprep.subr.mxu0 0.0
        %3065 = vmatpush2.msra.mxu0 0.0
        %3066 = vmatprep.subr.mxu0 0.0
        %3067 = vmatpush2.msra.mxu0 0.0
        %3068 = vmatprep.subr.mxu0 0.0
        %3069 = vmatpush2.msra.mxu0 0.0
        %3070 = vmatprep.subr.mxu0 0.0
        %3071 = vmatpush2.msra.mxu0 0.0
        %3072 = vmatprep.subr.mxu0 0.0
        %3073 = vmatpush2.msra.mxu0 0.0
        %3074 = vmatprep.subr.mxu0 0.0
        %3075 = vmatpush2.msra.mxu0 0.0
        %3076 = vmatprep.subr.mxu0 0.0
        %3077 = vmatpush2.msra.mxu0 0.0
        %3078 = vmatprep.subr.mxu0 0.0
        %3079 = vmatpush2.msra.mxu0 0.0
        %3080 = vmatprep.subr.mxu0 0.0
        %3081 = vmatpush2.msra.mxu0 0.0
        %3082 = vmatprep.subr.mxu0 0.0
        %3083 = vmatpush2.msra.mxu0 0.0
        %3084 = vmatprep.subr.mxu0 0.0
        %3085 = vmatpush2.msra.mxu0 0.0
        %3086 = vmatprep.subr.mxu0 0.0
        %3087 = vmatpush2.msra.mxu0 0.0
        %3088 = vmatprep.mubr.f32.mxu0 0.0
        %3089 = vmatmul.mubr.f32.gmra.mxu0 %v1220
        %v3090 = vpop.f32.mrf.mxu0
        %v3091 = vadd.f32 0.0, %v3090
        %v3092 = vpop.f32.mrf.mxu0
        %v3093 = vadd.f32 0.0, %v3092
        %3094 = vdwg.mxu0
        %3095 = vmatprep.subr.mxu0 0.0
        %3096 = vmatpush1.msra.mxu0 0.0
        %3097 = vmatprep.subr.mxu0 0.0
        %3098 = vmatpush1.msra.mxu0 0.0
        %3099 = vmatprep.subr.mxu0 0.0
        %3100 = vmatpush1.msra.mxu0 0.0
        %3101 = vmatprep.subr.mxu0 0.0
        %3102 = vmatpush1.msra.mxu0 0.0
        %3103 = vmatprep.subr.mxu0 0.0
        %3104 = vmatpush1.msra.mxu0 0.0
        %3105 = vmatprep.subr.mxu0 0.0
        %3106 = vmatpush1.msra.mxu0 0.0
        %3107 = vmatprep.subr.mxu0 0.0
        %3108 = vmatpush1.msra.mxu0 0.0
        %3109 = vmatprep.subr.mxu0 0.0
        %3110 = vmatpush1.msra.mxu0 0.0
        %3111 = vmatprep.subr.mxu0 0.0
        %3112 = vmatpush1.msra.mxu0 0.0
        %3113 = vmatprep.subr.mxu0 0.0
        %3114 = vmatpush1.msra.mxu0 0.0
        %3115 = vmatprep.subr.mxu0 0.0
        %3116 = vmatpush1.msra.mxu0 0.0
        %3117 = vmatprep.subr.mxu0 0.0
        %3118 = vmatpush1.msra.mxu0 0.0
        %3119 = vmatprep.subr.mxu0 0.0
        %3120 = vmatpush1.msra.mxu0 0.0
        %3121 = vmatprep.subr.mxu0 0.0
        %3122 = vmatpush1.msra.mxu0 0.0
        %3123 = vmatprep.subr.mxu0 %v3023
        %3124 = vmatpush1.msra.mxu0 %v3022
        %3125 = vmatprep.subr.mxu0 %v3021
        %3126 = vmatpush1.msra.mxu0 %v3020
        %3127 = vmatprep.subr.mxu0 0.0
        %3128 = vmatpush2.msra.mxu0 0.0
        %3129 = vmatprep.subr.mxu0 0.0
        %3130 = vmatpush2.msra.mxu0 0.0
        %3131 = vmatprep.subr.mxu0 0.0
        %3132 = vmatpush2.msra.mxu0 0.0
        %3133 = vmatprep.subr.mxu0 0.0
        %3134 = vmatpush2.msra.mxu0 0.0
        %3135 = vmatprep.subr.mxu0 0.0
        %3136 = vmatpush2.msra.mxu0 0.0
        %3137 = vmatprep.subr.mxu0 0.0
        %3138 = vmatpush2.msra.mxu0 0.0
        %3139 = vmatprep.subr.mxu0 0.0
        %3140 = vmatpush2.msra.mxu0 0.0
        %3141 = vmatprep.subr.mxu0 0.0
        %3142 = vmatpush2.msra.mxu0 0.0
        %3143 = vmatprep.subr.mxu0 0.0
        %3144 = vmatpush2.msra.mxu0 0.0
        %3145 = vmatprep.subr.mxu0 0.0
        %3146 = vmatpush2.msra.mxu0 0.0
        %3147 = vmatprep.subr.mxu0 0.0
        %3148 = vmatpush2.msra.mxu0 0.0
        %3149 = vmatprep.subr.mxu0 0.0
        %3150 = vmatpush2.msra.mxu0 0.0
        %3151 = vmatprep.subr.mxu0 0.0
        %3152 = vmatpush2.msra.mxu0 0.0
        %3153 = vmatprep.subr.mxu0 0.0
        %3154 = vmatpush2.msra.mxu0 0.0
        %3155 = vmatprep.subr.mxu0 0.0
        %3156 = vmatpush2.msra.mxu0 0.0
        %3157 = vmatprep.subr.mxu0 0.0
        %3158 = vmatpush2.msra.mxu0 0.0
        %3159 = vmatprep.mubr.f32.mxu0 0.0
        %3160 = vmatmul.mubr.f32.gmra.mxu0 %v1294
        %v3161 = vpop.f32.mrf.mxu0
        %v3162 = vadd.f32 0.0, %v3161
        %v3163 = vpop.f32.mrf.mxu0
        %v3164 = vadd.f32 0.0, %v3163
        %3165 = vdwg.mxu0
        %v3166 = vmax.f32 %v3091, %v3162
        %v3167 = vmax.f32 %v3093, %v3164
        %3168 = vmatprep.subr.mxu0 0.0
        %3169 = vmatpush1.msra.mxu0 %v1155
        %3170 = vmatprep.subr.mxu0 0.0
        %3171 = vmatpush1.msra.mxu0 %v1154
        %3172 = vmatprep.subr.mxu0 0.0
        %3173 = vmatpush1.msra.mxu0 %v1153
        %3174 = vmatprep.subr.mxu0 0.0
        %3175 = vmatpush1.msra.mxu0 %v1152
        %3176 = vmatprep.subr.mxu0 0.0
        %3177 = vmatpush1.msra.mxu0 %v1151
        %3178 = vmatprep.subr.mxu0 0.0
        %3179 = vmatpush1.msra.mxu0 %v1150
        %3180 = vmatprep.subr.mxu0 0.0
        %3181 = vmatpush1.msra.mxu0 %v1149
        %3182 = vmatprep.subr.mxu0 0.0
        %3183 = vmatpush1.msra.mxu0 %v1148
        %3184 = vmatprep.subr.mxu0 0.0
        %3185 = vmatpush1.msra.mxu0 %v1147
        %3186 = vmatprep.subr.mxu0 0.0
        %3187 = vmatpush1.msra.mxu0 %v1146
        %3188 = vmatprep.subr.mxu0 0.0
        %3189 = vmatpush1.msra.mxu0 %v1145
        %3190 = vmatprep.subr.mxu0 0.0
        %3191 = vmatpush1.msra.mxu0 %v1144
        %3192 = vmatprep.subr.mxu0 0.0
        %3193 = vmatpush1.msra.mxu0 %v1143
        %3194 = vmatprep.subr.mxu0 0.0
        %3195 = vmatpush1.msra.mxu0 %v1142
        %3196 = vmatprep.subr.mxu0 0.0
        %3197 = vmatpush1.msra.mxu0 %v1141
        %3198 = vmatprep.subr.mxu0 0.0
        %3199 = vmatpush1.msra.mxu0 %v1140
        %3200 = vmatprep.subr.mxu0 0.0
        %3201 = vmatpush2.msra.mxu0 %v1171
        %3202 = vmatprep.subr.mxu0 0.0
        %3203 = vmatpush2.msra.mxu0 %v1170
        %3204 = vmatprep.subr.mxu0 0.0
        %3205 = vmatpush2.msra.mxu0 %v1169
        %3206 = vmatprep.subr.mxu0 0.0
        %3207 = vmatpush2.msra.mxu0 %v1168
        %3208 = vmatprep.subr.mxu0 0.0
        %3209 = vmatpush2.msra.mxu0 %v1167
        %3210 = vmatprep.subr.mxu0 0.0
        %3211 = vmatpush2.msra.mxu0 %v1166
        %3212 = vmatprep.subr.mxu0 0.0
        %3213 = vmatpush2.msra.mxu0 %v1165
        %3214 = vmatprep.subr.mxu0 0.0
        %3215 = vmatpush2.msra.mxu0 %v1164
        %3216 = vmatprep.subr.mxu0 0.0
        %3217 = vmatpush2.msra.mxu0 %v1163
        %3218 = vmatprep.subr.mxu0 0.0
        %3219 = vmatpush2.msra.mxu0 %v1162
        %3220 = vmatprep.subr.mxu0 0.0
        %3221 = vmatpush2.msra.mxu0 %v1161
        %3222 = vmatprep.subr.mxu0 0.0
        %3223 = vmatpush2.msra.mxu0 %v1160
        %3224 = vmatprep.subr.mxu0 0.0
        %3225 = vmatpush2.msra.mxu0 %v1159
        %3226 = vmatprep.subr.mxu0 0.0
        %3227 = vmatpush2.msra.mxu0 %v1158
        %3228 = vmatprep.subr.mxu0 0.0
        %3229 = vmatpush2.msra.mxu0 %v1157
        %3230 = vmatprep.subr.mxu0 0.0
        %3231 = vmatpush2.msra.mxu0 %v1156
        %3232 = vmatprep.mubr.f32.mxu0 %v3167
        %3233 = vmatmul.mubr.f32.gmra.mxu0 %v3166
        %v3234 = vpop.f32.mrf.mxu0
        %v3235 = vadd.f32 0.0, %v3234
        %v3236 = vpop.f32.mrf.mxu0
        %3237 = vdwg.mxu0
        %s3238 = scalar_lea.vmem %s439, 56 [#allocation12]
        %3239 = vst.msk [vmem:[%s3238] sm:$0xff] %vm1439, %v3235
        %s3240 = sand.u32 %s238, 1
        %s3241 = scalar_lea.sflag [#allocation4], %s3240
        %s3242 = sand.u32 %s238, 1
        %s3243 = smul.addr %s3242, 256
        %s3244 = scalar_lea.vmem [#allocation11], %s3243
        %s3245 = sand.u32 %s268, 1
        %s3246 = scalar_lea.sflag [#allocation13], %s3245
        %s3247 = sand.u32 %s268, 1
        %s3248 = smul.addr %s3247, 64
        %s3249 = scalar_lea.vmem [#allocation12], %s3248
        // Predicated region
        $region69: #{tpu_custom_call.1} parent=51 // pred_check
          %p3250 = pneg %p248
        $region70: #{tpu_custom_call.1} parent=51 // pred_check_branch
          %3252 = sbr.rel (%p3250) target = $region72
        $region71: #{tpu_custom_call.1} parent=51 // pred_region
          %s3253 = smul.u32 2, %s36
          %s3254 = smul.u32 2, %s37
          %s3256 = ssub.s32 4096, 4096
          %3257 = vsyncadd %s3241, %s3256
          %s3258 = smul.addr %s3253, 2
          %s3259 = sadd.s32 %s3254, %s3258
          %s3260 = smul.addr %s35, 32
          %s3261 = sadd.s32 %s3259, %s3260
          %s3262 = smul.addr %s3261, 128
          %s3263 = scalar_lea.hbm %s8, %s3262
          %s3264 = sshll.u32 %s3244, 4
          %s3265 = int_to_ptr.vmem [resolvable:$true] %s3264
          %3270 = dma.vmem_to_hbm [thread:$0]  %s3265, 4096, %s3263, %s3241, 256, 256, 16
        $region72: #{tpu_custom_call.1} parent=51 // pred_fallthru
          _
        // Predicated region
        $region73: #{tpu_custom_call.1} parent=51 // pred_check
          %p3271 = pneg %p278
        $region74: #{tpu_custom_call.1} parent=51 // pred_check_branch
          %3273 = sbr.rel (%p3271) target = $region76
        $region75: #{tpu_custom_call.1} parent=51 // pred_region
          %s3275 = ssub.s32 1024, 1024
          %3276 = vsyncadd %s3246, %s3275
          %s3277 = sadd.s32 %s37, %s36
          %s3278 = smul.addr %s35, 8
          %s3279 = sadd.s32 %s3277, %s3278
          %s3280 = smul.addr %s3279, 128
          %s3281 = scalar_lea.hbm %s9, %s3280
          %s3282 = sshll.u32 %s3249, 4
          %s3283 = int_to_ptr.vmem [resolvable:$true] %s3282
          %3288 = dma.vmem_to_hbm [thread:$0]  %s3283, 1024, %s3281, %s3246, 128, 128, 8
        $region76: #{tpu_custom_call.1} parent=51 // pred_fallthru
          _
      $region52: #{tpu_custom_call.1} parent=5 // pred_fallthru
        _
      %p3289 = scmp.le.s32.totalorder 2, %s25
      // Predicated region
      $region77: #{tpu_custom_call.1} parent=5 // pred_check
        %p3290 = pneg %p3289
      $region78: #{tpu_custom_call.1} parent=5 // pred_check_branch
        %3292 = sbr.rel (%p3290) target = $region80
      $region79: #{tpu_custom_call.1} parent=5 // pred_region
        %s3293 = ssub.s32 %s25, 2
        // Predicated region
        $region81: #{tpu_custom_call.1} parent=79 // pred_check
          %p3294 = pneg %p254
        $region82: #{tpu_custom_call.1} parent=79 // pred_check_branch
          %3296 = sbr.rel (%p3294) target = $region84
        $region83: #{tpu_custom_call.1} parent=79 // pred_region
          %s3297 = sand.u32 %s239, 1
          %s3298 = scalar_lea.sflag [#allocation4], %s3297
          %s3299 = sand.u32 %s239, 1
          %s3300 = smul.addr %s3299, 256
          %s3301 = scalar_lea.vmem [#allocation11], %s3300
          %3302 = dma.done %s3298, 4096
        $region84: #{tpu_custom_call.1} parent=79 // pred_fallthru
          _
        // Predicated region
        $region85: #{tpu_custom_call.1} parent=79 // pred_check
          %p3303 = pneg %p284
        $region86: #{tpu_custom_call.1} parent=79 // pred_check_branch
          %3305 = sbr.rel (%p3303) target = $region88
        $region87: #{tpu_custom_call.1} parent=79 // pred_region
          %s3306 = sand.u32 %s269, 1
          %s3307 = scalar_lea.sflag [#allocation13], %s3306
          %s3308 = sand.u32 %s269, 1
          %s3309 = smul.addr %s3308, 64
          %s3310 = scalar_lea.vmem [#allocation12], %s3309
          %3311 = dma.done %s3307, 1024
        $region88: #{tpu_custom_call.1} parent=79 // pred_fallthru
          _
      $region80: #{tpu_custom_call.1} parent=5 // pred_fallthru
        _
    $region6: #{tpu_custom_call.1} parent=1 // loop_footer
      %s29 = sadd.s32 1, %s25
    $region7: #{tpu_custom_call.1} parent=1 // loop_footer_branch
      %24 = sbr.rel target = $region3
    $region8: #{tpu_custom_call.1} parent=1 // loop_exit
      _
    %3312 = vsyncpa [#allocation4], 1
    %s3313 = scalar_lea.sflag [#allocation4], 1
    %3314 = vsyncpa %s3313, 1
    %3315 = vsyncpa [#allocation13], 1
    %s3316 = scalar_lea.sflag [#allocation13], 1
    %3317 = vsyncpa %s3316, 1
    %3318 = vsyncpa [#allocation5], 1
    %s3319 = scalar_lea.sflag [#allocation5], 1
    %3320 = vsyncpa %s3319, 1
    %3321 = vsyncpa [#allocation7], 1
    %3322 = vsyncpa [#allocation10], 1

</llo_original>
